<compile_context>
chip_gen: v7x
topology: tpu7x:2x2x1
jax: 0.10.0
libtpu: 0.0.40
codegen_flags: <defaults>
</compile_context>

<pallas_src>
import functools

import jax
import jax.numpy as jnp
from jax import lax
from jax.experimental import pallas as pl
from jax.experimental.pallas import tpu as pltpu

EPS = 1e-5  # nn.InstanceNorm2d default eps


def _finalize_stats(s, n_pix):
    """s: (2, C) f32 [sum, sum_sq] over H*W pixels -> mean, rstd (each (1, C))."""
    mean = s[0:1, :] * (1.0 / n_pix)
    var = s[1:2, :] * (1.0 / n_pix) - mean * mean
    rstd = lax.rsqrt(var + EPS)
    return mean, rstd


def _conv_in_stats_kernel(*refs, prenorm, n_pix, compute_dtype):
    """Reflect-padded H-tile -> [IN+ReLU ->] 3x3 conv -> partial IN stats."""
    if prenorm:
        in_stats_ref, x_ref, w_ref, b_ref, y_ref, out_stats_ref = refs
    else:
        x_ref, w_ref, b_ref, y_ref, out_stats_ref = refs

    t = pl.program_id(1)
    x = x_ref[...]                                    # (TH+2, W+2, C)
    hp, wp, C = x.shape
    TH, W = hp - 2, wp - 2

    if prenorm:
        # Whole-image stats from the previous pass; normalization of the
        # reflect-padded halo is identical to padding the normalized image.
        mean, rstd = _finalize_stats(in_stats_ref[...].astype(jnp.float32), n_pix)
        xf = (x.astype(jnp.float32) - mean[None]) * rstd[None]
        x = jnp.maximum(xf, 0.0)                      # fused IN + ReLU (f32)

    x = x.astype(compute_dtype)

    # im2col with the 9 taps folded into the contraction dim (K = 9*C):
    # one MXU matmul per tile instead of nine small K=C matmuls.
    cols = []
    for ki in range(3):
        for kj in range(3):
            cols.append(x[ki:ki + TH, kj:kj + W, :])
    patches = jnp.concatenate(cols, axis=-1).reshape(TH * W, 9 * C)

    acc = jnp.dot(patches, w_ref[...], preferred_element_type=jnp.float32)
    acc = acc + b_ref[...].astype(jnp.float32)        # (TH*W, C), f32

    # InstanceNorm partial statistics in the conv epilogue, single pass
    # (sum & sum-of-squares) while the f32 accumulator is hot.
    psum = jnp.sum(acc, axis=0, keepdims=True)        # (1, C)
    psqr = jnp.sum(acc * acc, axis=0, keepdims=True)  # (1, C)
    part = jnp.concatenate([psum, psqr], axis=0)      # (2, C)

    @pl.when(t == 0)
    def _():
        out_stats_ref[...] = jnp.zeros_like(out_stats_ref)
    out_stats_ref[...] += part

    y_ref[...] = acc.reshape(TH, W, C).astype(y_ref.dtype)


def _norm_skip_kernel(stats_ref, x_ref, y_ref, o_ref, *, n_pix):
    """out = x + InstanceNorm(y) using precomputed whole-image sums."""
    mean, rstd = _finalize_stats(stats_ref[...].astype(jnp.float32), n_pix)
    x = x_ref[...].astype(jnp.float32)
    y = y_ref[...].astype(jnp.float32)
    o_ref[...] = (x + (y - mean[None]) * rstd[None]).astype(o_ref.dtype)


def _conv_pass(x_tiles, w_flat, b_row, in_stats, *, H, W, C, TH,
               prenorm, compute_dtype):
    """conv3x3 over H-tiles; returns raw conv output (N,H,W,C) + stats (N,2,C)."""
    N = x_tiles.shape[0]
    n_t = H // TH
    kernel = functools.partial(_conv_in_stats_kernel, prenorm=prenorm,
                               n_pix=float(H * W), compute_dtype=compute_dtype)

    in_specs, args = [], []
    if prenorm:
        in_specs.append(pl.BlockSpec((None, 2, C), lambda b, t: (b, 0, 0)))
        args.append(in_stats)
    in_specs += [
        # (N, n_t, TH+2, W+2, C): one reflect-padded H-tile (1-row halo).
        pl.BlockSpec((None, None, TH + 2, W + 2, C),
                     lambda b, t: (b, t, 0, 0, 0)),
        # Folded weights / bias: constant index maps -> DMA'd once per image.
        pl.BlockSpec((9 * C, C), lambda b, t: (0, 0)),
        pl.BlockSpec((1, C), lambda b, t: (0, 0)),
    ]
    args += [x_tiles, w_flat, b_row]

    y, stats = pl.pallas_call(
        kernel,
        out_shape=(jax.ShapeDtypeStruct((N, H, W, C), jnp.float32),
                   jax.ShapeDtypeStruct((N, 2, C), jnp.float32)),
        grid_spec=pltpu.PrefetchScalarGridSpec(
            num_scalar_prefetch=0,
            grid=(N, n_t),
            in_specs=in_specs,
            out_specs=[
                pl.BlockSpec((None, TH, W, C), lambda b, t: (b, t, 0, 0)),
                # Stats block is revisited across the H-tile axis (accumulator).
                pl.BlockSpec((None, 2, C), lambda b, t: (b, 0, 0)),
            ],
        ),
        compiler_params=pltpu.CompilerParams(
            dimension_semantics=("parallel", "arbitrary")),
    )(*args)
    return y, stats


def _norm_skip_pass(stats, x, y, *, H, W, C, TH):
    N = x.shape[0]
    n_t = H // TH
    kernel = functools.partial(_norm_skip_kernel, n_pix=float(H * W))
    return pl.pallas_call(
        kernel,
        out_shape=jax.ShapeDtypeStruct((N, H, W, C), x.dtype),
        grid_spec=pltpu.PrefetchScalarGridSpec(
            num_scalar_prefetch=0,
            grid=(N, n_t),
            in_specs=[
                pl.BlockSpec((None, 2, C), lambda b, t: (b, 0, 0)),
                pl.BlockSpec((None, TH, W, C), lambda b, t: (b, t, 0, 0)),
                pl.BlockSpec((None, TH, W, C), lambda b, t: (b, t, 0, 0)),
            ],
            out_specs=pl.BlockSpec((None, TH, W, C), lambda b, t: (b, t, 0, 0)),
        ),
        compiler_params=pltpu.CompilerParams(
            dimension_semantics=("parallel", "parallel")),
    )(stats, x, y)


def _pick_tile_h(H, tile_h):
    if tile_h is not None:
        if H % tile_h != 0:
            raise ValueError(f"tile_h={tile_h} must divide H={H}")
        return tile_h
    for th in (32, 16, 8, 4, 2, 1):
        if th <= H and H % th == 0:
            return th
    return H


def _pad_and_tile_h(a, TH):
    """(N,H,W,C) -> reflect-pad by 1 on H,W and stack overlapping H-tiles:
    (N, H//TH, TH+2, W+2, C).  Halo rows are materialized by XLA so kernel
    BlockSpecs stay plain Blocked."""
    N, H, W, C = a.shape
    ap = jnp.pad(a, ((0, 0), (1, 1), (1, 1), (0, 0)), mode='reflect')
    n_t = H // TH
    tiles = [lax.slice_in_dim(ap, t * TH, t * TH + TH + 2, axis=1)
             for t in range(n_t)]
    return jnp.stack(tiles, axis=1)


def resnet_block(x_nchw, w1, b1, w2, b2, *, tile_h=None, compute_dtype=None):
    """x_nchw: (N, C, H, W); weights HWIO (3,3,C,C); biases (C,)."""
    N, C, H, W = x_nchw.shape
    assert H >= 2 and W >= 2, "ReflectionPad2d(1) needs H, W >= 2"
    if compute_dtype is None:
        compute_dtype = x_nchw.dtype
    TH = _pick_tile_h(H, tile_h)

    x = jnp.transpose(x_nchw, (0, 2, 3, 1))            # NHWC
    # Fold the 3x3 taps into the contraction dim; cast once here, not per step.
    w1f = w1.reshape(9 * C, C).astype(compute_dtype)
    w2f = w2.reshape(9 * C, C).astype(compute_dtype)
    b1r = b1.reshape(1, C)
    b2r = b2.reshape(1, C)

    # Pass 1: reflect pad (hoisted to XLA) + conv1 + partial IN statistics.
    y1, s1 = _conv_pass(_pad_and_tile_h(x, TH), w1f, b1r, None,
                        H=H, W=W, C=C, TH=TH, prenorm=False,
                        compute_dtype=compute_dtype)
    # Pass 2: IN(stats1)+ReLU fused into the conv prologue, conv2 + stats.
    # TODO(synk): use_dropout branch (nn.Dropout(0.5)) not enabled in this config.
    y2, s2 = _conv_pass(_pad_and_tile_h(y1, TH), w2f, b2r, s1,
                        H=H, W=W, C=C, TH=TH, prenorm=True,
                        compute_dtype=compute_dtype)
    # Pass 3: IN(stats2) + skip connection.
    out = _norm_skip_pass(s2, x, y2, H=H, W=W, C=C, TH=TH)
    return jnp.transpose(out, (0, 3, 1, 2))            # back to NCHW


def _ref_forward(x_nchw, w1, b1, w2, b2):
    """Pure-JAX reference (for correctness check)."""
    x = jnp.transpose(x_nchw, (0, 2, 3, 1))  # NHWC
    dn = ('NHWC', 'HWIO', 'NHWC')

    def conv(a, w, b):
        a = jnp.pad(a, ((0, 0), (1, 1), (1, 1), (0, 0)), mode='reflect')
        y = lax.conv_general_dilated(a, w, (1, 1), 'VALID',
                                     dimension_numbers=dn)
        return y + b[None, None, None, :]

    def inorm(a):
        m = jnp.mean(a, axis=(1, 2), keepdims=True)
        v = jnp.mean((a - m) ** 2, axis=(1, 2), keepdims=True)
        return (a - m) * lax.rsqrt(v + EPS)

    h = jnp.maximum(inorm(conv(x, w1, b1)), 0.0)
    h = inorm(conv(h, w2, b2))
    return jnp.transpose(x + h, (0, 3, 1, 2))


if __name__ == "__main__":
    N, C, H, W = 2, 4, 16, 16
    key = jax.random.PRNGKey(0)
    kx, kw1, kb1, kw2, kb2 = jax.random.split(key, 5)

    x = jax.random.normal(kx, (N, C, H, W), dtype=jnp.float32)
    # Conv2d(dim, dim, kernel_size=3, bias=True) -> HWIO weights (3,3,C,C)
    w1 = jax.random.normal(kw1, (3, 3, C, C), dtype=jnp.float32) * 0.1
    b1 = jax.random.normal(kb1, (C,), dtype=jnp.float32) * 0.1
    w2 = jax.random.normal(kw2, (3, 3, C, C), dtype=jnp.float32) * 0.1
    b2 = jax.random.normal(kb2, (C,), dtype=jnp.float32) * 0.1

    ref = jax.block_until_ready(_ref_forward(x, w1, b1, w2, b2))

    # f32 path with 2 H-tiles: exercises the accumulate-then-normalize IN.
    fwd = jax.jit(functools.partial(resnet_block, tile_h=8))
    out = jax.block_until_ready(fwd(x, w1, b1, w2, b2))
    assert out.shape == (N, C, H, W)
    assert jnp.allclose(out, ref, atol=1e-3, rtol=1e-3), "f32 mismatch vs reference"

    # bf16 MXU operands (f32 accumulation, f32 norm/ReLU math), same tiling.
    fwd_bf16 = jax.jit(functools.partial(resnet_block, tile_h=8,
                                         compute_dtype=jnp.bfloat16))
    out_bf16 = jax.block_until_ready(fwd_bf16(x, w1, b1, w2, b2))
    assert jnp.allclose(out_bf16, ref, atol=5e-2, rtol=5e-2), "bf16 mismatch vs reference"

    print("KERNEL_OK")
</pallas_src>

<mosaic_0001>
module attributes {stable_mosaic.version = 11 : i64} {
  func.func @_conv_in_stats_kernel(%arg0: i32, %arg1: i32, %arg2: memref<1x1x10x18x4xf32, #tpu.memory_space<vmem>>, %arg3: memref<36x4xf32, #tpu.memory_space<vmem>>, %arg4: memref<1x4xf32, #tpu.memory_space<vmem>>, %arg5: memref<1x8x16x4xf32, #tpu.memory_space<vmem>>, %arg6: memref<1x2x4xf32, #tpu.memory_space<vmem>>) attributes {dimension_semantics = [#tpu.dimension_semantics<parallel>, #tpu.dimension_semantics<arbitrary>], iteration_bounds = array<i64: 2, 2>, scalar_prefetch = 0 : i64, scratch_operands = 0 : i64, tpu.core_type = #tpu.core_type<tc>, window_params = [{transform_indices = @transform_0, window_bounds = array<i64: 1, 1, 10, 18, 4>}, {pipeline_mode = #tpu.pipeline_mode<synchronous>, transform_indices = @transform_1, window_bounds = array<i64: 36, 4>}, {pipeline_mode = #tpu.pipeline_mode<synchronous>, transform_indices = @transform_2, window_bounds = array<i64: 1, 4>}, {transform_indices = @transform_3, window_bounds = array<i64: 1, 8, 16, 4>}, {transform_indices = @transform_4, window_bounds = array<i64: 1, 2, 4>}]} {
    %c0 = arith.constant 0 : index
    %c0_0 = arith.constant 0 : index
    %c0_1 = arith.constant 0 : index
    %c0_2 = arith.constant 0 : index
    %c0_3 = arith.constant 0 : index
    %0 = vector.load %arg2[%c0, %c0_0, %c0_1, %c0_2, %c0_3] : memref<1x1x10x18x4xf32, #tpu.memory_space<vmem>>, vector<1x1x10x18x4xf32>
    %1 = vector.shape_cast %0 : vector<1x1x10x18x4xf32> to vector<10x18x4xf32>
    %2 = vector.extract_strided_slice %1 {offsets = [0, 0, 0], sizes = [8, 16, 4], strides = [1, 1, 1]} : vector<10x18x4xf32> to vector<8x16x4xf32>
    %3 = vector.extract_strided_slice %1 {offsets = [0, 1, 0], sizes = [8, 16, 4], strides = [1, 1, 1]} : vector<10x18x4xf32> to vector<8x16x4xf32>
    %4 = vector.extract_strided_slice %1 {offsets = [0, 2, 0], sizes = [8, 16, 4], strides = [1, 1, 1]} : vector<10x18x4xf32> to vector<8x16x4xf32>
    %5 = vector.extract_strided_slice %1 {offsets = [1, 0, 0], sizes = [8, 16, 4], strides = [1, 1, 1]} : vector<10x18x4xf32> to vector<8x16x4xf32>
    %6 = vector.extract_strided_slice %1 {offsets = [1, 1, 0], sizes = [8, 16, 4], strides = [1, 1, 1]} : vector<10x18x4xf32> to vector<8x16x4xf32>
    %7 = vector.extract_strided_slice %1 {offsets = [1, 2, 0], sizes = [8, 16, 4], strides = [1, 1, 1]} : vector<10x18x4xf32> to vector<8x16x4xf32>
    %8 = vector.extract_strided_slice %1 {offsets = [2, 0, 0], sizes = [8, 16, 4], strides = [1, 1, 1]} : vector<10x18x4xf32> to vector<8x16x4xf32>
    %9 = vector.extract_strided_slice %1 {offsets = [2, 1, 0], sizes = [8, 16, 4], strides = [1, 1, 1]} : vector<10x18x4xf32> to vector<8x16x4xf32>
    %10 = vector.extract_strided_slice %1 {offsets = [2, 2, 0], sizes = [8, 16, 4], strides = [1, 1, 1]} : vector<10x18x4xf32> to vector<8x16x4xf32>
    %11 = tpu.concatenate %2, %3, %4, %5, %6, %7, %8, %9, %10 in 2 : vector<8x16x4xf32>, vector<8x16x4xf32>, vector<8x16x4xf32>, vector<8x16x4xf32>, vector<8x16x4xf32>, vector<8x16x4xf32>, vector<8x16x4xf32>, vector<8x16x4xf32>, vector<8x16x4xf32> -> vector<8x16x36xf32>
    %12 = vector.shape_cast %11 : vector<8x16x36xf32> to vector<128x36xf32>
    %c0_4 = arith.constant 0 : index
    %c0_5 = arith.constant 0 : index
    %13 = vector.load %arg3[%c0_4, %c0_5] : memref<36x4xf32, #tpu.memory_space<vmem>>, vector<36x4xf32>
    %cst = arith.constant dense<0.000000e+00> : vector<128x4xf32>
    %14 = tpu.matmul %12, %13, %cst {dimension_numbers = #tpu.dot_dimension_numbers<[1], [0], [0], [1], [0, 0, 1, 1], [], []>} : vector<128x36xf32>, vector<36x4xf32>, vector<128x4xf32> -> vector<128x4xf32>
    %c0_6 = arith.constant 0 : index
    %c0_7 = arith.constant 0 : index
    %15 = vector.load %arg4[%c0_6, %c0_7] : memref<1x4xf32, #tpu.memory_space<vmem>>, vector<1x4xf32>
    %16 = vector.broadcast %15 : vector<1x4xf32> to vector<128x4xf32>
    %17 = arith.addf %14, %16 : vector<128x4xf32>
    %cst_8 = arith.constant dense<0.000000e+00> : vector<4xf32>
    %18 = vector.multi_reduction <add>, %17, %cst_8 [0] : vector<128x4xf32> to vector<4xf32>
    %19 = vector.shape_cast %18 : vector<4xf32> to vector<1x4xf32>
    %20 = arith.mulf %17, %17 : vector<128x4xf32>
    %cst_9 = arith.constant dense<0.000000e+00> : vector<4xf32>
    %21 = vector.multi_reduction <add>, %20, %cst_9 [0] : vector<128x4xf32> to vector<4xf32>
    %22 = vector.shape_cast %21 : vector<4xf32> to vector<1x4xf32>
    %23 = tpu.concatenate %19, %22 in 0 : vector<1x4xf32>, vector<1x4xf32> -> vector<2x4xf32>
    %c0_i32 = arith.constant 0 : i32
    %24 = arith.cmpi eq, %arg1, %c0_i32 : i32
    %25 = arith.extui %24 : i1 to i32
    %c0_i32_10 = arith.constant 0 : i32
    %26 = arith.cmpi ne, %25, %c0_i32_10 : i32
    scf.if %26 {
      %cst_21 = arith.constant 0.000000e+00 : f32
      %37 = vector.broadcast %cst_21 : f32 to vector<2x4xf32>
      %c0_22 = arith.constant 0 : index
      %c0_23 = arith.constant 0 : index
      %c0_24 = arith.constant 0 : index
      %38 = vector.load %arg6[%c0_22, %c0_23, %c0_24] : memref<1x2x4xf32, #tpu.memory_space<vmem>>, vector<1x2x4xf32>
      %39 = vector.shape_cast %38 : vector<1x2x4xf32> to vector<2x4xf32>
      %40 = vector.shape_cast %37 : vector<2x4xf32> to vector<1x2x4xf32>
      tpu.vector_store %arg6[%c0_22, %c0_23, %c0_24], %40 {strides = array<i32>} : memref<1x2x4xf32, #tpu.memory_space<vmem>>, vector<1x2x4xf32>,
    } else {
    }
    %c0_11 = arith.constant 0 : index
    %c0_12 = arith.constant 0 : index
    %c0_13 = arith.constant 0 : index
    %27 = vector.load %arg6[%c0_11, %c0_12, %c0_13] : memref<1x2x4xf32, #tpu.memory_space<vmem>>, vector<1x2x4xf32>
    %28 = vector.shape_cast %27 : vector<1x2x4xf32> to vector<2x4xf32>
    %29 = arith.addf %28, %23 : vector<2x4xf32>
    %c0_14 = arith.constant 0 : index
    %c0_15 = arith.constant 0 : index
    %c0_16 = arith.constant 0 : index
    %30 = vector.load %arg6[%c0_14, %c0_15, %c0_16] : memref<1x2x4xf32, #tpu.memory_space<vmem>>, vector<1x2x4xf32>
    %31 = vector.shape_cast %30 : vector<1x2x4xf32> to vector<2x4xf32>
    %32 = vector.shape_cast %29 : vector<2x4xf32> to vector<1x2x4xf32>
    tpu.vector_store %arg6[%c0_14, %c0_15, %c0_16], %32 {strides = array<i32>} : memref<1x2x4xf32, #tpu.memory_space<vmem>>, vector<1x2x4xf32>,
    %33 = vector.shape_cast %17 : vector<128x4xf32> to vector<8x16x4xf32>
    %c0_17 = arith.constant 0 : index
    %c0_18 = arith.constant 0 : index
    %c0_19 = arith.constant 0 : index
    %c0_20 = arith.constant 0 : index
    %34 = vector.load %arg5[%c0_17, %c0_18, %c0_19, %c0_20] : memref<1x8x16x4xf32, #tpu.memory_space<vmem>>, vector<1x8x16x4xf32>
    %35 = vector.shape_cast %34 : vector<1x8x16x4xf32> to vector<8x16x4xf32>
    %36 = vector.shape_cast %33 : vector<8x16x4xf32> to vector<1x8x16x4xf32>
    tpu.vector_store %arg5[%c0_17, %c0_18, %c0_19, %c0_20], %36 {strides = array<i32>} : memref<1x8x16x4xf32, #tpu.memory_space<vmem>>, vector<1x8x16x4xf32>,
    return
  }
  func.func @transform_0(%arg0: i32, %arg1: i32) -> (i32, i32, i32, i32, i32) {
    %c0_i32 = arith.constant 0 : i32
    %c0_i32_0 = arith.constant 0 : i32
    %c0_i32_1 = arith.constant 0 : i32
    %c0_i32_2 = arith.constant 0 : i32
    return %arg0, %arg1, %c0_i32, %c0_i32_0, %c0_i32_1 : i32, i32, i32, i32, i32
  }
  func.func @transform_1(%arg0: i32, %arg1: i32) -> (i32, i32) {
    %c0_i32 = arith.constant 0 : i32
    %c0_i32_0 = arith.constant 0 : i32
    %c0_i32_1 = arith.constant 0 : i32
    return %c0_i32, %c0_i32_0 : i32, i32
  }
  func.func @transform_2(%arg0: i32, %arg1: i32) -> (i32, i32) {
    %c0_i32 = arith.constant 0 : i32
    %c0_i32_0 = arith.constant 0 : i32
    %c0_i32_1 = arith.constant 0 : i32
    return %c0_i32, %c0_i32_0 : i32, i32
  }
  func.func @transform_3(%arg0: i32, %arg1: i32) -> (i32, i32, i32, i32) {
    %c0_i32 = arith.constant 0 : i32
    %c0_i32_0 = arith.constant 0 : i32
    %c0_i32_1 = arith.constant 0 : i32
    return %arg0, %arg1, %c0_i32, %c0_i32_0 : i32, i32, i32, i32
  }
  func.func @transform_4(%arg0: i32, %arg1: i32) -> (i32, i32, i32) {
    %c0_i32 = arith.constant 0 : i32
    %c0_i32_0 = arith.constant 0 : i32
    %c0_i32_1 = arith.constant 0 : i32
    return %arg0, %c0_i32, %c0_i32_0 : i32, i32, i32
  }
}

module attributes {stable_mosaic.version = 11 : i64} {
  func.func @_conv_in_stats_kernel(%arg0: i32, %arg1: i32, %arg2: memref<1x2x4xf32, #tpu.memory_space<vmem>>, %arg3: memref<1x1x10x18x4xf32, #tpu.memory_space<vmem>>, %arg4: memref<36x4xf32, #tpu.memory_space<vmem>>, %arg5: memref<1x4xf32, #tpu.memory_space<vmem>>, %arg6: memref<1x8x16x4xf32, #tpu.memory_space<vmem>>, %arg7: memref<1x2x4xf32, #tpu.memory_space<vmem>>) attributes {dimension_semantics = [#tpu.dimension_semantics<parallel>, #tpu.dimension_semantics<arbitrary>], iteration_bounds = array<i64: 2, 2>, scalar_prefetch = 0 : i64, scratch_operands = 0 : i64, tpu.core_type = #tpu.core_type<tc>, window_params = [{transform_indices = @transform_0, window_bounds = array<i64: 1, 2, 4>}, {transform_indices = @transform_1, window_bounds = array<i64: 1, 1, 10, 18, 4>}, {pipeline_mode = #tpu.pipeline_mode<synchronous>, transform_indices = @transform_2, window_bounds = array<i64: 36, 4>}, {pipeline_mode = #tpu.pipeline_mode<synchronous>, transform_indices = @transform_3, window_bounds = array<i64: 1, 4>}, {transform_indices = @transform_4, window_bounds = array<i64: 1, 8, 16, 4>}, {transform_indices = @transform_5, window_bounds = array<i64: 1, 2, 4>}]} {
    %c0 = arith.constant 0 : index
    %c0_0 = arith.constant 0 : index
    %c0_1 = arith.constant 0 : index
    %c0_2 = arith.constant 0 : index
    %c0_3 = arith.constant 0 : index
    %0 = vector.load %arg3[%c0, %c0_0, %c0_1, %c0_2, %c0_3] : memref<1x1x10x18x4xf32, #tpu.memory_space<vmem>>, vector<1x1x10x18x4xf32>
    %1 = vector.shape_cast %0 : vector<1x1x10x18x4xf32> to vector<10x18x4xf32>
    %c0_4 = arith.constant 0 : index
    %c0_5 = arith.constant 0 : index
    %c0_6 = arith.constant 0 : index
    %2 = vector.load %arg2[%c0_4, %c0_5, %c0_6] : memref<1x2x4xf32, #tpu.memory_space<vmem>>, vector<1x2x4xf32>
    %3 = vector.shape_cast %2 : vector<1x2x4xf32> to vector<2x4xf32>
    %4 = vector.extract_strided_slice %3 {offsets = [0, 0], sizes = [1, 4], strides = [1, 1]} : vector<2x4xf32> to vector<1x4xf32>
    %cst = arith.constant 3.906250e-03 : f32
    %5 = vector.broadcast %cst : f32 to vector<1x4xf32>
    %6 = arith.mulf %4, %5 : vector<1x4xf32>
    %7 = vector.extract_strided_slice %3 {offsets = [1, 0], sizes = [1, 4], strides = [1, 1]} : vector<2x4xf32> to vector<1x4xf32>
    %cst_7 = arith.constant 3.906250e-03 : f32
    %8 = vector.broadcast %cst_7 : f32 to vector<1x4xf32>
    %9 = arith.mulf %7, %8 : vector<1x4xf32>
    %10 = arith.mulf %6, %6 : vector<1x4xf32>
    %11 = arith.subf %9, %10 : vector<1x4xf32>
    %cst_8 = arith.constant 9.99999974E-6 : f32
    %12 = vector.broadcast %cst_8 : f32 to vector<1x4xf32>
    %13 = arith.addf %11, %12 : vector<1x4xf32>
    %14 = math.rsqrt %13 : vector<1x4xf32>
    %15 = vector.shape_cast %6 : vector<1x4xf32> to vector<1x1x4xf32>
    %16 = vector.broadcast %15 : vector<1x1x4xf32> to vector<10x18x4xf32>
    %17 = arith.subf %1, %16 : vector<10x18x4xf32>
    %18 = vector.shape_cast %14 : vector<1x4xf32> to vector<1x1x4xf32>
    %19 = vector.broadcast %18 : vector<1x1x4xf32> to vector<10x18x4xf32>
    %20 = arith.mulf %17, %19 : vector<10x18x4xf32>
    %cst_9 = arith.constant 0.000000e+00 : f32
    %21 = vector.broadcast %cst_9 : f32 to vector<10x18x4xf32>
    %22 = arith.maximumf %20, %21 : vector<10x18x4xf32>
    %23 = vector.extract_strided_slice %22 {offsets = [0, 0, 0], sizes = [8, 16, 4], strides = [1, 1, 1]} : vector<10x18x4xf32> to vector<8x16x4xf32>
    %24 = vector.extract_strided_slice %22 {offsets = [0, 1, 0], sizes = [8, 16, 4], strides = [1, 1, 1]} : vector<10x18x4xf32> to vector<8x16x4xf32>
    %25 = vector.extract_strided_slice %22 {offsets = [0, 2, 0], sizes = [8, 16, 4], strides = [1, 1, 1]} : vector<10x18x4xf32> to vector<8x16x4xf32>
    %26 = vector.extract_strided_slice %22 {offsets = [1, 0, 0], sizes = [8, 16, 4], strides = [1, 1, 1]} : vector<10x18x4xf32> to vector<8x16x4xf32>
    %27 = vector.extract_strided_slice %22 {offsets = [1, 1, 0], sizes = [8, 16, 4], strides = [1, 1, 1]} : vector<10x18x4xf32> to vector<8x16x4xf32>
    %28 = vector.extract_strided_slice %22 {offsets = [1, 2, 0], sizes = [8, 16, 4], strides = [1, 1, 1]} : vector<10x18x4xf32> to vector<8x16x4xf32>
    %29 = vector.extract_strided_slice %22 {offsets = [2, 0, 0], sizes = [8, 16, 4], strides = [1, 1, 1]} : vector<10x18x4xf32> to vector<8x16x4xf32>
    %30 = vector.extract_strided_slice %22 {offsets = [2, 1, 0], sizes = [8, 16, 4], strides = [1, 1, 1]} : vector<10x18x4xf32> to vector<8x16x4xf32>
    %31 = vector.extract_strided_slice %22 {offsets = [2, 2, 0], sizes = [8, 16, 4], strides = [1, 1, 1]} : vector<10x18x4xf32> to vector<8x16x4xf32>
    %32 = tpu.concatenate %23, %24, %25, %26, %27, %28, %29, %30, %31 in 2 : vector<8x16x4xf32>, vector<8x16x4xf32>, vector<8x16x4xf32>, vector<8x16x4xf32>, vector<8x16x4xf32>, vector<8x16x4xf32>, vector<8x16x4xf32>, vector<8x16x4xf32>, vector<8x16x4xf32> -> vector<8x16x36xf32>
    %33 = vector.shape_cast %32 : vector<8x16x36xf32> to vector<128x36xf32>
    %c0_10 = arith.constant 0 : index
    %c0_11 = arith.constant 0 : index
    %34 = vector.load %arg4[%c0_10, %c0_11] : memref<36x4xf32, #tpu.memory_space<vmem>>, vector<36x4xf32>
    %cst_12 = arith.constant dense<0.000000e+00> : vector<128x4xf32>
    %35 = tpu.matmul %33, %34, %cst_12 {dimension_numbers = #tpu.dot_dimension_numbers<[1], [0], [0], [1], [0, 0, 1, 1], [], []>} : vector<128x36xf32>, vector<36x4xf32>, vector<128x4xf32> -> vector<128x4xf32>
    %c0_13 = arith.constant 0 : index
    %c0_14 = arith.constant 0 : index
    %36 = vector.load %arg5[%c0_13, %c0_14] : memref<1x4xf32, #tpu.memory_space<vmem>>, vector<1x4xf32>
    %37 = vector.broadcast %36 : vector<1x4xf32> to vector<128x4xf32>
    %38 = arith.addf %35, %37 : vector<128x4xf32>
    %cst_15 = arith.constant dense<0.000000e+00> : vector<4xf32>
    %39 = vector.multi_reduction <add>, %38, %cst_15 [0] : vector<128x4xf32> to vector<4xf32>
    %40 = vector.shape_cast %39 : vector<4xf32> to vector<1x4xf32>
    %41 = arith.mulf %38, %38 : vector<128x4xf32>
    %cst_16 = arith.constant dense<0.000000e+00> : vector<4xf32>
    %42 = vector.multi_reduction <add>, %41, %cst_16 [0] : vector<128x4xf32> to vector<4xf32>
    %43 = vector.shape_cast %42 : vector<4xf32> to vector<1x4xf32>
    %44 = tpu.concatenate %40, %43 in 0 : vector<1x4xf32>, vector<1x4xf32> -> vector<2x4xf32>
    %c0_i32 = arith.constant 0 : i32
    %45 = arith.cmpi eq, %arg1, %c0_i32 : i32
    %46 = arith.extui %45 : i1 to i32
    %c0_i32_17 = arith.constant 0 : i32
    %47 = arith.cmpi ne, %46, %c0_i32_17 : i32
    scf.if %47 {
      %cst_28 = arith.constant 0.000000e+00 : f32
      %58 = vector.broadcast %cst_28 : f32 to vector<2x4xf32>
      %c0_29 = arith.constant 0 : index
      %c0_30 = arith.constant 0 : index
      %c0_31 = arith.constant 0 : index
      %59 = vector.load %arg7[%c0_29, %c0_30, %c0_31] : memref<1x2x4xf32, #tpu.memory_space<vmem>>, vector<1x2x4xf32>
      %60 = vector.shape_cast %59 : vector<1x2x4xf32> to vector<2x4xf32>
      %61 = vector.shape_cast %58 : vector<2x4xf32> to vector<1x2x4xf32>
      tpu.vector_store %arg7[%c0_29, %c0_30, %c0_31], %61 {strides = array<i32>} : memref<1x2x4xf32, #tpu.memory_space<vmem>>, vector<1x2x4xf32>,
    } else {
    }
    %c0_18 = arith.constant 0 : index
    %c0_19 = arith.constant 0 : index
    %c0_20 = arith.constant 0 : index
    %48 = vector.load %arg7[%c0_18, %c0_19, %c0_20] : memref<1x2x4xf32, #tpu.memory_space<vmem>>, vector<1x2x4xf32>
    %49 = vector.shape_cast %48 : vector<1x2x4xf32> to vector<2x4xf32>
    %50 = arith.addf %49, %44 : vector<2x4xf32>
    %c0_21 = arith.constant 0 : index
    %c0_22 = arith.constant 0 : index
    %c0_23 = arith.constant 0 : index
    %51 = vector.load %arg7[%c0_21, %c0_22, %c0_23] : memref<1x2x4xf32, #tpu.memory_space<vmem>>, vector<1x2x4xf32>
    %52 = vector.shape_cast %51 : vector<1x2x4xf32> to vector<2x4xf32>
    %53 = vector.shape_cast %50 : vector<2x4xf32> to vector<1x2x4xf32>
    tpu.vector_store %arg7[%c0_21, %c0_22, %c0_23], %53 {strides = array<i32>} : memref<1x2x4xf32, #tpu.memory_space<vmem>>, vector<1x2x4xf32>,
    %54 = vector.shape_cast %38 : vector<128x4xf32> to vector<8x16x4xf32>
    %c0_24 = arith.constant 0 : index
    %c0_25 = arith.constant 0 : index
    %c0_26 = arith.constant 0 : index
    %c0_27 = arith.constant 0 : index
    %55 = vector.load %arg6[%c0_24, %c0_25, %c0_26, %c0_27] : memref<1x8x16x4xf32, #tpu.memory_space<vmem>>, vector<1x8x16x4xf32>
    %56 = vector.shape_cast %55 : vector<1x8x16x4xf32> to vector<8x16x4xf32>
    %57 = vector.shape_cast %54 : vector<8x16x4xf32> to vector<1x8x16x4xf32>
    tpu.vector_store %arg6[%c0_24, %c0_25, %c0_26, %c0_27], %57 {strides = array<i32>} : memref<1x8x16x4xf32, #tpu.memory_space<vmem>>, vector<1x8x16x4xf32>,
    return
  }
  func.func @transform_0(%arg0: i32, %arg1: i32) -> (i32, i32, i32) {
    %c0_i32 = arith.constant 0 : i32
    %c0_i32_0 = arith.constant 0 : i32
    %c0_i32_1 = arith.constant 0 : i32
    return %arg0, %c0_i32, %c0_i32_0 : i32, i32, i32
  }
  func.func @transform_1(%arg0: i32, %arg1: i32) -> (i32, i32, i32, i32, i32) {
    %c0_i32 = arith.constant 0 : i32
    %c0_i32_0 = arith.constant 0 : i32
    %c0_i32_1 = arith.constant 0 : i32
    %c0_i32_2 = arith.constant 0 : i32
    return %arg0, %arg1, %c0_i32, %c0_i32_0, %c0_i32_1 : i32, i32, i32, i32, i32
  }
  func.func @transform_2(%arg0: i32, %arg1: i32) -> (i32, i32) {
    %c0_i32 = arith.constant 0 : i32
    %c0_i32_0 = arith.constant 0 : i32
    %c0_i32_1 = arith.constant 0 : i32
    return %c0_i32, %c0_i32_0 : i32, i32
  }
  func.func @transform_3(%arg0: i32, %arg1: i32) -> (i32, i32) {
    %c0_i32 = arith.constant 0 : i32
    %c0_i32_0 = arith.constant 0 : i32
    %c0_i32_1 = arith.constant 0 : i32
    return %c0_i32, %c0_i32_0 : i32, i32
  }
  func.func @transform_4(%arg0: i32, %arg1: i32) -> (i32, i32, i32, i32) {
    %c0_i32 = arith.constant 0 : i32
    %c0_i32_0 = arith.constant 0 : i32
    %c0_i32_1 = arith.constant 0 : i32
    return %arg0, %arg1, %c0_i32, %c0_i32_0 : i32, i32, i32, i32
  }
  func.func @transform_5(%arg0: i32, %arg1: i32) -> (i32, i32, i32) {
    %c0_i32 = arith.constant 0 : i32
    %c0_i32_0 = arith.constant 0 : i32
    %c0_i32_1 = arith.constant 0 : i32
    return %arg0, %c0_i32, %c0_i32_0 : i32, i32, i32
  }
}

module attributes {stable_mosaic.version = 11 : i64} {
  func.func @_norm_skip_kernel(%arg0: i32, %arg1: i32, %arg2: memref<1x2x4xf32, #tpu.memory_space<vmem>>, %arg3: memref<1x8x16x4xf32, #tpu.memory_space<vmem>>, %arg4: memref<1x8x16x4xf32, #tpu.memory_space<vmem>>, %arg5: memref<1x8x16x4xf32, #tpu.memory_space<vmem>>) attributes {dimension_semantics = [#tpu.dimension_semantics<parallel>, #tpu.dimension_semantics<parallel>], iteration_bounds = array<i64: 2, 2>, scalar_prefetch = 0 : i64, scratch_operands = 0 : i64, tpu.core_type = #tpu.core_type<tc>, window_params = [{transform_indices = @transform_0, window_bounds = array<i64: 1, 2, 4>}, {transform_indices = @transform_1, window_bounds = array<i64: 1, 8, 16, 4>}, {transform_indices = @transform_2, window_bounds = array<i64: 1, 8, 16, 4>}, {transform_indices = @transform_3, window_bounds = array<i64: 1, 8, 16, 4>}]} {
    %c0 = arith.constant 0 : index
    %c0_0 = arith.constant 0 : index
    %c0_1 = arith.constant 0 : index
    %0 = vector.load %arg2[%c0, %c0_0, %c0_1] : memref<1x2x4xf32, #tpu.memory_space<vmem>>, vector<1x2x4xf32>
    %1 = vector.shape_cast %0 : vector<1x2x4xf32> to vector<2x4xf32>
    %2 = vector.extract_strided_slice %1 {offsets = [0, 0], sizes = [1, 4], strides = [1, 1]} : vector<2x4xf32> to vector<1x4xf32>
    %cst = arith.constant 3.906250e-03 : f32
    %3 = vector.broadcast %cst : f32 to vector<1x4xf32>
    %4 = arith.mulf %2, %3 : vector<1x4xf32>
    %5 = vector.extract_strided_slice %1 {offsets = [1, 0], sizes = [1, 4], strides = [1, 1]} : vector<2x4xf32> to vector<1x4xf32>
    %cst_2 = arith.constant 3.906250e-03 : f32
    %6 = vector.broadcast %cst_2 : f32 to vector<1x4xf32>
    %7 = arith.mulf %5, %6 : vector<1x4xf32>
    %8 = arith.mulf %4, %4 : vector<1x4xf32>
    %9 = arith.subf %7, %8 : vector<1x4xf32>
    %cst_3 = arith.constant 9.99999974E-6 : f32
    %10 = vector.broadcast %cst_3 : f32 to vector<1x4xf32>
    %11 = arith.addf %9, %10 : vector<1x4xf32>
    %12 = math.rsqrt %11 : vector<1x4xf32>
    %c0_4 = arith.constant 0 : index
    %c0_5 = arith.constant 0 : index
    %c0_6 = arith.constant 0 : index
    %c0_7 = arith.constant 0 : index
    %13 = vector.load %arg3[%c0_4, %c0_5, %c0_6, %c0_7] : memref<1x8x16x4xf32, #tpu.memory_space<vmem>>, vector<1x8x16x4xf32>
    %14 = vector.shape_cast %13 : vector<1x8x16x4xf32> to vector<8x16x4xf32>
    %c0_8 = arith.constant 0 : index
    %c0_9 = arith.constant 0 : index
    %c0_10 = arith.constant 0 : index
    %c0_11 = arith.constant 0 : index
    %15 = vector.load %arg4[%c0_8, %c0_9, %c0_10, %c0_11] : memref<1x8x16x4xf32, #tpu.memory_space<vmem>>, vector<1x8x16x4xf32>
    %16 = vector.shape_cast %15 : vector<1x8x16x4xf32> to vector<8x16x4xf32>
    %17 = vector.shape_cast %4 : vector<1x4xf32> to vector<1x1x4xf32>
    %18 = vector.broadcast %17 : vector<1x1x4xf32> to vector<8x16x4xf32>
    %19 = arith.subf %16, %18 : vector<8x16x4xf32>
    %20 = vector.shape_cast %12 : vector<1x4xf32> to vector<1x1x4xf32>
    %21 = vector.broadcast %20 : vector<1x1x4xf32> to vector<8x16x4xf32>
    %22 = arith.mulf %19, %21 : vector<8x16x4xf32>
    %23 = arith.addf %14, %22 : vector<8x16x4xf32>
    %c0_12 = arith.constant 0 : index
    %c0_13 = arith.constant 0 : index
    %c0_14 = arith.constant 0 : index
    %c0_15 = arith.constant 0 : index
    %24 = vector.load %arg5[%c0_12, %c0_13, %c0_14, %c0_15] : memref<1x8x16x4xf32, #tpu.memory_space<vmem>>, vector<1x8x16x4xf32>
    %25 = vector.shape_cast %24 : vector<1x8x16x4xf32> to vector<8x16x4xf32>
    %26 = vector.shape_cast %23 : vector<8x16x4xf32> to vector<1x8x16x4xf32>
    tpu.vector_store %arg5[%c0_12, %c0_13, %c0_14, %c0_15], %26 {strides = array<i32>} : memref<1x8x16x4xf32, #tpu.memory_space<vmem>>, vector<1x8x16x4xf32>,
    return
  }
  func.func @transform_0(%arg0: i32, %arg1: i32) -> (i32, i32, i32) {
    %c0_i32 = arith.constant 0 : i32
    %c0_i32_0 = arith.constant 0 : i32
    %c0_i32_1 = arith.constant 0 : i32
    return %arg0, %c0_i32, %c0_i32_0 : i32, i32, i32
  }
  func.func @transform_1(%arg0: i32, %arg1: i32) -> (i32, i32, i32, i32) {
    %c0_i32 = arith.constant 0 : i32
    %c0_i32_0 = arith.constant 0 : i32
    %c0_i32_1 = arith.constant 0 : i32
    return %arg0, %arg1, %c0_i32, %c0_i32_0 : i32, i32, i32, i32
  }
  func.func @transform_2(%arg0: i32, %arg1: i32) -> (i32, i32, i32, i32) {
    %c0_i32 = arith.constant 0 : i32
    %c0_i32_0 = arith.constant 0 : i32
    %c0_i32_1 = arith.constant 0 : i32
    return %arg0, %arg1, %c0_i32, %c0_i32_0 : i32, i32, i32, i32
  }
  func.func @transform_3(%arg0: i32, %arg1: i32) -> (i32, i32, i32, i32) {
    %c0_i32 = arith.constant 0 : i32
    %c0_i32_0 = arith.constant 0 : i32
    %c0_i32_1 = arith.constant 0 : i32
    return %arg0, %arg1, %c0_i32, %c0_i32_0 : i32, i32, i32, i32
  }
}

</mosaic_0001>

<llo_original>
// kernel: resnet_block.5
$region0: #{resnet_block.5}
  #allocation0 [shape = 'u32[]', space=smem, size = 0x4, offset = 0x4, fixed_abs, tag = 'smem constant byte address 0x4 - core index']
  #allocation1 [shape = 'u32[144,128]{1,0:T(1,128)}', space=vmem, size = 0x12000, scoped, tag = 'internal scratch']
  %s0 = inlined_call_operand.vmem [shape: f32[2,2,4], index: 0, kind: input, shape index: {}]
  %s1 = inlined_call_operand.vmem [shape: f32[2,16,16,4], index: 1, kind: input, shape index: {}]
  %s2 = inlined_call_operand.vmem [shape: f32[2,16,16,4], index: 2, kind: input, shape index: {}]
  %s3 = inlined_call_operand.vmem [shape: f32[2,16,16,4], index: 3, kind: output, shape index: {}]
  %s4 = sld [smem:[#allocation0]]
  $region45: #{resnet_block.5} parent=0
    _
  %s6 = ssub.s32 1, %s4
  %s7 = scalar_select 0, %s6, %s4
  loop: start=0, step=1, limit=6
  $region2: #{resnet_block.5} parent=0 // loop_pre_header
    _
  $region3: #{resnet_block.5} parent=0 // loop_header
    %s9 = sphi 0, %s13
    %p10 = scmp.ge.s32.totalorder %s9, 6
    %s16 = sphi 0, %s28
    %s17 = sphi 0, %s24
    %s18 = sphi 0, %s16
    %s19 = sphi 0, %s17
    %s20 = sphi 0, %s18
    %s21 = sphi 0, %s19
    %s31 = sphi 0, %s33
    %s34 = sphi 0, %s31
    %s35 = sphi 0, %s34
    %s51 = sphi 0, %s35
    %s59 = sphi 0, %s61
    %s62 = sphi 0, %s59
    %s63 = sphi 0, %s62
    %s79 = sphi 0, %s63
    %s87 = sphi 0, %s89
    %s90 = sphi 0, %s87
    %s91 = sphi 0, %s90
    %s107 = sphi 0, %s91
    %s115 = sphi 0, %s117
    %s118 = sphi 0, %s115
    %s119 = sphi 0, %s118
    %s135 = sphi 0, %s119
  $region4: #{resnet_block.5} parent=0 // loop_header_branch
    %12 = sbr.rel (%p10) target = $region8
  $region5: #{resnet_block.5} parent=0 // loop_body
    %s14 = ssub.s32 %s9, 1
    %s15 = ssub.s32 %s9, 2
    %s22 = sadd.s32 1, %s17
    %p23 = scmp.ge.s32.totalorder %s22, 2
    %s24 = scalar_select %p23, 0, %s22
    %s25 = sadd.s32 1, %s16
    %s26 = scalar_select %p23, %s25, %s16
    %p27 = scmp.ge.s32.totalorder %s26, 2
    %s28 = scalar_select %p27, 0, %s26
    %s29 = ssub.s32 %s16, %s28
    %p30 = scmp.eq.s32.totalorder %s29, 0
    %s32 = sadd.s32 %s31, 1
    %s33 = scalar_select %p30, %s31, %s32
    %p36 = pneg %p30
    %p37 = scmp.eq.s32.totalorder %s9, 3
    %p38 = por %p36, %p37
    %p39 = scmp.ne.s32.totalorder %s31, %s34
    %p40 = scmp.eq.s32.totalorder %s9, 0
    %p41 = por %p39, %p40
    %p42 = scmp.ne.s32.totalorder %s31, %s34
    %p43 = scmp.eq.s32.totalorder %s14, 3
    %p44 = por %p42, %p43
    %p45 = scmp.ne.s32.totalorder %s34, %s35
    %p46 = scmp.eq.s32.totalorder %s14, 0
    %p47 = por %p45, %p46
    %p48 = scmp.ne.s32.totalorder %s34, %s35
    %p49 = scmp.eq.s32.totalorder %s15, 3
    %p50 = por %p48, %p49
    %p52 = scmp.ne.s32.totalorder %s35, %s51
    %p53 = scmp.eq.s32.totalorder %s15, 0
    %p54 = por %p52, %p53
    %s55 = ssub.s32 %s16, %s28
    %s56 = ssub.s32 %s17, %s24
    %s57 = sor.u32 %s55, %s56
    %p58 = scmp.eq.s32.totalorder %s57, 0
    %s60 = sadd.s32 %s59, 1
    %s61 = scalar_select %p58, %s59, %s60
    %p64 = pneg %p58
    %p65 = scmp.eq.s32.totalorder %s9, 3
    %p66 = por %p64, %p65
    %p67 = scmp.ne.s32.totalorder %s59, %s62
    %p68 = scmp.eq.s32.totalorder %s9, 0
    %p69 = por %p67, %p68
    %p70 = scmp.ne.s32.totalorder %s59, %s62
    %p71 = scmp.eq.s32.totalorder %s14, 3
    %p72 = por %p70, %p71
    %p73 = scmp.ne.s32.totalorder %s62, %s63
    %p74 = scmp.eq.s32.totalorder %s14, 0
    %p75 = por %p73, %p74
    %p76 = scmp.ne.s32.totalorder %s62, %s63
    %p77 = scmp.eq.s32.totalorder %s15, 3
    %p78 = por %p76, %p77
    %p80 = scmp.ne.s32.totalorder %s63, %s79
    %p81 = scmp.eq.s32.totalorder %s15, 0
    %p82 = por %p80, %p81
    %s83 = ssub.s32 %s16, %s28
    %s84 = ssub.s32 %s17, %s24
    %s85 = sor.u32 %s83, %s84
    %p86 = scmp.eq.s32.totalorder %s85, 0
    %s88 = sadd.s32 %s87, 1
    %s89 = scalar_select %p86, %s87, %s88
    %p92 = pneg %p86
    %p93 = scmp.eq.s32.totalorder %s9, 3
    %p94 = por %p92, %p93
    %p95 = scmp.ne.s32.totalorder %s87, %s90
    %p96 = scmp.eq.s32.totalorder %s9, 0
    %p97 = por %p95, %p96
    %p98 = scmp.ne.s32.totalorder %s87, %s90
    %p99 = scmp.eq.s32.totalorder %s14, 3
    %p100 = por %p98, %p99
    %p101 = scmp.ne.s32.totalorder %s90, %s91
    %p102 = scmp.eq.s32.totalorder %s14, 0
    %p103 = por %p101, %p102
    %p104 = scmp.ne.s32.totalorder %s90, %s91
    %p105 = scmp.eq.s32.totalorder %s15, 3
    %p106 = por %p104, %p105
    %p108 = scmp.ne.s32.totalorder %s91, %s107
    %p109 = scmp.eq.s32.totalorder %s15, 0
    %p110 = por %p108, %p109
    %s111 = ssub.s32 %s16, %s28
    %s112 = ssub.s32 %s17, %s24
    %s113 = sor.u32 %s111, %s112
    %p114 = scmp.eq.s32.totalorder %s113, 0
    %s116 = sadd.s32 %s115, 1
    %s117 = scalar_select %p114, %s115, %s116
    %p120 = pneg %p114
    %p121 = scmp.eq.s32.totalorder %s9, 3
    %p122 = por %p120, %p121
    %p123 = scmp.ne.s32.totalorder %s115, %s118
    %p124 = scmp.eq.s32.totalorder %s9, 0
    %p125 = por %p123, %p124
    %p126 = scmp.ne.s32.totalorder %s115, %s118
    %p127 = scmp.eq.s32.totalorder %s14, 3
    %p128 = por %p126, %p127
    %p129 = scmp.ne.s32.totalorder %s118, %s119
    %p130 = scmp.eq.s32.totalorder %s14, 0
    %p131 = por %p129, %p130
    %p132 = scmp.ne.s32.totalorder %s118, %s119
    %p133 = scmp.eq.s32.totalorder %s15, 3
    %p134 = por %p132, %p133
    %p136 = scmp.ne.s32.totalorder %s119, %s135
    %p137 = scmp.eq.s32.totalorder %s15, 0
    %p138 = por %p136, %p137
    %p139 = scmp.le.s32.totalorder 1, %s9
    %p140 = scmp.lt.s32.totalorder %s9, 5
    %p141 = pnand %p139, %p140
    %p142 = pneg %p141
    // Predicated region
    $region9: #{resnet_block.5} parent=5 // pred_check
      _
    $region10: #{resnet_block.5} parent=5 // pred_check_branch
      %144 = sbr.rel (%p141) target = $region12
    $region11: #{resnet_block.5} parent=5 // pred_region
      %s145 = ssub.s32 %s9, 1
    $region12: #{resnet_block.5} parent=5 // pred_fallthru
      _
    %p146 = scmp.lt.s32.totalorder %s9, 4
    // Predicated region
    $region13: #{resnet_block.5} parent=5 // pred_check
      %p147 = pneg %p146
    $region14: #{resnet_block.5} parent=5 // pred_check_branch
      %149 = sbr.rel (%p147) target = $region16
    $region15: #{resnet_block.5} parent=5 // pred_region
      // Predicated region
      $region17: #{resnet_block.5} parent=15 // pred_check
        %p150 = pneg %p41
      $region18: #{resnet_block.5} parent=15 // pred_check_branch
        %152 = sbr.rel (%p150) target = $region20
      $region19: #{resnet_block.5} parent=15 // pred_region
        %p153 = scmp.lt.s32.totalorder %s16, 1
        %s154 = scalar_select %p153, %s16, 1
        %s155 = smul.addr %s154, 2
        %s156 = scalar_lea.vmem %s0, %s155
      $region20: #{resnet_block.5} parent=15 // pred_fallthru
        _
      // Predicated region
      $region21: #{resnet_block.5} parent=15 // pred_check
        %p157 = pneg %p69
      $region22: #{resnet_block.5} parent=15 // pred_check_branch
        %159 = sbr.rel (%p157) target = $region24
      $region23: #{resnet_block.5} parent=15 // pred_region
        %s160 = smul.u32 8, %s17
        %p161 = scmp.lt.s32.totalorder %s16, 1
        %s162 = scalar_select %p161, %s16, 1
        %p163 = scmp.lt.s32.totalorder %s160, 15
        %s164 = scalar_select %p163, %s160, 15
        %s165 = smul.addr %s164, 2
        %s166 = smul.addr %s162, 32
        %s167 = sadd.s32 %s165, %s166
        %s168 = smul.addr %s167, 8
        %s169 = scalar_lea.vmem %s1, %s168
        %s170 = smul.u32 8, %s17
      $region24: #{resnet_block.5} parent=15 // pred_fallthru
        _
      // Predicated region
      $region25: #{resnet_block.5} parent=15 // pred_check
        %p171 = pneg %p97
      $region26: #{resnet_block.5} parent=15 // pred_check_branch
        %173 = sbr.rel (%p171) target = $region28
      $region27: #{resnet_block.5} parent=15 // pred_region
        %s174 = smul.u32 8, %s17
        %p175 = scmp.lt.s32.totalorder %s16, 1
        %s176 = scalar_select %p175, %s16, 1
        %p177 = scmp.lt.s32.totalorder %s174, 15
        %s178 = scalar_select %p177, %s174, 15
        %s179 = smul.addr %s178, 2
        %s180 = smul.addr %s176, 32
        %s181 = sadd.s32 %s179, %s180
        %s182 = smul.addr %s181, 8
        %s183 = scalar_lea.vmem %s2, %s182
        %s184 = smul.u32 8, %s17
      $region28: #{resnet_block.5} parent=15 // pred_fallthru
        _
    $region16: #{resnet_block.5} parent=5 // pred_fallthru
      _
    %p185 = scmp.le.s32.totalorder 1, %s9
    %p186 = scmp.lt.s32.totalorder %s9, 5
    %p187 = pnand %p185, %p186
    %p188 = pneg %p187
    // Predicated region
    $region29: #{resnet_block.5} parent=5 // pred_check
      _
    $region30: #{resnet_block.5} parent=5 // pred_check_branch
      %190 = sbr.rel (%p187) target = $region32
    $region31: #{resnet_block.5} parent=5 // pred_region
      %s191 = ssub.s32 %s9, 1
      %p192 = scmp.lt.s32.totalorder %s18, 1
      %s193 = scalar_select %p192, %s18, 1
      %s194 = smul.addr %s193, 2
      %s195 = scalar_lea.vmem %s0, %s194
      %p196 = pneg %p47
      %p197 = pneg %p44
      %s198 = smul.u32 8, %s19
      %p199 = scmp.lt.s32.totalorder %s18, 1
      %s200 = scalar_select %p199, %s18, 1
      %p201 = scmp.lt.s32.totalorder %s198, 15
      %s202 = scalar_select %p201, %s198, 15
      %s203 = smul.addr %s202, 2
      %s204 = smul.addr %s200, 32
      %s205 = sadd.s32 %s203, %s204
      %s206 = smul.addr %s205, 8
      %s207 = scalar_lea.vmem %s1, %s206
      %p208 = pneg %p75
      %p209 = pneg %p72
      %s210 = smul.u32 8, %s19
      %p211 = scmp.lt.s32.totalorder %s18, 1
      %s212 = scalar_select %p211, %s18, 1
      %p213 = scmp.lt.s32.totalorder %s210, 15
      %s214 = scalar_select %p213, %s210, 15
      %s215 = smul.addr %s214, 2
      %s216 = smul.addr %s212, 32
      %s217 = sadd.s32 %s215, %s216
      %s218 = smul.addr %s217, 8
      %s219 = scalar_lea.vmem %s2, %s218
      %p220 = pneg %p103
      %p221 = pneg %p100
      %p222 = pneg %p131
      %p223 = pneg %p128
      %s224 = smul.u32 8, %s19
      %p225 = scmp.lt.s32.totalorder %s18, 1
      %s226 = scalar_select %p225, %s18, 1
      %p227 = scmp.lt.s32.totalorder %s224, 15
      %s228 = scalar_select %p227, %s224, 15
      %s229 = smul.addr %s228, 2
      %s230 = smul.addr %s226, 32
      %s231 = sadd.s32 %s229, %s230
      %s232 = smul.addr %s231, 8
      %s233 = scalar_lea.vmem %s3, %s232
      %p234 = scmp.lt.s32.totalorder %s18, 1
      %s235 = scalar_select %p234, %s18, 1
      %s236 = smul.addr %s235, 2
      %s237 = scalar_lea.vmem %s0, %s236
      %s238 = smul.u32 8, %s19
      %p239 = scmp.lt.s32.totalorder %s18, 1
      %s240 = scalar_select %p239, %s18, 1
      %p241 = scmp.lt.s32.totalorder %s238, 15
      %s242 = scalar_select %p241, %s238, 15
      %s243 = smul.addr %s242, 2
      %s244 = smul.addr %s240, 32
      %s245 = sadd.s32 %s243, %s244
      %s246 = smul.addr %s245, 8
      %s247 = scalar_lea.vmem %s1, %s246
      %s248 = smul.u32 8, %s19
      %s249 = smul.u32 8, %s19
      %p250 = scmp.lt.s32.totalorder %s18, 1
      %s251 = scalar_select %p250, %s18, 1
      %p252 = scmp.lt.s32.totalorder %s249, 15
      %s253 = scalar_select %p252, %s249, 15
      %s254 = smul.addr %s253, 2
      %s255 = smul.addr %s251, 32
      %s256 = sadd.s32 %s254, %s255
      %s257 = smul.addr %s256, 8
      %s258 = scalar_lea.vmem %s2, %s257
      %s259 = smul.u32 8, %s19
      %s260 = smul.u32 8, %s19
      %p261 = scmp.lt.s32.totalorder %s18, 1
      %s262 = scalar_select %p261, %s18, 1
      %p263 = scmp.lt.s32.totalorder %s260, 15
      %s264 = scalar_select %p263, %s260, 15
      %s265 = smul.addr %s264, 2
      %s266 = smul.addr %s262, 32
      %s267 = sadd.s32 %s265, %s266
      %s268 = smul.addr %s267, 8
      %s269 = scalar_lea.vmem %s3, %s268
      %s270 = smul.u32 8, %s19
      %v271 = vld [vmem:[%s237] sm:$0x3]
      %v272 = vmul.f32 %v271, 0.00390625
      %v273 = vmul.f32 %v272, %v272
      %v275 = vrot.slane %v273, 7
      %v277 = vsub.f32 %v272, %v275
      %v278 = vadd.f32 %v277, 1e-05
      %v279 = vrsqrt.pop %v278
      %v280 = vld [vmem:[%s247] sm:$0xff]
      %v281 = vld [vmem:[%s247 + $0x8] sm:$0xff]
      %v282 = vld [vmem:[%s247 + $0x10] sm:$0xff]
      %v283 = vld [vmem:[%s247 + $0x18] sm:$0xff]
      %v284 = vld [vmem:[%s247 + $0x20] sm:$0xff]
      %v285 = vld [vmem:[%s247 + $0x28] sm:$0xff]
      %v286 = vld [vmem:[%s247 + $0x30] sm:$0xff]
      %v287 = vld [vmem:[%s247 + $0x38] sm:$0xff]
      %v288 = vld [vmem:[%s247 + $0x40] sm:$0xff]
      %v289 = vld [vmem:[%s247 + $0x48] sm:$0xff]
      %v290 = vld [vmem:[%s247 + $0x50] sm:$0xff]
      %v291 = vld [vmem:[%s247 + $0x58] sm:$0xff]
      %v292 = vld [vmem:[%s247 + $0x60] sm:$0xff]
      %v293 = vld [vmem:[%s247 + $0x68] sm:$0xff]
      %v294 = vld [vmem:[%s247 + $0x70] sm:$0xff]
      %v295 = vld [vmem:[%s247 + $0x78] sm:$0xff]
      %v296 = vld [vmem:[%s258] sm:$0xff]
      %v297 = vld [vmem:[%s258 + $0x8] sm:$0xff]
      %v298 = vld [vmem:[%s258 + $0x10] sm:$0xff]
      %v299 = vld [vmem:[%s258 + $0x18] sm:$0xff]
      %v300 = vld [vmem:[%s258 + $0x20] sm:$0xff]
      %v301 = vld [vmem:[%s258 + $0x28] sm:$0xff]
      %v302 = vld [vmem:[%s258 + $0x30] sm:$0xff]
      %v303 = vld [vmem:[%s258 + $0x38] sm:$0xff]
      %v304 = vld [vmem:[%s258 + $0x40] sm:$0xff]
      %v305 = vld [vmem:[%s258 + $0x48] sm:$0xff]
      %v306 = vld [vmem:[%s258 + $0x50] sm:$0xff]
      %v307 = vld [vmem:[%s258 + $0x58] sm:$0xff]
      %v308 = vld [vmem:[%s258 + $0x60] sm:$0xff]
      %v309 = vld [vmem:[%s258 + $0x68] sm:$0xff]
      %v310 = vld [vmem:[%s258 + $0x70] sm:$0xff]
      %v311 = vld [vmem:[%s258 + $0x78] sm:$0xff]
      %v312 = vlaneseq
      %v313 = vshrl.u32 %v312, 7
      %v314 = vsub.s32 0, %v313
      %v315 = vrot.slane %v272, %v314
      %v316 = vsub.f32 %v296, %v315
      %v317 = vsub.f32 %v297, %v315
      %v318 = vsub.f32 %v298, %v315
      %v319 = vsub.f32 %v299, %v315
      %v320 = vsub.f32 %v300, %v315
      %v321 = vsub.f32 %v301, %v315
      %v322 = vsub.f32 %v302, %v315
      %v323 = vsub.f32 %v303, %v315
      %v324 = vsub.f32 %v304, %v315
      %v325 = vsub.f32 %v305, %v315
      %v326 = vsub.f32 %v306, %v315
      %v327 = vsub.f32 %v307, %v315
      %v328 = vsub.f32 %v308, %v315
      %v329 = vsub.f32 %v309, %v315
      %v330 = vsub.f32 %v310, %v315
      %v331 = vsub.f32 %v311, %v315
      %v332 = vlaneseq
      %v333 = vshrl.u32 %v332, 7
      %v334 = vsub.s32 1, %v333
      %v335 = vrot.slane %v279, %v334
      %v336 = vmul.f32 %v316, %v335
      %v337 = vmul.f32 %v317, %v335
      %v338 = vmul.f32 %v318, %v335
      %v339 = vmul.f32 %v319, %v335
      %v340 = vmul.f32 %v320, %v335
      %v341 = vmul.f32 %v321, %v335
      %v342 = vmul.f32 %v322, %v335
      %v343 = vmul.f32 %v323, %v335
      %v344 = vmul.f32 %v324, %v335
      %v345 = vmul.f32 %v325, %v335
      %v346 = vmul.f32 %v326, %v335
      %v347 = vmul.f32 %v327, %v335
      %v348 = vmul.f32 %v328, %v335
      %v349 = vmul.f32 %v329, %v335
      %v350 = vmul.f32 %v330, %v335
      %v351 = vmul.f32 %v331, %v335
      %v352 = vadd.f32 %v280, %v336
      %v353 = vadd.f32 %v281, %v337
      %v354 = vadd.f32 %v282, %v338
      %v355 = vadd.f32 %v283, %v339
      %v356 = vadd.f32 %v284, %v340
      %v357 = vadd.f32 %v285, %v341
      %v358 = vadd.f32 %v286, %v342
      %v359 = vadd.f32 %v287, %v343
      %v360 = vadd.f32 %v288, %v344
      %v361 = vadd.f32 %v289, %v345
      %v362 = vadd.f32 %v290, %v346
      %v363 = vadd.f32 %v291, %v347
      %v364 = vadd.f32 %v292, %v348
      %v365 = vadd.f32 %v293, %v349
      %v366 = vadd.f32 %v294, %v350
      %v367 = vadd.f32 %v295, %v351
      %vm368 = vcmask 31744
      %369 = vst.msk [vmem:[%s269] sm:$0xff] %vm368, %v352
      %370 = vst.msk [vmem:[%s269 + $0x8] sm:$0xff] %vm368, %v353
      %371 = vst.msk [vmem:[%s269 + $0x10] sm:$0xff] %vm368, %v354
      %372 = vst.msk [vmem:[%s269 + $0x18] sm:$0xff] %vm368, %v355
      %373 = vst.msk [vmem:[%s269 + $0x20] sm:$0xff] %vm368, %v356
      %374 = vst.msk [vmem:[%s269 + $0x28] sm:$0xff] %vm368, %v357
      %375 = vst.msk [vmem:[%s269 + $0x30] sm:$0xff] %vm368, %v358
      %376 = vst.msk [vmem:[%s269 + $0x38] sm:$0xff] %vm368, %v359
      %377 = vst.msk [vmem:[%s269 + $0x40] sm:$0xff] %vm368, %v360
      %378 = vst.msk [vmem:[%s269 + $0x48] sm:$0xff] %vm368, %v361
      %379 = vst.msk [vmem:[%s269 + $0x50] sm:$0xff] %vm368, %v362
      %380 = vst.msk [vmem:[%s269 + $0x58] sm:$0xff] %vm368, %v363
      %381 = vst.msk [vmem:[%s269 + $0x60] sm:$0xff] %vm368, %v364
      %382 = vst.msk [vmem:[%s269 + $0x68] sm:$0xff] %vm368, %v365
      %383 = vst.msk [vmem:[%s269 + $0x70] sm:$0xff] %vm368, %v366
      %384 = vst.msk [vmem:[%s269 + $0x78] sm:$0xff] %vm368, %v367
      %s385 = smul.u32 8, %s19
      %p386 = scmp.lt.s32.totalorder %s18, 1
      %s387 = scalar_select %p386, %s18, 1
      %p388 = scmp.lt.s32.totalorder %s385, 15
      %s389 = scalar_select %p388, %s385, 15
      %s390 = smul.addr %s389, 2
      %s391 = smul.addr %s387, 32
      %s392 = sadd.s32 %s390, %s391
      %s393 = smul.addr %s392, 8
      %s394 = scalar_lea.vmem %s3, %s393
      // Predicated region
      $region33: #{resnet_block.5} parent=31 // pred_check
        %p395 = pneg %p128
      $region34: #{resnet_block.5} parent=31 // pred_check_branch
        %397 = sbr.rel (%p395) target = $region36
      $region35: #{resnet_block.5} parent=31 // pred_region
        %s398 = smul.u32 8, %s19
      $region36: #{resnet_block.5} parent=31 // pred_fallthru
        _
    $region32: #{resnet_block.5} parent=5 // pred_fallthru
      _
    %p399 = scmp.le.s32.totalorder 2, %s9
    // Predicated region
    $region37: #{resnet_block.5} parent=5 // pred_check
      %p400 = pneg %p399
    $region38: #{resnet_block.5} parent=5 // pred_check_branch
      %402 = sbr.rel (%p400) target = $region40
    $region39: #{resnet_block.5} parent=5 // pred_region
      %s403 = ssub.s32 %s9, 2
      // Predicated region
      $region41: #{resnet_block.5} parent=39 // pred_check
        %p404 = pneg %p134
      $region42: #{resnet_block.5} parent=39 // pred_check_branch
        %406 = sbr.rel (%p404) target = $region44
      $region43: #{resnet_block.5} parent=39 // pred_region
        %s407 = smul.u32 8, %s21
        %p408 = scmp.lt.s32.totalorder %s20, 1
        %s409 = scalar_select %p408, %s20, 1
        %p410 = scmp.lt.s32.totalorder %s407, 15
        %s411 = scalar_select %p410, %s407, 15
        %s412 = smul.addr %s411, 2
        %s413 = smul.addr %s409, 32
        %s414 = sadd.s32 %s412, %s413
        %s415 = smul.addr %s414, 8
        %s416 = scalar_lea.vmem %s3, %s415
      $region44: #{resnet_block.5} parent=39 // pred_fallthru
        _
    $region40: #{resnet_block.5} parent=5 // pred_fallthru
      _
  $region6: #{resnet_block.5} parent=0 // loop_footer
    %s13 = sadd.s32 1, %s9
  $region7: #{resnet_block.5} parent=0 // loop_footer_branch
    %8 = sbr.rel target = $region3
  $region8: #{resnet_block.5} parent=0 // loop_exit
    _

// kernel: resnet_block.3
$region0: #{resnet_block.3}
  #allocation0 [shape = 'u32[]', space=smem, size = 0x4, offset = 0x4, fixed_abs, tag = 'smem constant byte address 0x4 - core index']
  #allocation1 [shape = 'u32[144,128]{1,0:T(1,128)}', space=vmem, size = 0x12000, scoped, tag = 'internal scratch']
  %s0 = inlined_call_operand.vmem [shape: f32[2,2,10,18,4], index: 0, kind: input, shape index: {}]
  %s1 = inlined_call_operand.vmem [shape: f32[36,4], index: 1, kind: input, shape index: {}]
  %s2 = inlined_call_operand.vmem [shape: f32[1,4], index: 2, kind: input, shape index: {}]
  %s3 = inlined_call_operand.vmem [shape: f32[2,16,16,4], index: 3, kind: output, shape index: {0}]
  %s4 = inlined_call_operand.vmem [shape: f32[2,2,4], index: 4, kind: output, shape index: {1}]
  %5 = xla_tuple %s3, %s4
  %s6 = sld [smem:[#allocation0]]
  $region57: #{resnet_block.3} parent=0
    _
  %s8 = ssub.s32 1, %s6
  %s9 = scalar_select 0, %s8, %s6
  loop: start=0, step=1, limit=6
  $region2: #{resnet_block.3} parent=0 // loop_pre_header
    _
  $region3: #{resnet_block.3} parent=0 // loop_header
    %s11 = sphi 0, %s15
    %p12 = scmp.ge.s32.totalorder %s11, 6
    %s18 = sphi 0, %s30
    %s19 = sphi 0, %s26
    %s20 = sphi 0, %s18
    %s21 = sphi 0, %s19
    %s22 = sphi 0, %s20
    %s23 = sphi 0, %s21
    %s35 = sphi 0, %s37
    %s38 = sphi 0, %s35
    %s39 = sphi 0, %s38
    %s55 = sphi 0, %s39
    %s59 = sphi 0, %s59
    %s61 = sphi 0, %s59
    %s62 = sphi 0, %s61
    %s76 = sphi 0, %s62
    %s80 = sphi 0, %s80
    %s82 = sphi 0, %s80
    %s83 = sphi 0, %s82
    %s97 = sphi 0, %s83
    %s105 = sphi 0, %s107
    %s108 = sphi 0, %s105
    %s109 = sphi 0, %s108
    %s125 = sphi 0, %s109
    %s131 = sphi 0, %s133
    %s134 = sphi 0, %s131
    %s135 = sphi 0, %s134
    %s151 = sphi 0, %s135
  $region4: #{resnet_block.3} parent=0 // loop_header_branch
    %14 = sbr.rel (%p12) target = $region8
  $region5: #{resnet_block.3} parent=0 // loop_body
    %s16 = ssub.s32 %s11, 1
    %s17 = ssub.s32 %s11, 2
    %s24 = sadd.s32 1, %s19
    %p25 = scmp.ge.s32.totalorder %s24, 2
    %s26 = scalar_select %p25, 0, %s24
    %s27 = sadd.s32 1, %s18
    %s28 = scalar_select %p25, %s27, %s18
    %p29 = scmp.ge.s32.totalorder %s28, 2
    %s30 = scalar_select %p29, 0, %s28
    %s31 = ssub.s32 %s18, %s30
    %s32 = ssub.s32 %s19, %s26
    %s33 = sor.u32 %s31, %s32
    %p34 = scmp.eq.s32.totalorder %s33, 0
    %s36 = sadd.s32 %s35, 1
    %s37 = scalar_select %p34, %s35, %s36
    %p40 = pneg %p34
    %p41 = scmp.eq.s32.totalorder %s11, 3
    %p42 = por %p40, %p41
    %p43 = scmp.ne.s32.totalorder %s35, %s38
    %p44 = scmp.eq.s32.totalorder %s11, 0
    %p45 = por %p43, %p44
    %p46 = scmp.ne.s32.totalorder %s35, %s38
    %p47 = scmp.eq.s32.totalorder %s16, 3
    %p48 = por %p46, %p47
    %p49 = scmp.ne.s32.totalorder %s38, %s39
    %p50 = scmp.eq.s32.totalorder %s16, 0
    %p51 = por %p49, %p50
    %p52 = scmp.ne.s32.totalorder %s38, %s39
    %p53 = scmp.eq.s32.totalorder %s17, 3
    %p54 = por %p52, %p53
    %p56 = scmp.ne.s32.totalorder %s39, %s55
    %p57 = scmp.eq.s32.totalorder %s17, 0
    %p58 = por %p56, %p57
    %s60 = sadd.s32 %s59, 1
    %p63 = scmp.eq.s32.totalorder %s11, 3
    %p64 = scmp.ne.s32.totalorder %s59, %s61
    %p65 = scmp.eq.s32.totalorder %s11, 0
    %p66 = por %p64, %p65
    %p67 = scmp.ne.s32.totalorder %s59, %s61
    %p68 = scmp.eq.s32.totalorder %s16, 3
    %p69 = por %p67, %p68
    %p70 = scmp.ne.s32.totalorder %s61, %s62
    %p71 = scmp.eq.s32.totalorder %s16, 0
    %p72 = por %p70, %p71
    %p73 = scmp.ne.s32.totalorder %s61, %s62
    %p74 = scmp.eq.s32.totalorder %s17, 3
    %p75 = por %p73, %p74
    %p77 = scmp.ne.s32.totalorder %s62, %s76
    %p78 = scmp.eq.s32.totalorder %s17, 0
    %p79 = por %p77, %p78
    %s81 = sadd.s32 %s80, 1
    %p84 = scmp.eq.s32.totalorder %s11, 3
    %p85 = scmp.ne.s32.totalorder %s80, %s82
    %p86 = scmp.eq.s32.totalorder %s11, 0
    %p87 = por %p85, %p86
    %p88 = scmp.ne.s32.totalorder %s80, %s82
    %p89 = scmp.eq.s32.totalorder %s16, 3
    %p90 = por %p88, %p89
    %p91 = scmp.ne.s32.totalorder %s82, %s83
    %p92 = scmp.eq.s32.totalorder %s16, 0
    %p93 = por %p91, %p92
    %p94 = scmp.ne.s32.totalorder %s82, %s83
    %p95 = scmp.eq.s32.totalorder %s17, 3
    %p96 = por %p94, %p95
    %p98 = scmp.ne.s32.totalorder %s83, %s97
    %p99 = scmp.eq.s32.totalorder %s17, 0
    %p100 = por %p98, %p99
    %s101 = ssub.s32 %s18, %s30
    %s102 = ssub.s32 %s19, %s26
    %s103 = sor.u32 %s101, %s102
    %p104 = scmp.eq.s32.totalorder %s103, 0
    %s106 = sadd.s32 %s105, 1
    %s107 = scalar_select %p104, %s105, %s106
    %p110 = pneg %p104
    %p111 = scmp.eq.s32.totalorder %s11, 3
    %p112 = por %p110, %p111
    %p113 = scmp.ne.s32.totalorder %s105, %s108
    %p114 = scmp.eq.s32.totalorder %s11, 0
    %p115 = por %p113, %p114
    %p116 = scmp.ne.s32.totalorder %s105, %s108
    %p117 = scmp.eq.s32.totalorder %s16, 3
    %p118 = por %p116, %p117
    %p119 = scmp.ne.s32.totalorder %s108, %s109
    %p120 = scmp.eq.s32.totalorder %s16, 0
    %p121 = por %p119, %p120
    %p122 = scmp.ne.s32.totalorder %s108, %s109
    %p123 = scmp.eq.s32.totalorder %s17, 3
    %p124 = por %p122, %p123
    %p126 = scmp.ne.s32.totalorder %s109, %s125
    %p127 = scmp.eq.s32.totalorder %s17, 0
    %p128 = por %p126, %p127
    %s129 = ssub.s32 %s18, %s30
    %p130 = scmp.eq.s32.totalorder %s129, 0
    %s132 = sadd.s32 %s131, 1
    %s133 = scalar_select %p130, %s131, %s132
    %p136 = pneg %p130
    %p137 = scmp.eq.s32.totalorder %s11, 3
    %p138 = por %p136, %p137
    %p139 = scmp.ne.s32.totalorder %s131, %s134
    %p140 = scmp.eq.s32.totalorder %s11, 0
    %p141 = por %p139, %p140
    %p142 = scmp.ne.s32.totalorder %s131, %s134
    %p143 = scmp.eq.s32.totalorder %s16, 3
    %p144 = por %p142, %p143
    %p145 = scmp.ne.s32.totalorder %s134, %s135
    %p146 = scmp.eq.s32.totalorder %s16, 0
    %p147 = por %p145, %p146
    %p148 = scmp.ne.s32.totalorder %s134, %s135
    %p149 = scmp.eq.s32.totalorder %s17, 3
    %p150 = por %p148, %p149
    %p152 = scmp.ne.s32.totalorder %s135, %s151
    %p153 = scmp.eq.s32.totalorder %s17, 0
    %p154 = por %p152, %p153
    %p155 = scmp.le.s32.totalorder 1, %s11
    %p156 = scmp.lt.s32.totalorder %s11, 5
    %p157 = pnand %p155, %p156
    %p158 = pneg %p157
    // Predicated region
    $region9: #{resnet_block.3} parent=5 // pred_check
      _
    $region10: #{resnet_block.3} parent=5 // pred_check_branch
      %160 = sbr.rel (%p157) target = $region12
    $region11: #{resnet_block.3} parent=5 // pred_region
      %s161 = ssub.s32 %s11, 1
      // Predicated region
      $region13: #{resnet_block.3} parent=11 // pred_check
        %p162 = pneg %p72
      $region14: #{resnet_block.3} parent=11 // pred_check_branch
        %164 = sbr.rel (%p162) target = $region16
      $region15: #{resnet_block.3} parent=11 // pred_region
        _
      $region16: #{resnet_block.3} parent=11 // pred_fallthru
        _
      // Predicated region
      $region17: #{resnet_block.3} parent=11 // pred_check
        %p165 = pneg %p93
      $region18: #{resnet_block.3} parent=11 // pred_check_branch
        %167 = sbr.rel (%p165) target = $region20
      $region19: #{resnet_block.3} parent=11 // pred_region
        _
      $region20: #{resnet_block.3} parent=11 // pred_fallthru
        _
    $region12: #{resnet_block.3} parent=5 // pred_fallthru
      _
    %p168 = scmp.lt.s32.totalorder %s11, 4
    // Predicated region
    $region21: #{resnet_block.3} parent=5 // pred_check
      %p169 = pneg %p168
    $region22: #{resnet_block.3} parent=5 // pred_check_branch
      %171 = sbr.rel (%p169) target = $region24
    $region23: #{resnet_block.3} parent=5 // pred_region
      // Predicated region
      $region25: #{resnet_block.3} parent=23 // pred_check
        %p172 = pneg %p45
      $region26: #{resnet_block.3} parent=23 // pred_check_branch
        %174 = sbr.rel (%p172) target = $region28
      $region27: #{resnet_block.3} parent=23 // pred_region
        %p175 = scmp.lt.s32.totalorder %s18, 1
        %s176 = scalar_select %p175, %s18, 1
        %p177 = scmp.lt.s32.totalorder %s19, 1
        %s178 = scalar_select %p177, %s19, 1
        %s179 = smul.addr %s178, 30
        %s180 = smul.addr %s176, 60
        %s181 = sadd.s32 %s179, %s180
        %s182 = smul.addr %s181, 8
        %s183 = scalar_lea.vmem %s0, %s182
      $region28: #{resnet_block.3} parent=23 // pred_fallthru
        _
    $region24: #{resnet_block.3} parent=5 // pred_fallthru
      _
    %p184 = scmp.le.s32.totalorder 1, %s11
    %p185 = scmp.lt.s32.totalorder %s11, 5
    %p186 = pnand %p184, %p185
    %p187 = pneg %p186
    // Predicated region
    $region29: #{resnet_block.3} parent=5 // pred_check
      _
    $region30: #{resnet_block.3} parent=5 // pred_check_branch
      %189 = sbr.rel (%p186) target = $region32
    $region31: #{resnet_block.3} parent=5 // pred_region
      %s190 = ssub.s32 %s11, 1
      %p191 = scmp.lt.s32.totalorder %s20, 1
      %s192 = scalar_select %p191, %s20, 1
      %p193 = scmp.lt.s32.totalorder %s21, 1
      %s194 = scalar_select %p193, %s21, 1
      %s195 = smul.addr %s194, 30
      %s196 = smul.addr %s192, 60
      %s197 = sadd.s32 %s195, %s196
      %s198 = smul.addr %s197, 8
      %s199 = scalar_lea.vmem %s0, %s198
      %p200 = pneg %p51
      %p201 = pneg %p48
      %p202 = pneg %p72
      %p203 = pneg %p69
      %p204 = pneg %p93
      %p205 = pneg %p90
      %p206 = pneg %p121
      %p207 = pneg %p118
      %s208 = smul.u32 8, %s21
      %p209 = scmp.lt.s32.totalorder %s20, 1
      %s210 = scalar_select %p209, %s20, 1
      %p211 = scmp.lt.s32.totalorder %s208, 15
      %s212 = scalar_select %p211, %s208, 15
      %s213 = smul.addr %s212, 2
      %s214 = smul.addr %s210, 32
      %s215 = sadd.s32 %s213, %s214
      %s216 = smul.addr %s215, 8
      %s217 = scalar_lea.vmem %s3, %s216
      %p218 = pneg %p147
      %p219 = pneg %p144
      %p220 = scmp.lt.s32.totalorder %s20, 1
      %s221 = scalar_select %p220, %s20, 1
      %s222 = smul.addr %s221, 2
      %s223 = scalar_lea.vmem %s4, %s222
      %p224 = scmp.lt.s32.totalorder %s20, 1
      %s225 = scalar_select %p224, %s20, 1
      %p226 = scmp.lt.s32.totalorder %s21, 1
      %s227 = scalar_select %p226, %s21, 1
      %s228 = smul.addr %s227, 30
      %s229 = smul.addr %s225, 60
      %s230 = sadd.s32 %s228, %s229
      %s231 = smul.addr %s230, 8
      %s232 = scalar_lea.vmem %s0, %s231
      %s233 = smul.u32 8, %s21
      %p234 = scmp.lt.s32.totalorder %s20, 1
      %s235 = scalar_select %p234, %s20, 1
      %p236 = scmp.lt.s32.totalorder %s233, 15
      %s237 = scalar_select %p236, %s233, 15
      %s238 = smul.addr %s237, 2
      %s239 = smul.addr %s235, 32
      %s240 = sadd.s32 %s238, %s239
      %s241 = smul.addr %s240, 8
      %s242 = scalar_lea.vmem %s3, %s241
      %s243 = smul.u32 8, %s21
      %p244 = scmp.lt.s32.totalorder %s20, 1
      %s245 = scalar_select %p244, %s20, 1
      %s246 = smul.addr %s245, 2
      %s247 = scalar_lea.vmem %s4, %s246
      %v248 = vld [vmem:[%s232] sm:$0xff]
      %v249 = vld [vmem:[%s232 + $0x8] sm:$0xff]
      %v250 = vld [vmem:[%s232 + $0x10] sm:$0x3]
      %v251 = vld [vmem:[%s232 + $0x18] sm:$0xff]
      %v252 = vld [vmem:[%s232 + $0x20] sm:$0xff]
      %v253 = vld [vmem:[%s232 + $0x28] sm:$0x3]
      %v254 = vld [vmem:[%s232 + $0x30] sm:$0xff]
      %v255 = vld [vmem:[%s232 + $0x38] sm:$0xff]
      %v256 = vld [vmem:[%s232 + $0x40] sm:$0x3]
      %v257 = vld [vmem:[%s232 + $0x48] sm:$0xff]
      %v258 = vld [vmem:[%s232 + $0x50] sm:$0xff]
      %v259 = vld [vmem:[%s232 + $0x58] sm:$0x3]
      %v260 = vld [vmem:[%s232 + $0x60] sm:$0xff]
      %v261 = vld [vmem:[%s232 + $0x68] sm:$0xff]
      %v262 = vld [vmem:[%s232 + $0x70] sm:$0x3]
      %v263 = vld [vmem:[%s232 + $0x78] sm:$0xff]
      %v264 = vld [vmem:[%s232 + $0x80] sm:$0xff]
      %v265 = vld [vmem:[%s232 + $0x88] sm:$0x3]
      %v266 = vld [vmem:[%s232 + $0x90] sm:$0xff]
      %v267 = vld [vmem:[%s232 + $0x98] sm:$0xff]
      %v268 = vld [vmem:[%s232 + $0xa0] sm:$0x3]
      %v269 = vld [vmem:[%s232 + $0xa8] sm:$0xff]
      %v270 = vld [vmem:[%s232 + $0xb0] sm:$0xff]
      %v271 = vld [vmem:[%s232 + $0xb8] sm:$0x3]
      %v272 = vld [vmem:[%s232 + $0xc0] sm:$0xff]
      %v273 = vld [vmem:[%s232 + $0xc8] sm:$0xff]
      %v274 = vld [vmem:[%s232 + $0xd0] sm:$0x3]
      %v275 = vld [vmem:[%s232 + $0xd8] sm:$0xff]
      %v276 = vld [vmem:[%s232 + $0xe0] sm:$0xff]
      %v277 = vld [vmem:[%s232 + $0xe8] sm:$0x3]
      %vm302 = vcmask 1046528
      %v303 = vrot.slane %v248, 1
      %v304 = vrot.slane %v249, 1
      %v305 = vsel %vm302, %v303, %v304
      %v306 = vrot.slane %v250, 1
      %v307 = vsel %vm302, %v304, %v306
      %v308 = vrot.slane %v251, 1
      %v309 = vrot.slane %v252, 1
      %v310 = vsel %vm302, %v308, %v309
      %v311 = vrot.slane %v253, 1
      %v312 = vsel %vm302, %v309, %v311
      %v313 = vrot.slane %v254, 1
      %v314 = vrot.slane %v255, 1
      %v315 = vsel %vm302, %v313, %v314
      %v316 = vrot.slane %v256, 1
      %v317 = vsel %vm302, %v314, %v316
      %v318 = vrot.slane %v257, 1
      %v319 = vrot.slane %v258, 1
      %v320 = vsel %vm302, %v318, %v319
      %v321 = vrot.slane %v259, 1
      %v322 = vsel %vm302, %v319, %v321
      %v323 = vrot.slane %v260, 1
      %v324 = vrot.slane %v261, 1
      %v325 = vsel %vm302, %v323, %v324
      %v326 = vrot.slane %v262, 1
      %v327 = vsel %vm302, %v324, %v326
      %v328 = vrot.slane %v263, 1
      %v329 = vrot.slane %v264, 1
      %v330 = vsel %vm302, %v328, %v329
      %v331 = vrot.slane %v265, 1
      %v332 = vsel %vm302, %v329, %v331
      %v333 = vrot.slane %v266, 1
      %v334 = vrot.slane %v267, 1
      %v335 = vsel %vm302, %v333, %v334
      %v336 = vrot.slane %v268, 1
      %v337 = vsel %vm302, %v334, %v336
      %v338 = vrot.slane %v269, 1
      %v339 = vrot.slane %v270, 1
      %v340 = vsel %vm302, %v338, %v339
      %v341 = vrot.slane %v271, 1
      %v342 = vsel %vm302, %v339, %v341
      %343 = vrot.lane.b32.xlu0 %v305, 4
      %v344 = vpop.permute.xlu0 %343
      %345 = vrot.lane.b32.xlu0 %v307, 4
      %v346 = vpop.permute.xlu0 %345
      %347 = vrot.lane.b32.xlu0 %v310, 4
      %v348 = vpop.permute.xlu0 %347
      %349 = vrot.lane.b32.xlu0 %v312, 4
      %v350 = vpop.permute.xlu0 %349
      %351 = vrot.lane.b32.xlu0 %v315, 4
      %v352 = vpop.permute.xlu0 %351
      %353 = vrot.lane.b32.xlu0 %v317, 4
      %v354 = vpop.permute.xlu0 %353
      %355 = vrot.lane.b32.xlu0 %v320, 4
      %v356 = vpop.permute.xlu0 %355
      %357 = vrot.lane.b32.xlu0 %v322, 4
      %v358 = vpop.permute.xlu0 %357
      %359 = vrot.lane.b32.xlu0 %v325, 4
      %v360 = vpop.permute.xlu0 %359
      %361 = vrot.lane.b32.xlu0 %v327, 4
      %v362 = vpop.permute.xlu0 %361
      %363 = vrot.lane.b32.xlu0 %v330, 4
      %v364 = vpop.permute.xlu0 %363
      %365 = vrot.lane.b32.xlu0 %v332, 4
      %v366 = vpop.permute.xlu0 %365
      %367 = vrot.lane.b32.xlu0 %v335, 4
      %v368 = vpop.permute.xlu0 %367
      %369 = vrot.lane.b32.xlu0 %v337, 4
      %v370 = vpop.permute.xlu0 %369
      %371 = vrot.lane.b32.xlu0 %v340, 4
      %v372 = vpop.permute.xlu0 %371
      %373 = vrot.lane.b32.xlu0 %v342, 4
      %v374 = vpop.permute.xlu0 %373
      %vm391 = vcmask 1045504
      %v392 = vrot.slane %v248, 2
      %v393 = vrot.slane %v249, 2
      %v394 = vsel %vm391, %v392, %v393
      %v395 = vrot.slane %v250, 2
      %v396 = vsel %vm391, %v393, %v395
      %v397 = vrot.slane %v251, 2
      %v398 = vrot.slane %v252, 2
      %v399 = vsel %vm391, %v397, %v398
      %v400 = vrot.slane %v253, 2
      %v401 = vsel %vm391, %v398, %v400
      %v402 = vrot.slane %v254, 2
      %v403 = vrot.slane %v255, 2
      %v404 = vsel %vm391, %v402, %v403
      %v405 = vrot.slane %v256, 2
      %v406 = vsel %vm391, %v403, %v405
      %v407 = vrot.slane %v257, 2
      %v408 = vrot.slane %v258, 2
      %v409 = vsel %vm391, %v407, %v408
      %v410 = vrot.slane %v259, 2
      %v411 = vsel %vm391, %v408, %v410
      %v412 = vrot.slane %v260, 2
      %v413 = vrot.slane %v261, 2
      %v414 = vsel %vm391, %v412, %v413
      %v415 = vrot.slane %v262, 2
      %v416 = vsel %vm391, %v413, %v415
      %v417 = vrot.slane %v263, 2
      %v418 = vrot.slane %v264, 2
      %v419 = vsel %vm391, %v417, %v418
      %v420 = vrot.slane %v265, 2
      %v421 = vsel %vm391, %v418, %v420
      %v422 = vrot.slane %v266, 2
      %v423 = vrot.slane %v267, 2
      %v424 = vsel %vm391, %v422, %v423
      %v425 = vrot.slane %v268, 2
      %v426 = vsel %vm391, %v423, %v425
      %v427 = vrot.slane %v269, 2
      %v428 = vrot.slane %v270, 2
      %v429 = vsel %vm391, %v427, %v428
      %v430 = vrot.slane %v271, 2
      %v431 = vsel %vm391, %v428, %v430
      %432 = vrot.lane.b32.xlu0 %v394, 8
      %v433 = vpop.permute.xlu0 %432
      %434 = vrot.lane.b32.xlu0 %v396, 8
      %v435 = vpop.permute.xlu0 %434
      %436 = vrot.lane.b32.xlu0 %v399, 8
      %v437 = vpop.permute.xlu0 %436
      %438 = vrot.lane.b32.xlu0 %v401, 8
      %v439 = vpop.permute.xlu0 %438
      %440 = vrot.lane.b32.xlu0 %v404, 8
      %v441 = vpop.permute.xlu0 %440
      %442 = vrot.lane.b32.xlu0 %v406, 8
      %v443 = vpop.permute.xlu0 %442
      %444 = vrot.lane.b32.xlu0 %v409, 8
      %v445 = vpop.permute.xlu0 %444
      %446 = vrot.lane.b32.xlu0 %v411, 8
      %v447 = vpop.permute.xlu0 %446
      %448 = vrot.lane.b32.xlu0 %v414, 8
      %v449 = vpop.permute.xlu0 %448
      %450 = vrot.lane.b32.xlu0 %v416, 8
      %v451 = vpop.permute.xlu0 %450
      %452 = vrot.lane.b32.xlu0 %v419, 8
      %v453 = vpop.permute.xlu0 %452
      %454 = vrot.lane.b32.xlu0 %v421, 8
      %v455 = vpop.permute.xlu0 %454
      %456 = vrot.lane.b32.xlu0 %v424, 8
      %v457 = vpop.permute.xlu0 %456
      %458 = vrot.lane.b32.xlu0 %v426, 8
      %v459 = vpop.permute.xlu0 %458
      %460 = vrot.lane.b32.xlu0 %v429, 8
      %v461 = vpop.permute.xlu0 %460
      %462 = vrot.lane.b32.xlu0 %v431, 8
      %v463 = vpop.permute.xlu0 %462
      %482 = vrot.lane.b32.xlu0 %v251, 12
      %v483 = vpop.permute.xlu0 %482
      %484 = vrot.lane.b32.xlu0 %v252, 12
      %v485 = vpop.permute.xlu0 %484
      %486 = vrot.lane.b32.xlu0 %v254, 12
      %v487 = vpop.permute.xlu0 %486
      %488 = vrot.lane.b32.xlu0 %v255, 12
      %v489 = vpop.permute.xlu0 %488
      %490 = vrot.lane.b32.xlu0 %v257, 12
      %v491 = vpop.permute.xlu0 %490
      %492 = vrot.lane.b32.xlu0 %v258, 12
      %v493 = vpop.permute.xlu0 %492
      %494 = vrot.lane.b32.xlu0 %v260, 12
      %v495 = vpop.permute.xlu0 %494
      %496 = vrot.lane.b32.xlu0 %v261, 12
      %v497 = vpop.permute.xlu0 %496
      %498 = vrot.lane.b32.xlu0 %v263, 12
      %v499 = vpop.permute.xlu0 %498
      %500 = vrot.lane.b32.xlu0 %v264, 12
      %v501 = vpop.permute.xlu0 %500
      %502 = vrot.lane.b32.xlu0 %v266, 12
      %v503 = vpop.permute.xlu0 %502
      %504 = vrot.lane.b32.xlu0 %v267, 12
      %v505 = vpop.permute.xlu0 %504
      %506 = vrot.lane.b32.xlu0 %v269, 12
      %v507 = vpop.permute.xlu0 %506
      %508 = vrot.lane.b32.xlu0 %v270, 12
      %v509 = vpop.permute.xlu0 %508
      %510 = vrot.lane.b32.xlu0 %v272, 12
      %v511 = vpop.permute.xlu0 %510
      %512 = vrot.lane.b32.xlu0 %v273, 12
      %v513 = vpop.permute.xlu0 %512
      %v531 = vrot.slane %v272, 1
      %v532 = vrot.slane %v273, 1
      %v533 = vsel %vm302, %v531, %v532
      %v534 = vrot.slane %v274, 1
      %v535 = vsel %vm302, %v532, %v534
      %536 = vrot.lane.b32.xlu0 %v310, 16
      %v537 = vpop.permute.xlu0 %536
      %538 = vrot.lane.b32.xlu0 %v312, 16
      %v539 = vpop.permute.xlu0 %538
      %540 = vrot.lane.b32.xlu0 %v315, 16
      %v541 = vpop.permute.xlu0 %540
      %542 = vrot.lane.b32.xlu0 %v317, 16
      %v543 = vpop.permute.xlu0 %542
      %544 = vrot.lane.b32.xlu0 %v320, 16
      %v545 = vpop.permute.xlu0 %544
      %546 = vrot.lane.b32.xlu0 %v322, 16
      %v547 = vpop.permute.xlu0 %546
      %548 = vrot.lane.b32.xlu0 %v325, 16
      %v549 = vpop.permute.xlu0 %548
      %550 = vrot.lane.b32.xlu0 %v327, 16
      %v551 = vpop.permute.xlu0 %550
      %552 = vrot.lane.b32.xlu0 %v330, 16
      %v553 = vpop.permute.xlu0 %552
      %554 = vrot.lane.b32.xlu0 %v332, 16
      %v555 = vpop.permute.xlu0 %554
      %556 = vrot.lane.b32.xlu0 %v335, 16
      %v557 = vpop.permute.xlu0 %556
      %558 = vrot.lane.b32.xlu0 %v337, 16
      %v559 = vpop.permute.xlu0 %558
      %560 = vrot.lane.b32.xlu0 %v340, 16
      %v561 = vpop.permute.xlu0 %560
      %562 = vrot.lane.b32.xlu0 %v342, 16
      %v563 = vpop.permute.xlu0 %562
      %564 = vrot.lane.b32.xlu0 %v533, 16
      %v565 = vpop.permute.xlu0 %564
      %566 = vrot.lane.b32.xlu0 %v535, 16
      %v567 = vpop.permute.xlu0 %566
      %v584 = vrot.slane %v272, 2
      %v585 = vrot.slane %v273, 2
      %v586 = vsel %vm391, %v584, %v585
      %v587 = vrot.slane %v274, 2
      %v588 = vsel %vm391, %v585, %v587
      %589 = vrot.lane.b32.xlu0 %v399, 20
      %v590 = vpop.permute.xlu0 %589
      %591 = vrot.lane.b32.xlu0 %v401, 20
      %v592 = vpop.permute.xlu0 %591
      %593 = vrot.lane.b32.xlu0 %v404, 20
      %v594 = vpop.permute.xlu0 %593
      %595 = vrot.lane.b32.xlu0 %v406, 20
      %v596 = vpop.permute.xlu0 %595
      %597 = vrot.lane.b32.xlu0 %v409, 20
      %v598 = vpop.permute.xlu0 %597
      %599 = vrot.lane.b32.xlu0 %v411, 20
      %v600 = vpop.permute.xlu0 %599
      %601 = vrot.lane.b32.xlu0 %v414, 20
      %v602 = vpop.permute.xlu0 %601
      %603 = vrot.lane.b32.xlu0 %v416, 20
      %v604 = vpop.permute.xlu0 %603
      %605 = vrot.lane.b32.xlu0 %v419, 20
      %v606 = vpop.permute.xlu0 %605
      %607 = vrot.lane.b32.xlu0 %v421, 20
      %v608 = vpop.permute.xlu0 %607
      %609 = vrot.lane.b32.xlu0 %v424, 20
      %v610 = vpop.permute.xlu0 %609
      %611 = vrot.lane.b32.xlu0 %v426, 20
      %v612 = vpop.permute.xlu0 %611
      %613 = vrot.lane.b32.xlu0 %v429, 20
      %v614 = vpop.permute.xlu0 %613
      %615 = vrot.lane.b32.xlu0 %v431, 20
      %v616 = vpop.permute.xlu0 %615
      %617 = vrot.lane.b32.xlu0 %v586, 20
      %v618 = vpop.permute.xlu0 %617
      %619 = vrot.lane.b32.xlu0 %v588, 20
      %v620 = vpop.permute.xlu0 %619
      %639 = vrot.lane.b32.xlu0 %v254, 24
      %v640 = vpop.permute.xlu0 %639
      %641 = vrot.lane.b32.xlu0 %v255, 24
      %v642 = vpop.permute.xlu0 %641
      %643 = vrot.lane.b32.xlu0 %v257, 24
      %v644 = vpop.permute.xlu0 %643
      %645 = vrot.lane.b32.xlu0 %v258, 24
      %v646 = vpop.permute.xlu0 %645
      %647 = vrot.lane.b32.xlu0 %v260, 24
      %v648 = vpop.permute.xlu0 %647
      %649 = vrot.lane.b32.xlu0 %v261, 24
      %v650 = vpop.permute.xlu0 %649
      %651 = vrot.lane.b32.xlu0 %v263, 24
      %v652 = vpop.permute.xlu0 %651
      %653 = vrot.lane.b32.xlu0 %v264, 24
      %v654 = vpop.permute.xlu0 %653
      %655 = vrot.lane.b32.xlu0 %v266, 24
      %v656 = vpop.permute.xlu0 %655
      %657 = vrot.lane.b32.xlu0 %v267, 24
      %v658 = vpop.permute.xlu0 %657
      %659 = vrot.lane.b32.xlu0 %v269, 24
      %v660 = vpop.permute.xlu0 %659
      %661 = vrot.lane.b32.xlu0 %v270, 24
      %v662 = vpop.permute.xlu0 %661
      %663 = vrot.lane.b32.xlu0 %v272, 24
      %v664 = vpop.permute.xlu0 %663
      %665 = vrot.lane.b32.xlu0 %v273, 24
      %v666 = vpop.permute.xlu0 %665
      %667 = vrot.lane.b32.xlu0 %v275, 24
      %v668 = vpop.permute.xlu0 %667
      %669 = vrot.lane.b32.xlu0 %v276, 24
      %v670 = vpop.permute.xlu0 %669
      %v688 = vrot.slane %v275, 1
      %v689 = vrot.slane %v276, 1
      %v690 = vsel %vm302, %v688, %v689
      %v691 = vrot.slane %v277, 1
      %v692 = vsel %vm302, %v689, %v691
      %693 = vrot.lane.b32.xlu0 %v315, 28
      %v694 = vpop.permute.xlu0 %693
      %695 = vrot.lane.b32.xlu0 %v317, 28
      %v696 = vpop.permute.xlu0 %695
      %697 = vrot.lane.b32.xlu0 %v320, 28
      %v698 = vpop.permute.xlu0 %697
      %699 = vrot.lane.b32.xlu0 %v322, 28
      %v700 = vpop.permute.xlu0 %699
      %701 = vrot.lane.b32.xlu0 %v325, 28
      %v702 = vpop.permute.xlu0 %701
      %703 = vrot.lane.b32.xlu0 %v327, 28
      %v704 = vpop.permute.xlu0 %703
      %705 = vrot.lane.b32.xlu0 %v330, 28
      %v706 = vpop.permute.xlu0 %705
      %707 = vrot.lane.b32.xlu0 %v332, 28
      %v708 = vpop.permute.xlu0 %707
      %709 = vrot.lane.b32.xlu0 %v335, 28
      %v710 = vpop.permute.xlu0 %709
      %711 = vrot.lane.b32.xlu0 %v337, 28
      %v712 = vpop.permute.xlu0 %711
      %713 = vrot.lane.b32.xlu0 %v340, 28
      %v714 = vpop.permute.xlu0 %713
      %715 = vrot.lane.b32.xlu0 %v342, 28
      %v716 = vpop.permute.xlu0 %715
      %717 = vrot.lane.b32.xlu0 %v533, 28
      %v718 = vpop.permute.xlu0 %717
      %719 = vrot.lane.b32.xlu0 %v535, 28
      %v720 = vpop.permute.xlu0 %719
      %721 = vrot.lane.b32.xlu0 %v690, 28
      %v722 = vpop.permute.xlu0 %721
      %723 = vrot.lane.b32.xlu0 %v692, 28
      %v724 = vpop.permute.xlu0 %723
      %v741 = vrot.slane %v275, 2
      %v742 = vrot.slane %v276, 2
      %v743 = vsel %vm391, %v741, %v742
      %v744 = vrot.slane %v277, 2
      %v745 = vsel %vm391, %v742, %v744
      %746 = vrot.lane.b32.xlu0 %v404, 32
      %v747 = vpop.permute.xlu0 %746
      %748 = vrot.lane.b32.xlu0 %v406, 32
      %v749 = vpop.permute.xlu0 %748
      %750 = vrot.lane.b32.xlu0 %v409, 32
      %v751 = vpop.permute.xlu0 %750
      %752 = vrot.lane.b32.xlu0 %v411, 32
      %v753 = vpop.permute.xlu0 %752
      %754 = vrot.lane.b32.xlu0 %v414, 32
      %v755 = vpop.permute.xlu0 %754
      %756 = vrot.lane.b32.xlu0 %v416, 32
      %v757 = vpop.permute.xlu0 %756
      %758 = vrot.lane.b32.xlu0 %v419, 32
      %v759 = vpop.permute.xlu0 %758
      %760 = vrot.lane.b32.xlu0 %v421, 32
      %v761 = vpop.permute.xlu0 %760
      %762 = vrot.lane.b32.xlu0 %v424, 32
      %v763 = vpop.permute.xlu0 %762
      %764 = vrot.lane.b32.xlu0 %v426, 32
      %v765 = vpop.permute.xlu0 %764
      %766 = vrot.lane.b32.xlu0 %v429, 32
      %v767 = vpop.permute.xlu0 %766
      %768 = vrot.lane.b32.xlu0 %v431, 32
      %v769 = vpop.permute.xlu0 %768
      %770 = vrot.lane.b32.xlu0 %v586, 32
      %v771 = vpop.permute.xlu0 %770
      %772 = vrot.lane.b32.xlu0 %v588, 32
      %v773 = vpop.permute.xlu0 %772
      %774 = vrot.lane.b32.xlu0 %v743, 32
      %v775 = vpop.permute.xlu0 %774
      %776 = vrot.lane.b32.xlu0 %v745, 32
      %v777 = vpop.permute.xlu0 %776
      %vm794 = vcmask 31744
      %v795 = vsel %vm794, %v248, %v344
      %v796 = vsel %vm794, %v249, %v346
      %v797 = vsel %vm794, %v251, %v348
      %v798 = vsel %vm794, %v252, %v350
      %v799 = vsel %vm794, %v254, %v352
      %v800 = vsel %vm794, %v255, %v354
      %v801 = vsel %vm794, %v257, %v356
      %v802 = vsel %vm794, %v258, %v358
      %v803 = vsel %vm794, %v260, %v360
      %v804 = vsel %vm794, %v261, %v362
      %v805 = vsel %vm794, %v263, %v364
      %v806 = vsel %vm794, %v264, %v366
      %v807 = vsel %vm794, %v266, %v368
      %v808 = vsel %vm794, %v267, %v370
      %v809 = vsel %vm794, %v269, %v372
      %v810 = vsel %vm794, %v270, %v374
      %vm811 = vcmask 64512
      %v812 = vsel %vm811, %v795, %v433
      %v813 = vsel %vm811, %v796, %v435
      %v814 = vsel %vm811, %v797, %v437
      %v815 = vsel %vm811, %v798, %v439
      %v816 = vsel %vm811, %v799, %v441
      %v817 = vsel %vm811, %v800, %v443
      %v818 = vsel %vm811, %v801, %v445
      %v819 = vsel %vm811, %v802, %v447
      %v820 = vsel %vm811, %v803, %v449
      %v821 = vsel %vm811, %v804, %v451
      %v822 = vsel %vm811, %v805, %v453
      %v823 = vsel %vm811, %v806, %v455
      %v824 = vsel %vm811, %v807, %v457
      %v825 = vsel %vm811, %v808, %v459
      %v826 = vsel %vm811, %v809, %v461
      %v827 = vsel %vm811, %v810, %v463
      %vm828 = vcmask 97280
      %v829 = vsel %vm828, %v812, %v483
      %v830 = vsel %vm828, %v813, %v485
      %v831 = vsel %vm828, %v814, %v487
      %v832 = vsel %vm828, %v815, %v489
      %v833 = vsel %vm828, %v816, %v491
      %v834 = vsel %vm828, %v817, %v493
      %v835 = vsel %vm828, %v818, %v495
      %v836 = vsel %vm828, %v819, %v497
      %v837 = vsel %vm828, %v820, %v499
      %v838 = vsel %vm828, %v821, %v501
      %v839 = vsel %vm828, %v822, %v503
      %v840 = vsel %vm828, %v823, %v505
      %v841 = vsel %vm828, %v824, %v507
      %v842 = vsel %vm828, %v825, %v509
      %v843 = vsel %vm828, %v826, %v511
      %v844 = vsel %vm828, %v827, %v513
      %vm845 = vcmask 130048
      %v846 = vsel %vm845, %v829, %v537
      %v847 = vsel %vm845, %v830, %v539
      %v848 = vsel %vm845, %v831, %v541
      %v849 = vsel %vm845, %v832, %v543
      %v850 = vsel %vm845, %v833, %v545
      %v851 = vsel %vm845, %v834, %v547
      %v852 = vsel %vm845, %v835, %v549
      %v853 = vsel %vm845, %v836, %v551
      %v854 = vsel %vm845, %v837, %v553
      %v855 = vsel %vm845, %v838, %v555
      %v856 = vsel %vm845, %v839, %v557
      %v857 = vsel %vm845, %v840, %v559
      %v858 = vsel %vm845, %v841, %v561
      %v859 = vsel %vm845, %v842, %v563
      %v860 = vsel %vm845, %v843, %v565
      %v861 = vsel %vm845, %v844, %v567
      %vm862 = vcmask 162816
      %v863 = vsel %vm862, %v846, %v590
      %v864 = vsel %vm862, %v847, %v592
      %v865 = vsel %vm862, %v848, %v594
      %v866 = vsel %vm862, %v849, %v596
      %v867 = vsel %vm862, %v850, %v598
      %v868 = vsel %vm862, %v851, %v600
      %v869 = vsel %vm862, %v852, %v602
      %v870 = vsel %vm862, %v853, %v604
      %v871 = vsel %vm862, %v854, %v606
      %v872 = vsel %vm862, %v855, %v608
      %v873 = vsel %vm862, %v856, %v610
      %v874 = vsel %vm862, %v857, %v612
      %v875 = vsel %vm862, %v858, %v614
      %v876 = vsel %vm862, %v859, %v616
      %v877 = vsel %vm862, %v860, %v618
      %v878 = vsel %vm862, %v861, %v620
      %vm879 = vcmask 195584
      %v880 = vsel %vm879, %v863, %v640
      %v881 = vsel %vm879, %v864, %v642
      %v882 = vsel %vm879, %v865, %v644
      %v883 = vsel %vm879, %v866, %v646
      %v884 = vsel %vm879, %v867, %v648
      %v885 = vsel %vm879, %v868, %v650
      %v886 = vsel %vm879, %v869, %v652
      %v887 = vsel %vm879, %v870, %v654
      %v888 = vsel %vm879, %v871, %v656
      %v889 = vsel %vm879, %v872, %v658
      %v890 = vsel %vm879, %v873, %v660
      %v891 = vsel %vm879, %v874, %v662
      %v892 = vsel %vm879, %v875, %v664
      %v893 = vsel %vm879, %v876, %v666
      %v894 = vsel %vm879, %v877, %v668
      %v895 = vsel %vm879, %v878, %v670
      %vm896 = vcmask 228352
      %v897 = vsel %vm896, %v880, %v694
      %v898 = vsel %vm896, %v881, %v696
      %v899 = vsel %vm896, %v882, %v698
      %v900 = vsel %vm896, %v883, %v700
      %v901 = vsel %vm896, %v884, %v702
      %v902 = vsel %vm896, %v885, %v704
      %v903 = vsel %vm896, %v886, %v706
      %v904 = vsel %vm896, %v887, %v708
      %v905 = vsel %vm896, %v888, %v710
      %v906 = vsel %vm896, %v889, %v712
      %v907 = vsel %vm896, %v890, %v714
      %v908 = vsel %vm896, %v891, %v716
      %v909 = vsel %vm896, %v892, %v718
      %v910 = vsel %vm896, %v893, %v720
      %v911 = vsel %vm896, %v894, %v722
      %v912 = vsel %vm896, %v895, %v724
      %vm913 = vcmask 261120
      %v914 = vsel %vm913, %v897, %v747
      %v915 = vsel %vm913, %v898, %v749
      %v916 = vsel %vm913, %v899, %v751
      %v917 = vsel %vm913, %v900, %v753
      %v918 = vsel %vm913, %v901, %v755
      %v919 = vsel %vm913, %v902, %v757
      %v920 = vsel %vm913, %v903, %v759
      %v921 = vsel %vm913, %v904, %v761
      %v922 = vsel %vm913, %v905, %v763
      %v923 = vsel %vm913, %v906, %v765
      %v924 = vsel %vm913, %v907, %v767
      %v925 = vsel %vm913, %v908, %v769
      %v926 = vsel %vm913, %v909, %v771
      %v927 = vsel %vm913, %v910, %v773
      %v928 = vsel %vm913, %v911, %v775
      %v929 = vsel %vm913, %v912, %v777
      %v930 = vld [vmem:[%s1] sm:$0xff]
      %v931 = vld [vmem:[%s1 + $0x8] sm:$0xff]
      %v932 = vld [vmem:[%s1 + $0x10] sm:$0xff]
      %v933 = vld [vmem:[%s1 + $0x18] sm:$0xff]
      %v934 = vld [vmem:[%s1 + $0x20] sm:$0xf]
      %v935 = vld [vmem:[%s2] sm:$0x1]
      %v937 = vlaneseq
      %v938 = vshrl.u32 %v937, 7
      %v939 = vsub.s32 0, %v938
      %v940 = vrot.slane %v935, %v939
      %vm942 = vcmask 293888
      %v944 = vsel %vm942, %v914, 0
      %v947 = vsel %vm942, %v915, 0
      %v950 = vsel %vm942, %v916, 0
      %v953 = vsel %vm942, %v917, 0
      %v956 = vsel %vm942, %v918, 0
      %v959 = vsel %vm942, %v919, 0
      %v962 = vsel %vm942, %v920, 0
      %v965 = vsel %vm942, %v921, 0
      %v968 = vsel %vm942, %v922, 0
      %v971 = vsel %vm942, %v923, 0
      %v974 = vsel %vm942, %v924, 0
      %v977 = vsel %vm942, %v925, 0
      %v980 = vsel %vm942, %v926, 0
      %v983 = vsel %vm942, %v927, 0
      %v986 = vsel %vm942, %v928, 0
      %v989 = vsel %vm942, %v929, 0
      %vm991 = vcmask 1043456
      %v993 = vsel %vm991, %v934, 0
      %995 = vmatprep.subr.mxu0 0.0
      %996 = vmatpush1.msra.mxu0 %v930
      %997 = vmatprep.subr.mxu0 0.0
      %998 = vmatpush1.msra.mxu0 %v931
      %999 = vmatprep.subr.mxu0 0.0
      %1000 = vmatpush1.msra.mxu0 %v932
      %1001 = vmatprep.subr.mxu0 0.0
      %1002 = vmatpush1.msra.mxu0 %v933
      %1003 = vmatprep.subr.mxu0 0.0
      %1004 = vmatpush1.msra.mxu0 %v993
      %1005 = vmatprep.subr.mxu0 0.0
      %1006 = vmatpush1.msra.mxu0 0.0
      %1007 = vmatprep.subr.mxu0 0.0
      %1008 = vmatpush1.msra.mxu0 0.0
      %1009 = vmatprep.subr.mxu0 0.0
      %1010 = vmatpush1.msra.mxu0 0.0
      %1011 = vmatprep.subr.mxu0 0.0
      %1012 = vmatpush1.msra.mxu0 0.0
      %1013 = vmatprep.subr.mxu0 0.0
      %1014 = vmatpush1.msra.mxu0 0.0
      %1015 = vmatprep.subr.mxu0 0.0
      %1016 = vmatpush1.msra.mxu0 0.0
      %1017 = vmatprep.subr.mxu0 0.0
      %1018 = vmatpush1.msra.mxu0 0.0
      %1019 = vmatprep.subr.mxu0 0.0
      %1020 = vmatpush1.msra.mxu0 0.0
      %1021 = vmatprep.subr.mxu0 0.0
      %1022 = vmatpush1.msra.mxu0 0.0
      %1023 = vmatprep.subr.mxu0 0.0
      %1024 = vmatpush1.msra.mxu0 0.0
      %1025 = vmatprep.subr.mxu0 0.0
      %1026 = vmatpush1.msra.mxu0 0.0
      %1027 = vmatprep.subr.mxu0 0.0
      %1028 = vmatpush1.msra.mxu0 0.0
      %1029 = vmatprep.subr.mxu0 0.0
      %1030 = vmatpush1.msra.mxu0 0.0
      %1031 = vmatprep.subr.mxu0 0.0
      %1032 = vmatpush1.msra.mxu0 0.0
      %1033 = vmatprep.subr.mxu0 0.0
      %1034 = vmatpush1.msra.mxu0 0.0
      %1035 = vmatprep.subr.mxu0 0.0
      %1036 = vmatpush1.msra.mxu0 0.0
      %1037 = vmatprep.subr.mxu0 0.0
      %1038 = vmatpush1.msra.mxu0 0.0
      %1039 = vmatprep.subr.mxu0 0.0
      %1040 = vmatpush1.msra.mxu0 0.0
      %1041 = vmatprep.subr.mxu0 0.0
      %1042 = vmatpush1.msra.mxu0 0.0
      %1043 = vmatprep.subr.mxu0 0.0
      %1044 = vmatpush1.msra.mxu0 0.0
      %1045 = vmatprep.subr.mxu0 0.0
      %1046 = vmatpush1.msra.mxu0 0.0
      %1047 = vmatprep.subr.mxu0 0.0
      %1048 = vmatpush1.msra.mxu0 0.0
      %1049 = vmatprep.subr.mxu0 0.0
      %1050 = vmatpush1.msra.mxu0 0.0
      %1051 = vmatprep.subr.mxu0 0.0
      %1052 = vmatpush1.msra.mxu0 0.0
      %1053 = vmatprep.subr.mxu0 0.0
      %1054 = vmatpush1.msra.mxu0 0.0
      %1055 = vmatprep.subr.mxu0 0.0
      %1056 = vmatpush1.msra.mxu0 0.0
      %1057 = vmatprep.subr.mxu0 0.0
      %1058 = vmatpush1.msra.mxu0 0.0
      %1059 = vmatprep.mubr.f32.mxu0 0.0
      %1060 = vmatmul.mubr.f32.gmra.mrb[0].mxu0 %v944
      %v1061 = vpop.f32.mrb[0].mxu0
      %v1062 = vadd.f32 %v940, %v1061
      %v1063 = vpop.f32.mrb[0].mxu0
      %1064 = vmatprep.mubr.f32.mxu0 0.0
      %1065 = vmatmul.mubr.f32.gmra.mrb[0].mxu0 %v947
      %v1066 = vpop.f32.mrb[0].mxu0
      %v1067 = vadd.f32 %v940, %v1066
      %v1068 = vpop.f32.mrb[0].mxu0
      %1069 = vmatprep.mubr.f32.mxu0 0.0
      %1070 = vmatmul.mubr.f32.gmra.mrb[0].mxu0 %v950
      %v1071 = vpop.f32.mrb[0].mxu0
      %v1072 = vadd.f32 %v940, %v1071
      %v1073 = vpop.f32.mrb[0].mxu0
      %1074 = vmatprep.mubr.f32.mxu0 0.0
      %1075 = vmatmul.mubr.f32.gmra.mrb[0].mxu0 %v953
      %v1076 = vpop.f32.mrb[0].mxu0
      %v1077 = vadd.f32 %v940, %v1076
      %v1078 = vpop.f32.mrb[0].mxu0
      %1079 = vmatprep.mubr.f32.mxu0 0.0
      %1080 = vmatmul.mubr.f32.gmra.mrb[0].mxu0 %v956
      %v1081 = vpop.f32.mrb[0].mxu0
      %v1082 = vadd.f32 %v940, %v1081
      %v1083 = vpop.f32.mrb[0].mxu0
      %1084 = vmatprep.mubr.f32.mxu0 0.0
      %1085 = vmatmul.mubr.f32.gmra.mrb[0].mxu0 %v959
      %v1086 = vpop.f32.mrb[0].mxu0
      %v1087 = vadd.f32 %v940, %v1086
      %v1088 = vpop.f32.mrb[0].mxu0
      %1089 = vmatprep.mubr.f32.mxu0 0.0
      %1090 = vmatmul.mubr.f32.gmra.mrb[0].mxu0 %v962
      %v1091 = vpop.f32.mrb[0].mxu0
      %v1092 = vadd.f32 %v940, %v1091
      %v1093 = vpop.f32.mrb[0].mxu0
      %1094 = vmatprep.mubr.f32.mxu0 0.0
      %1095 = vmatmul.mubr.f32.gmra.mrb[0].mxu0 %v965
      %v1096 = vpop.f32.mrb[0].mxu0
      %v1097 = vadd.f32 %v940, %v1096
      %v1098 = vpop.f32.mrb[0].mxu0
      %1099 = vmatprep.mubr.f32.mxu0 0.0
      %1100 = vmatmul.mubr.f32.gmra.mrb[0].mxu0 %v968
      %v1101 = vpop.f32.mrb[0].mxu0
      %v1102 = vadd.f32 %v940, %v1101
      %v1103 = vpop.f32.mrb[0].mxu0
      %1104 = vmatprep.mubr.f32.mxu0 0.0
      %1105 = vmatmul.mubr.f32.gmra.mrb[0].mxu0 %v971
      %v1106 = vpop.f32.mrb[0].mxu0
      %v1107 = vadd.f32 %v940, %v1106
      %v1108 = vpop.f32.mrb[0].mxu0
      %1109 = vmatprep.mubr.f32.mxu0 0.0
      %1110 = vmatmul.mubr.f32.gmra.mrb[0].mxu0 %v974
      %v1111 = vpop.f32.mrb[0].mxu0
      %v1112 = vadd.f32 %v940, %v1111
      %v1113 = vpop.f32.mrb[0].mxu0
      %1114 = vmatprep.mubr.f32.mxu0 0.0
      %1115 = vmatmul.mubr.f32.gmra.mrb[0].mxu0 %v977
      %v1116 = vpop.f32.mrb[0].mxu0
      %v1117 = vadd.f32 %v940, %v1116
      %v1118 = vpop.f32.mrb[0].mxu0
      %1119 = vmatprep.mubr.f32.mxu0 0.0
      %1120 = vmatmul.mubr.f32.gmra.mrb[0].mxu0 %v980
      %v1121 = vpop.f32.mrb[0].mxu0
      %v1122 = vadd.f32 %v940, %v1121
      %v1123 = vpop.f32.mrb[0].mxu0
      %1124 = vmatprep.mubr.f32.mxu0 0.0
      %1125 = vmatmul.mubr.f32.gmra.mrb[0].mxu0 %v983
      %v1126 = vpop.f32.mrb[0].mxu0
      %v1127 = vadd.f32 %v940, %v1126
      %v1128 = vpop.f32.mrb[0].mxu0
      %1129 = vmatprep.mubr.f32.mxu0 0.0
      %1130 = vmatmul.mubr.f32.gmra.mrb[0].mxu0 %v986
      %v1131 = vpop.f32.mrb[0].mxu0
      %v1132 = vadd.f32 %v940, %v1131
      %v1133 = vpop.f32.mrb[0].mxu0
      %1134 = vmatprep.mubr.f32.mxu0 0.0
      %1135 = vmatmul.mubr.f32.gmra.mrb[0].mxu0 %v989
      %v1136 = vpop.f32.mrb[0].mxu0
      %v1137 = vadd.f32 %v940, %v1136
      %v1138 = vpop.f32.mrb[0].mxu0
      %1139 = vdwg.mxu0
      %v1140 = vsel %vm794, %v1062, 0.0
      %v1141 = vsel %vm794, %v1067, 0.0
      %v1142 = vadd.f32 %v1140, %v1141
      %v1143 = vsel %vm794, %v1072, 0.0
      %v1144 = vadd.f32 %v1142, %v1143
      %v1145 = vsel %vm794, %v1077, 0.0
      %v1146 = vadd.f32 %v1144, %v1145
      %v1147 = vsel %vm794, %v1082, 0.0
      %v1148 = vadd.f32 %v1146, %v1147
      %v1149 = vsel %vm794, %v1087, 0.0
      %v1150 = vadd.f32 %v1148, %v1149
      %v1151 = vsel %vm794, %v1092, 0.0
      %v1152 = vadd.f32 %v1150, %v1151
      %v1153 = vsel %vm794, %v1097, 0.0
      %v1154 = vadd.f32 %v1152, %v1153
      %v1155 = vsel %vm794, %v1102, 0.0
      %v1156 = vadd.f32 %v1154, %v1155
      %v1157 = vsel %vm794, %v1107, 0.0
      %v1158 = vadd.f32 %v1156, %v1157
      %v1159 = vsel %vm794, %v1112, 0.0
      %v1160 = vadd.f32 %v1158, %v1159
      %v1161 = vsel %vm794, %v1117, 0.0
      %v1162 = vadd.f32 %v1160, %v1161
      %v1163 = vsel %vm794, %v1122, 0.0
      %v1164 = vadd.f32 %v1162, %v1163
      %v1165 = vsel %vm794, %v1127, 0.0
      %v1166 = vadd.f32 %v1164, %v1165
      %v1167 = vsel %vm794, %v1132, 0.0
      %v1168 = vadd.f32 %v1166, %v1167
      %v1169 = vsel %vm794, %v1137, 0.0
      %v1170 = vadd.f32 %v1168, %v1169
      %v1171 = vrot.slane %v1170, 4
      %v1172 = vadd.f32 %v1170, %v1171
      %v1173 = vrot.slane %v1172, 2
      %v1174 = vadd.f32 %v1172, %v1173
      %v1175 = vrot.slane %v1174, 1
      %v1176 = vadd.f32 %v1174, %v1175
      %v1177 = vmul.f32 %v1062, %v1062
      %v1178 = vmul.f32 %v1067, %v1067
      %v1179 = vmul.f32 %v1072, %v1072
      %v1180 = vmul.f32 %v1077, %v1077
      %v1181 = vmul.f32 %v1082, %v1082
      %v1182 = vmul.f32 %v1087, %v1087
      %v1183 = vmul.f32 %v1092, %v1092
      %v1184 = vmul.f32 %v1097, %v1097
      %v1185 = vmul.f32 %v1102, %v1102
      %v1186 = vmul.f32 %v1107, %v1107
      %v1187 = vmul.f32 %v1112, %v1112
      %v1188 = vmul.f32 %v1117, %v1117
      %v1189 = vmul.f32 %v1122, %v1122
      %v1190 = vmul.f32 %v1127, %v1127
      %v1191 = vmul.f32 %v1132, %v1132
      %v1192 = vmul.f32 %v1137, %v1137
      %v1193 = vsel %vm794, %v1177, 0.0
      %v1194 = vsel %vm794, %v1178, 0.0
      %v1195 = vadd.f32 %v1193, %v1194
      %v1196 = vsel %vm794, %v1179, 0.0
      %v1197 = vadd.f32 %v1195, %v1196
      %v1198 = vsel %vm794, %v1180, 0.0
      %v1199 = vadd.f32 %v1197, %v1198
      %v1200 = vsel %vm794, %v1181, 0.0
      %v1201 = vadd.f32 %v1199, %v1200
      %v1202 = vsel %vm794, %v1182, 0.0
      %v1203 = vadd.f32 %v1201, %v1202
      %v1204 = vsel %vm794, %v1183, 0.0
      %v1205 = vadd.f32 %v1203, %v1204
      %v1206 = vsel %vm794, %v1184, 0.0
      %v1207 = vadd.f32 %v1205, %v1206
      %v1208 = vsel %vm794, %v1185, 0.0
      %v1209 = vadd.f32 %v1207, %v1208
      %v1210 = vsel %vm794, %v1186, 0.0
      %v1211 = vadd.f32 %v1209, %v1210
      %v1212 = vsel %vm794, %v1187, 0.0
      %v1213 = vadd.f32 %v1211, %v1212
      %v1214 = vsel %vm794, %v1188, 0.0
      %v1215 = vadd.f32 %v1213, %v1214
      %v1216 = vsel %vm794, %v1189, 0.0
      %v1217 = vadd.f32 %v1215, %v1216
      %v1218 = vsel %vm794, %v1190, 0.0
      %v1219 = vadd.f32 %v1217, %v1218
      %v1220 = vsel %vm794, %v1191, 0.0
      %v1221 = vadd.f32 %v1219, %v1220
      %v1222 = vsel %vm794, %v1192, 0.0
      %v1223 = vadd.f32 %v1221, %v1222
      %v1224 = vrot.slane %v1223, 4
      %v1225 = vadd.f32 %v1223, %v1224
      %v1226 = vrot.slane %v1225, 2
      %v1227 = vadd.f32 %v1225, %v1226
      %v1228 = vrot.slane %v1227, 1
      %v1229 = vadd.f32 %v1227, %v1228
      %vm1230 = vcmask 1040384
      %v1231 = vsel %vm1230, %v1176, %v1229
      %p1232 = scmp.eq.s32.totalorder %s21, 0
      // Predicated region
      $region33: #{resnet_block.3} parent=31 // pred_check
        %p1233 = pneg %p1232
      $region34: #{resnet_block.3} parent=31 // pred_check_branch
        %1235 = sbr.rel (%p1233) target = $region36
      $region35: #{resnet_block.3} parent=31 // pred_region
        %vm1236 = vcmask 25600
        %1237 = vst.msk [vmem:[%s247] sm:$0x3] %vm1236, 0.0
      $region36: #{resnet_block.3} parent=31 // pred_fallthru
        _
      %v1238 = vld [vmem:[%s247] sm:$0x3]
      %v1239 = vadd.f32 %v1238, %v1231
      %vm1240 = vcmask 25600
      %1241 = vst.msk [vmem:[%s247] sm:$0x3] %vm1240, %v1239
      %1242 = vst.msk [vmem:[%s242] sm:$0xff] %vm794, %v1062
      %1243 = vst.msk [vmem:[%s242 + $0x8] sm:$0xff] %vm794, %v1067
      %1244 = vst.msk [vmem:[%s242 + $0x10] sm:$0xff] %vm794, %v1072
      %1245 = vst.msk [vmem:[%s242 + $0x18] sm:$0xff] %vm794, %v1077
      %1246 = vst.msk [vmem:[%s242 + $0x20] sm:$0xff] %vm794, %v1082
      %1247 = vst.msk [vmem:[%s242 + $0x28] sm:$0xff] %vm794, %v1087
      %1248 = vst.msk [vmem:[%s242 + $0x30] sm:$0xff] %vm794, %v1092
      %1249 = vst.msk [vmem:[%s242 + $0x38] sm:$0xff] %vm794, %v1097
      %1250 = vst.msk [vmem:[%s242 + $0x40] sm:$0xff] %vm794, %v1102
      %1251 = vst.msk [vmem:[%s242 + $0x48] sm:$0xff] %vm794, %v1107
      %1252 = vst.msk [vmem:[%s242 + $0x50] sm:$0xff] %vm794, %v1112
      %1253 = vst.msk [vmem:[%s242 + $0x58] sm:$0xff] %vm794, %v1117
      %1254 = vst.msk [vmem:[%s242 + $0x60] sm:$0xff] %vm794, %v1122
      %1255 = vst.msk [vmem:[%s242 + $0x68] sm:$0xff] %vm794, %v1127
      %1256 = vst.msk [vmem:[%s242 + $0x70] sm:$0xff] %vm794, %v1132
      %1257 = vst.msk [vmem:[%s242 + $0x78] sm:$0xff] %vm794, %v1137
      %s1258 = smul.u32 8, %s21
      %p1259 = scmp.lt.s32.totalorder %s20, 1
      %s1260 = scalar_select %p1259, %s20, 1
      %p1261 = scmp.lt.s32.totalorder %s1258, 15
      %s1262 = scalar_select %p1261, %s1258, 15
      %s1263 = smul.addr %s1262, 2
      %s1264 = smul.addr %s1260, 32
      %s1265 = sadd.s32 %s1263, %s1264
      %s1266 = smul.addr %s1265, 8
      %s1267 = scalar_lea.vmem %s3, %s1266
      %p1268 = scmp.lt.s32.totalorder %s20, 1
      %s1269 = scalar_select %p1268, %s20, 1
      %s1270 = smul.addr %s1269, 2
      %s1271 = scalar_lea.vmem %s4, %s1270
      // Predicated region
      $region37: #{resnet_block.3} parent=31 // pred_check
        %p1272 = pneg %p118
      $region38: #{resnet_block.3} parent=31 // pred_check_branch
        %1274 = sbr.rel (%p1272) target = $region40
      $region39: #{resnet_block.3} parent=31 // pred_region
        %s1275 = smul.u32 8, %s21
      $region40: #{resnet_block.3} parent=31 // pred_fallthru
        _
      // Predicated region
      $region41: #{resnet_block.3} parent=31 // pred_check
        %p1276 = pneg %p144
      $region42: #{resnet_block.3} parent=31 // pred_check_branch
        %1278 = sbr.rel (%p1276) target = $region44
      $region43: #{resnet_block.3} parent=31 // pred_region
        _
      $region44: #{resnet_block.3} parent=31 // pred_fallthru
        _
    $region32: #{resnet_block.3} parent=5 // pred_fallthru
      _
    %p1279 = scmp.le.s32.totalorder 2, %s11
    // Predicated region
    $region45: #{resnet_block.3} parent=5 // pred_check
      %p1280 = pneg %p1279
    $region46: #{resnet_block.3} parent=5 // pred_check_branch
      %1282 = sbr.rel (%p1280) target = $region48
    $region47: #{resnet_block.3} parent=5 // pred_region
      %s1283 = ssub.s32 %s11, 2
      // Predicated region
      $region49: #{resnet_block.3} parent=47 // pred_check
        %p1284 = pneg %p124
      $region50: #{resnet_block.3} parent=47 // pred_check_branch
        %1286 = sbr.rel (%p1284) target = $region52
      $region51: #{resnet_block.3} parent=47 // pred_region
        %s1287 = smul.u32 8, %s23
        %p1288 = scmp.lt.s32.totalorder %s22, 1
        %s1289 = scalar_select %p1288, %s22, 1
        %p1290 = scmp.lt.s32.totalorder %s1287, 15
        %s1291 = scalar_select %p1290, %s1287, 15
        %s1292 = smul.addr %s1291, 2
        %s1293 = smul.addr %s1289, 32
        %s1294 = sadd.s32 %s1292, %s1293
        %s1295 = smul.addr %s1294, 8
        %s1296 = scalar_lea.vmem %s3, %s1295
      $region52: #{resnet_block.3} parent=47 // pred_fallthru
        _
      // Predicated region
      $region53: #{resnet_block.3} parent=47 // pred_check
        %p1297 = pneg %p150
      $region54: #{resnet_block.3} parent=47 // pred_check_branch
        %1299 = sbr.rel (%p1297) target = $region56
      $region55: #{resnet_block.3} parent=47 // pred_region
        %p1300 = scmp.lt.s32.totalorder %s22, 1
        %s1301 = scalar_select %p1300, %s22, 1
        %s1302 = smul.addr %s1301, 2
        %s1303 = scalar_lea.vmem %s4, %s1302
      $region56: #{resnet_block.3} parent=47 // pred_fallthru
        _
    $region48: #{resnet_block.3} parent=5 // pred_fallthru
      _
  $region6: #{resnet_block.3} parent=0 // loop_footer
    %s15 = sadd.s32 1, %s11
  $region7: #{resnet_block.3} parent=0 // loop_footer_branch
    %10 = sbr.rel target = $region3
  $region8: #{resnet_block.3} parent=0 // loop_exit
    _

// kernel: resnet_block.4
$region0: #{resnet_block.4}
  #allocation0 [shape = 'u32[]', space=smem, size = 0x4, offset = 0x4, fixed_abs, tag = 'smem constant byte address 0x4 - core index']
  #allocation1 [shape = 'u32[144,128]{1,0:T(1,128)}', space=vmem, size = 0x12000, scoped, tag = 'internal scratch']
  %s0 = inlined_call_operand.vmem [shape: f32[2,2,4], index: 0, kind: input, shape index: {}]
  %s1 = inlined_call_operand.vmem [shape: f32[2,2,10,18,4], index: 1, kind: input, shape index: {}]
  %s2 = inlined_call_operand.vmem [shape: f32[36,4], index: 2, kind: input, shape index: {}]
  %s3 = inlined_call_operand.vmem [shape: f32[1,4], index: 3, kind: input, shape index: {}]
  %s4 = inlined_call_operand.vmem [shape: f32[2,16,16,4], index: 4, kind: output, shape index: {0}]
  %s5 = inlined_call_operand.vmem [shape: f32[2,2,4], index: 5, kind: output, shape index: {1}]
  %6 = xla_tuple %s4, %s5
  %s7 = sld [smem:[#allocation0]]
  $region61: #{resnet_block.4} parent=0
    _
  %s9 = ssub.s32 1, %s7
  %s10 = scalar_select 0, %s9, %s7
  loop: start=0, step=1, limit=6
  $region2: #{resnet_block.4} parent=0 // loop_pre_header
    _
  $region3: #{resnet_block.4} parent=0 // loop_header
    %s12 = sphi 0, %s16
    %p13 = scmp.ge.s32.totalorder %s12, 6
    %s19 = sphi 0, %s31
    %s20 = sphi 0, %s27
    %s21 = sphi 0, %s19
    %s22 = sphi 0, %s20
    %s23 = sphi 0, %s21
    %s24 = sphi 0, %s22
    %s34 = sphi 0, %s36
    %s37 = sphi 0, %s34
    %s38 = sphi 0, %s37
    %s54 = sphi 0, %s38
    %s62 = sphi 0, %s64
    %s65 = sphi 0, %s62
    %s66 = sphi 0, %s65
    %s82 = sphi 0, %s66
    %s86 = sphi 0, %s86
    %s88 = sphi 0, %s86
    %s89 = sphi 0, %s88
    %s103 = sphi 0, %s89
    %s107 = sphi 0, %s107
    %s109 = sphi 0, %s107
    %s110 = sphi 0, %s109
    %s124 = sphi 0, %s110
    %s132 = sphi 0, %s134
    %s135 = sphi 0, %s132
    %s136 = sphi 0, %s135
    %s152 = sphi 0, %s136
    %s158 = sphi 0, %s160
    %s161 = sphi 0, %s158
    %s162 = sphi 0, %s161
    %s178 = sphi 0, %s162
  $region4: #{resnet_block.4} parent=0 // loop_header_branch
    %15 = sbr.rel (%p13) target = $region8
  $region5: #{resnet_block.4} parent=0 // loop_body
    %s17 = ssub.s32 %s12, 1
    %s18 = ssub.s32 %s12, 2
    %s25 = sadd.s32 1, %s20
    %p26 = scmp.ge.s32.totalorder %s25, 2
    %s27 = scalar_select %p26, 0, %s25
    %s28 = sadd.s32 1, %s19
    %s29 = scalar_select %p26, %s28, %s19
    %p30 = scmp.ge.s32.totalorder %s29, 2
    %s31 = scalar_select %p30, 0, %s29
    %s32 = ssub.s32 %s19, %s31
    %p33 = scmp.eq.s32.totalorder %s32, 0
    %s35 = sadd.s32 %s34, 1
    %s36 = scalar_select %p33, %s34, %s35
    %p39 = pneg %p33
    %p40 = scmp.eq.s32.totalorder %s12, 3
    %p41 = por %p39, %p40
    %p42 = scmp.ne.s32.totalorder %s34, %s37
    %p43 = scmp.eq.s32.totalorder %s12, 0
    %p44 = por %p42, %p43
    %p45 = scmp.ne.s32.totalorder %s34, %s37
    %p46 = scmp.eq.s32.totalorder %s17, 3
    %p47 = por %p45, %p46
    %p48 = scmp.ne.s32.totalorder %s37, %s38
    %p49 = scmp.eq.s32.totalorder %s17, 0
    %p50 = por %p48, %p49
    %p51 = scmp.ne.s32.totalorder %s37, %s38
    %p52 = scmp.eq.s32.totalorder %s18, 3
    %p53 = por %p51, %p52
    %p55 = scmp.ne.s32.totalorder %s38, %s54
    %p56 = scmp.eq.s32.totalorder %s18, 0
    %p57 = por %p55, %p56
    %s58 = ssub.s32 %s19, %s31
    %s59 = ssub.s32 %s20, %s27
    %s60 = sor.u32 %s58, %s59
    %p61 = scmp.eq.s32.totalorder %s60, 0
    %s63 = sadd.s32 %s62, 1
    %s64 = scalar_select %p61, %s62, %s63
    %p67 = pneg %p61
    %p68 = scmp.eq.s32.totalorder %s12, 3
    %p69 = por %p67, %p68
    %p70 = scmp.ne.s32.totalorder %s62, %s65
    %p71 = scmp.eq.s32.totalorder %s12, 0
    %p72 = por %p70, %p71
    %p73 = scmp.ne.s32.totalorder %s62, %s65
    %p74 = scmp.eq.s32.totalorder %s17, 3
    %p75 = por %p73, %p74
    %p76 = scmp.ne.s32.totalorder %s65, %s66
    %p77 = scmp.eq.s32.totalorder %s17, 0
    %p78 = por %p76, %p77
    %p79 = scmp.ne.s32.totalorder %s65, %s66
    %p80 = scmp.eq.s32.totalorder %s18, 3
    %p81 = por %p79, %p80
    %p83 = scmp.ne.s32.totalorder %s66, %s82
    %p84 = scmp.eq.s32.totalorder %s18, 0
    %p85 = por %p83, %p84
    %s87 = sadd.s32 %s86, 1
    %p90 = scmp.eq.s32.totalorder %s12, 3
    %p91 = scmp.ne.s32.totalorder %s86, %s88
    %p92 = scmp.eq.s32.totalorder %s12, 0
    %p93 = por %p91, %p92
    %p94 = scmp.ne.s32.totalorder %s86, %s88
    %p95 = scmp.eq.s32.totalorder %s17, 3
    %p96 = por %p94, %p95
    %p97 = scmp.ne.s32.totalorder %s88, %s89
    %p98 = scmp.eq.s32.totalorder %s17, 0
    %p99 = por %p97, %p98
    %p100 = scmp.ne.s32.totalorder %s88, %s89
    %p101 = scmp.eq.s32.totalorder %s18, 3
    %p102 = por %p100, %p101
    %p104 = scmp.ne.s32.totalorder %s89, %s103
    %p105 = scmp.eq.s32.totalorder %s18, 0
    %p106 = por %p104, %p105
    %s108 = sadd.s32 %s107, 1
    %p111 = scmp.eq.s32.totalorder %s12, 3
    %p112 = scmp.ne.s32.totalorder %s107, %s109
    %p113 = scmp.eq.s32.totalorder %s12, 0
    %p114 = por %p112, %p113
    %p115 = scmp.ne.s32.totalorder %s107, %s109
    %p116 = scmp.eq.s32.totalorder %s17, 3
    %p117 = por %p115, %p116
    %p118 = scmp.ne.s32.totalorder %s109, %s110
    %p119 = scmp.eq.s32.totalorder %s17, 0
    %p120 = por %p118, %p119
    %p121 = scmp.ne.s32.totalorder %s109, %s110
    %p122 = scmp.eq.s32.totalorder %s18, 3
    %p123 = por %p121, %p122
    %p125 = scmp.ne.s32.totalorder %s110, %s124
    %p126 = scmp.eq.s32.totalorder %s18, 0
    %p127 = por %p125, %p126
    %s128 = ssub.s32 %s19, %s31
    %s129 = ssub.s32 %s20, %s27
    %s130 = sor.u32 %s128, %s129
    %p131 = scmp.eq.s32.totalorder %s130, 0
    %s133 = sadd.s32 %s132, 1
    %s134 = scalar_select %p131, %s132, %s133
    %p137 = pneg %p131
    %p138 = scmp.eq.s32.totalorder %s12, 3
    %p139 = por %p137, %p138
    %p140 = scmp.ne.s32.totalorder %s132, %s135
    %p141 = scmp.eq.s32.totalorder %s12, 0
    %p142 = por %p140, %p141
    %p143 = scmp.ne.s32.totalorder %s132, %s135
    %p144 = scmp.eq.s32.totalorder %s17, 3
    %p145 = por %p143, %p144
    %p146 = scmp.ne.s32.totalorder %s135, %s136
    %p147 = scmp.eq.s32.totalorder %s17, 0
    %p148 = por %p146, %p147
    %p149 = scmp.ne.s32.totalorder %s135, %s136
    %p150 = scmp.eq.s32.totalorder %s18, 3
    %p151 = por %p149, %p150
    %p153 = scmp.ne.s32.totalorder %s136, %s152
    %p154 = scmp.eq.s32.totalorder %s18, 0
    %p155 = por %p153, %p154
    %s156 = ssub.s32 %s19, %s31
    %p157 = scmp.eq.s32.totalorder %s156, 0
    %s159 = sadd.s32 %s158, 1
    %s160 = scalar_select %p157, %s158, %s159
    %p163 = pneg %p157
    %p164 = scmp.eq.s32.totalorder %s12, 3
    %p165 = por %p163, %p164
    %p166 = scmp.ne.s32.totalorder %s158, %s161
    %p167 = scmp.eq.s32.totalorder %s12, 0
    %p168 = por %p166, %p167
    %p169 = scmp.ne.s32.totalorder %s158, %s161
    %p170 = scmp.eq.s32.totalorder %s17, 3
    %p171 = por %p169, %p170
    %p172 = scmp.ne.s32.totalorder %s161, %s162
    %p173 = scmp.eq.s32.totalorder %s17, 0
    %p174 = por %p172, %p173
    %p175 = scmp.ne.s32.totalorder %s161, %s162
    %p176 = scmp.eq.s32.totalorder %s18, 3
    %p177 = por %p175, %p176
    %p179 = scmp.ne.s32.totalorder %s162, %s178
    %p180 = scmp.eq.s32.totalorder %s18, 0
    %p181 = por %p179, %p180
    %p182 = scmp.le.s32.totalorder 1, %s12
    %p183 = scmp.lt.s32.totalorder %s12, 5
    %p184 = pnand %p182, %p183
    %p185 = pneg %p184
    // Predicated region
    $region9: #{resnet_block.4} parent=5 // pred_check
      _
    $region10: #{resnet_block.4} parent=5 // pred_check_branch
      %187 = sbr.rel (%p184) target = $region12
    $region11: #{resnet_block.4} parent=5 // pred_region
      %s188 = ssub.s32 %s12, 1
      // Predicated region
      $region13: #{resnet_block.4} parent=11 // pred_check
        %p189 = pneg %p99
      $region14: #{resnet_block.4} parent=11 // pred_check_branch
        %191 = sbr.rel (%p189) target = $region16
      $region15: #{resnet_block.4} parent=11 // pred_region
        _
      $region16: #{resnet_block.4} parent=11 // pred_fallthru
        _
      // Predicated region
      $region17: #{resnet_block.4} parent=11 // pred_check
        %p192 = pneg %p120
      $region18: #{resnet_block.4} parent=11 // pred_check_branch
        %194 = sbr.rel (%p192) target = $region20
      $region19: #{resnet_block.4} parent=11 // pred_region
        _
      $region20: #{resnet_block.4} parent=11 // pred_fallthru
        _
    $region12: #{resnet_block.4} parent=5 // pred_fallthru
      _
    %p195 = scmp.lt.s32.totalorder %s12, 4
    // Predicated region
    $region21: #{resnet_block.4} parent=5 // pred_check
      %p196 = pneg %p195
    $region22: #{resnet_block.4} parent=5 // pred_check_branch
      %198 = sbr.rel (%p196) target = $region24
    $region23: #{resnet_block.4} parent=5 // pred_region
      // Predicated region
      $region25: #{resnet_block.4} parent=23 // pred_check
        %p199 = pneg %p44
      $region26: #{resnet_block.4} parent=23 // pred_check_branch
        %201 = sbr.rel (%p199) target = $region28
      $region27: #{resnet_block.4} parent=23 // pred_region
        %p202 = scmp.lt.s32.totalorder %s19, 1
        %s203 = scalar_select %p202, %s19, 1
        %s204 = smul.addr %s203, 2
        %s205 = scalar_lea.vmem %s0, %s204
      $region28: #{resnet_block.4} parent=23 // pred_fallthru
        _
      // Predicated region
      $region29: #{resnet_block.4} parent=23 // pred_check
        %p206 = pneg %p72
      $region30: #{resnet_block.4} parent=23 // pred_check_branch
        %208 = sbr.rel (%p206) target = $region32
      $region31: #{resnet_block.4} parent=23 // pred_region
        %p209 = scmp.lt.s32.totalorder %s19, 1
        %s210 = scalar_select %p209, %s19, 1
        %p211 = scmp.lt.s32.totalorder %s20, 1
        %s212 = scalar_select %p211, %s20, 1
        %s213 = smul.addr %s212, 30
        %s214 = smul.addr %s210, 60
        %s215 = sadd.s32 %s213, %s214
        %s216 = smul.addr %s215, 8
        %s217 = scalar_lea.vmem %s1, %s216
      $region32: #{resnet_block.4} parent=23 // pred_fallthru
        _
    $region24: #{resnet_block.4} parent=5 // pred_fallthru
      _
    %p218 = scmp.le.s32.totalorder 1, %s12
    %p219 = scmp.lt.s32.totalorder %s12, 5
    %p220 = pnand %p218, %p219
    %p221 = pneg %p220
    // Predicated region
    $region33: #{resnet_block.4} parent=5 // pred_check
      _
    $region34: #{resnet_block.4} parent=5 // pred_check_branch
      %223 = sbr.rel (%p220) target = $region36
    $region35: #{resnet_block.4} parent=5 // pred_region
      %s224 = ssub.s32 %s12, 1
      %p225 = scmp.lt.s32.totalorder %s21, 1
      %s226 = scalar_select %p225, %s21, 1
      %s227 = smul.addr %s226, 2
      %s228 = scalar_lea.vmem %s0, %s227
      %p229 = pneg %p50
      %p230 = pneg %p47
      %p231 = scmp.lt.s32.totalorder %s21, 1
      %s232 = scalar_select %p231, %s21, 1
      %p233 = scmp.lt.s32.totalorder %s22, 1
      %s234 = scalar_select %p233, %s22, 1
      %s235 = smul.addr %s234, 30
      %s236 = smul.addr %s232, 60
      %s237 = sadd.s32 %s235, %s236
      %s238 = smul.addr %s237, 8
      %s239 = scalar_lea.vmem %s1, %s238
      %p240 = pneg %p78
      %p241 = pneg %p75
      %p242 = pneg %p99
      %p243 = pneg %p96
      %p244 = pneg %p120
      %p245 = pneg %p117
      %p246 = pneg %p148
      %p247 = pneg %p145
      %s248 = smul.u32 8, %s22
      %p249 = scmp.lt.s32.totalorder %s21, 1
      %s250 = scalar_select %p249, %s21, 1
      %p251 = scmp.lt.s32.totalorder %s248, 15
      %s252 = scalar_select %p251, %s248, 15
      %s253 = smul.addr %s252, 2
      %s254 = smul.addr %s250, 32
      %s255 = sadd.s32 %s253, %s254
      %s256 = smul.addr %s255, 8
      %s257 = scalar_lea.vmem %s4, %s256
      %p258 = pneg %p174
      %p259 = pneg %p171
      %p260 = scmp.lt.s32.totalorder %s21, 1
      %s261 = scalar_select %p260, %s21, 1
      %s262 = smul.addr %s261, 2
      %s263 = scalar_lea.vmem %s5, %s262
      %p264 = scmp.lt.s32.totalorder %s21, 1
      %s265 = scalar_select %p264, %s21, 1
      %s266 = smul.addr %s265, 2
      %s267 = scalar_lea.vmem %s0, %s266
      %p268 = scmp.lt.s32.totalorder %s21, 1
      %s269 = scalar_select %p268, %s21, 1
      %p270 = scmp.lt.s32.totalorder %s22, 1
      %s271 = scalar_select %p270, %s22, 1
      %s272 = smul.addr %s271, 30
      %s273 = smul.addr %s269, 60
      %s274 = sadd.s32 %s272, %s273
      %s275 = smul.addr %s274, 8
      %s276 = scalar_lea.vmem %s1, %s275
      %s277 = smul.u32 8, %s22
      %p278 = scmp.lt.s32.totalorder %s21, 1
      %s279 = scalar_select %p278, %s21, 1
      %p280 = scmp.lt.s32.totalorder %s277, 15
      %s281 = scalar_select %p280, %s277, 15
      %s282 = smul.addr %s281, 2
      %s283 = smul.addr %s279, 32
      %s284 = sadd.s32 %s282, %s283
      %s285 = smul.addr %s284, 8
      %s286 = scalar_lea.vmem %s4, %s285
      %s287 = smul.u32 8, %s22
      %p288 = scmp.lt.s32.totalorder %s21, 1
      %s289 = scalar_select %p288, %s21, 1
      %s290 = smul.addr %s289, 2
      %s291 = scalar_lea.vmem %s5, %s290
      %v292 = vld [vmem:[%s276] sm:$0xff]
      %v293 = vld [vmem:[%s276 + $0x8] sm:$0xff]
      %v294 = vld [vmem:[%s276 + $0x10] sm:$0x3]
      %v295 = vld [vmem:[%s276 + $0x18] sm:$0xff]
      %v296 = vld [vmem:[%s276 + $0x20] sm:$0xff]
      %v297 = vld [vmem:[%s276 + $0x28] sm:$0x3]
      %v298 = vld [vmem:[%s276 + $0x30] sm:$0xff]
      %v299 = vld [vmem:[%s276 + $0x38] sm:$0xff]
      %v300 = vld [vmem:[%s276 + $0x40] sm:$0x3]
      %v301 = vld [vmem:[%s276 + $0x48] sm:$0xff]
      %v302 = vld [vmem:[%s276 + $0x50] sm:$0xff]
      %v303 = vld [vmem:[%s276 + $0x58] sm:$0x3]
      %v304 = vld [vmem:[%s276 + $0x60] sm:$0xff]
      %v305 = vld [vmem:[%s276 + $0x68] sm:$0xff]
      %v306 = vld [vmem:[%s276 + $0x70] sm:$0x3]
      %v307 = vld [vmem:[%s276 + $0x78] sm:$0xff]
      %v308 = vld [vmem:[%s276 + $0x80] sm:$0xff]
      %v309 = vld [vmem:[%s276 + $0x88] sm:$0x3]
      %v310 = vld [vmem:[%s276 + $0x90] sm:$0xff]
      %v311 = vld [vmem:[%s276 + $0x98] sm:$0xff]
      %v312 = vld [vmem:[%s276 + $0xa0] sm:$0x3]
      %v313 = vld [vmem:[%s276 + $0xa8] sm:$0xff]
      %v314 = vld [vmem:[%s276 + $0xb0] sm:$0xff]
      %v315 = vld [vmem:[%s276 + $0xb8] sm:$0x3]
      %v316 = vld [vmem:[%s276 + $0xc0] sm:$0xff]
      %v317 = vld [vmem:[%s276 + $0xc8] sm:$0xff]
      %v318 = vld [vmem:[%s276 + $0xd0] sm:$0x3]
      %v319 = vld [vmem:[%s276 + $0xd8] sm:$0xff]
      %v320 = vld [vmem:[%s276 + $0xe0] sm:$0xff]
      %v321 = vld [vmem:[%s276 + $0xe8] sm:$0x3]
      %v322 = vld [vmem:[%s267] sm:$0x3]
      %v323 = vmul.f32 %v322, 0.00390625
      %v324 = vmul.f32 %v323, %v323
      %v326 = vrot.slane %v324, 7
      %v328 = vsub.f32 %v323, %v326
      %v329 = vadd.f32 %v328, 1e-05
      %v330 = vrsqrt.pop %v329
      %v331 = vlaneseq
      %v332 = vshrl.u32 %v331, 7
      %v333 = vsub.s32 0, %v332
      %v334 = vrot.slane %v323, %v333
      %v335 = vsub.f32 %v292, %v334
      %v336 = vsub.f32 %v293, %v334
      %v337 = vsub.f32 %v294, %v334
      %v338 = vsub.f32 %v295, %v334
      %v339 = vsub.f32 %v296, %v334
      %v340 = vsub.f32 %v297, %v334
      %v341 = vsub.f32 %v298, %v334
      %v342 = vsub.f32 %v299, %v334
      %v343 = vsub.f32 %v300, %v334
      %v344 = vsub.f32 %v301, %v334
      %v345 = vsub.f32 %v302, %v334
      %v346 = vsub.f32 %v303, %v334
      %v347 = vsub.f32 %v304, %v334
      %v348 = vsub.f32 %v305, %v334
      %v349 = vsub.f32 %v306, %v334
      %v350 = vsub.f32 %v307, %v334
      %v351 = vsub.f32 %v308, %v334
      %v352 = vsub.f32 %v309, %v334
      %v353 = vsub.f32 %v310, %v334
      %v354 = vsub.f32 %v311, %v334
      %v355 = vsub.f32 %v312, %v334
      %v356 = vsub.f32 %v313, %v334
      %v357 = vsub.f32 %v314, %v334
      %v358 = vsub.f32 %v315, %v334
      %v359 = vsub.f32 %v316, %v334
      %v360 = vsub.f32 %v317, %v334
      %v361 = vsub.f32 %v318, %v334
      %v362 = vsub.f32 %v319, %v334
      %v363 = vsub.f32 %v320, %v334
      %v364 = vsub.f32 %v321, %v334
      %v365 = vlaneseq
      %v366 = vshrl.u32 %v365, 7
      %v367 = vsub.s32 1, %v366
      %v368 = vrot.slane %v330, %v367
      %v369 = vmul.f32 %v335, %v368
      %v370 = vmul.f32 %v336, %v368
      %v371 = vmul.f32 %v337, %v368
      %v372 = vmul.f32 %v338, %v368
      %v373 = vmul.f32 %v339, %v368
      %v374 = vmul.f32 %v340, %v368
      %v375 = vmul.f32 %v341, %v368
      %v376 = vmul.f32 %v342, %v368
      %v377 = vmul.f32 %v343, %v368
      %v378 = vmul.f32 %v344, %v368
      %v379 = vmul.f32 %v345, %v368
      %v380 = vmul.f32 %v346, %v368
      %v381 = vmul.f32 %v347, %v368
      %v382 = vmul.f32 %v348, %v368
      %v383 = vmul.f32 %v349, %v368
      %v384 = vmul.f32 %v350, %v368
      %v385 = vmul.f32 %v351, %v368
      %v386 = vmul.f32 %v352, %v368
      %v387 = vmul.f32 %v353, %v368
      %v388 = vmul.f32 %v354, %v368
      %v389 = vmul.f32 %v355, %v368
      %v390 = vmul.f32 %v356, %v368
      %v391 = vmul.f32 %v357, %v368
      %v392 = vmul.f32 %v358, %v368
      %v393 = vmul.f32 %v359, %v368
      %v394 = vmul.f32 %v360, %v368
      %v395 = vmul.f32 %v361, %v368
      %v396 = vmul.f32 %v362, %v368
      %v397 = vmul.f32 %v363, %v368
      %v398 = vmul.f32 %v364, %v368
      %v399 = vmax.f32 %v369, 0.0
      %v400 = vmax.f32 %v370, 0.0
      %v401 = vmax.f32 %v371, 0.0
      %v402 = vmax.f32 %v372, 0.0
      %v403 = vmax.f32 %v373, 0.0
      %v404 = vmax.f32 %v374, 0.0
      %v405 = vmax.f32 %v375, 0.0
      %v406 = vmax.f32 %v376, 0.0
      %v407 = vmax.f32 %v377, 0.0
      %v408 = vmax.f32 %v378, 0.0
      %v409 = vmax.f32 %v379, 0.0
      %v410 = vmax.f32 %v380, 0.0
      %v411 = vmax.f32 %v381, 0.0
      %v412 = vmax.f32 %v382, 0.0
      %v413 = vmax.f32 %v383, 0.0
      %v414 = vmax.f32 %v384, 0.0
      %v415 = vmax.f32 %v385, 0.0
      %v416 = vmax.f32 %v386, 0.0
      %v417 = vmax.f32 %v387, 0.0
      %v418 = vmax.f32 %v388, 0.0
      %v419 = vmax.f32 %v389, 0.0
      %v420 = vmax.f32 %v390, 0.0
      %v421 = vmax.f32 %v391, 0.0
      %v422 = vmax.f32 %v392, 0.0
      %v423 = vmax.f32 %v393, 0.0
      %v424 = vmax.f32 %v394, 0.0
      %v425 = vmax.f32 %v395, 0.0
      %v426 = vmax.f32 %v396, 0.0
      %v427 = vmax.f32 %v397, 0.0
      %v428 = vmax.f32 %v398, 0.0
      %vm453 = vcmask 1046528
      %v454 = vrot.slane %v399, 1
      %v455 = vrot.slane %v400, 1
      %v456 = vsel %vm453, %v454, %v455
      %v457 = vrot.slane %v401, 1
      %v458 = vsel %vm453, %v455, %v457
      %v459 = vrot.slane %v402, 1
      %v460 = vrot.slane %v403, 1
      %v461 = vsel %vm453, %v459, %v460
      %v462 = vrot.slane %v404, 1
      %v463 = vsel %vm453, %v460, %v462
      %v464 = vrot.slane %v405, 1
      %v465 = vrot.slane %v406, 1
      %v466 = vsel %vm453, %v464, %v465
      %v467 = vrot.slane %v407, 1
      %v468 = vsel %vm453, %v465, %v467
      %v469 = vrot.slane %v408, 1
      %v470 = vrot.slane %v409, 1
      %v471 = vsel %vm453, %v469, %v470
      %v472 = vrot.slane %v410, 1
      %v473 = vsel %vm453, %v470, %v472
      %v474 = vrot.slane %v411, 1
      %v475 = vrot.slane %v412, 1
      %v476 = vsel %vm453, %v474, %v475
      %v477 = vrot.slane %v413, 1
      %v478 = vsel %vm453, %v475, %v477
      %v479 = vrot.slane %v414, 1
      %v480 = vrot.slane %v415, 1
      %v481 = vsel %vm453, %v479, %v480
      %v482 = vrot.slane %v416, 1
      %v483 = vsel %vm453, %v480, %v482
      %v484 = vrot.slane %v417, 1
      %v485 = vrot.slane %v418, 1
      %v486 = vsel %vm453, %v484, %v485
      %v487 = vrot.slane %v419, 1
      %v488 = vsel %vm453, %v485, %v487
      %v489 = vrot.slane %v420, 1
      %v490 = vrot.slane %v421, 1
      %v491 = vsel %vm453, %v489, %v490
      %v492 = vrot.slane %v422, 1
      %v493 = vsel %vm453, %v490, %v492
      %494 = vrot.lane.b32.xlu0 %v456, 4
      %v495 = vpop.permute.xlu0 %494
      %496 = vrot.lane.b32.xlu0 %v458, 4
      %v497 = vpop.permute.xlu0 %496
      %498 = vrot.lane.b32.xlu0 %v461, 4
      %v499 = vpop.permute.xlu0 %498
      %500 = vrot.lane.b32.xlu0 %v463, 4
      %v501 = vpop.permute.xlu0 %500
      %502 = vrot.lane.b32.xlu0 %v466, 4
      %v503 = vpop.permute.xlu0 %502
      %504 = vrot.lane.b32.xlu0 %v468, 4
      %v505 = vpop.permute.xlu0 %504
      %506 = vrot.lane.b32.xlu0 %v471, 4
      %v507 = vpop.permute.xlu0 %506
      %508 = vrot.lane.b32.xlu0 %v473, 4
      %v509 = vpop.permute.xlu0 %508
      %510 = vrot.lane.b32.xlu0 %v476, 4
      %v511 = vpop.permute.xlu0 %510
      %512 = vrot.lane.b32.xlu0 %v478, 4
      %v513 = vpop.permute.xlu0 %512
      %514 = vrot.lane.b32.xlu0 %v481, 4
      %v515 = vpop.permute.xlu0 %514
      %516 = vrot.lane.b32.xlu0 %v483, 4
      %v517 = vpop.permute.xlu0 %516
      %518 = vrot.lane.b32.xlu0 %v486, 4
      %v519 = vpop.permute.xlu0 %518
      %520 = vrot.lane.b32.xlu0 %v488, 4
      %v521 = vpop.permute.xlu0 %520
      %522 = vrot.lane.b32.xlu0 %v491, 4
      %v523 = vpop.permute.xlu0 %522
      %524 = vrot.lane.b32.xlu0 %v493, 4
      %v525 = vpop.permute.xlu0 %524
      %vm542 = vcmask 1045504
      %v543 = vrot.slane %v399, 2
      %v544 = vrot.slane %v400, 2
      %v545 = vsel %vm542, %v543, %v544
      %v546 = vrot.slane %v401, 2
      %v547 = vsel %vm542, %v544, %v546
      %v548 = vrot.slane %v402, 2
      %v549 = vrot.slane %v403, 2
      %v550 = vsel %vm542, %v548, %v549
      %v551 = vrot.slane %v404, 2
      %v552 = vsel %vm542, %v549, %v551
      %v553 = vrot.slane %v405, 2
      %v554 = vrot.slane %v406, 2
      %v555 = vsel %vm542, %v553, %v554
      %v556 = vrot.slane %v407, 2
      %v557 = vsel %vm542, %v554, %v556
      %v558 = vrot.slane %v408, 2
      %v559 = vrot.slane %v409, 2
      %v560 = vsel %vm542, %v558, %v559
      %v561 = vrot.slane %v410, 2
      %v562 = vsel %vm542, %v559, %v561
      %v563 = vrot.slane %v411, 2
      %v564 = vrot.slane %v412, 2
      %v565 = vsel %vm542, %v563, %v564
      %v566 = vrot.slane %v413, 2
      %v567 = vsel %vm542, %v564, %v566
      %v568 = vrot.slane %v414, 2
      %v569 = vrot.slane %v415, 2
      %v570 = vsel %vm542, %v568, %v569
      %v571 = vrot.slane %v416, 2
      %v572 = vsel %vm542, %v569, %v571
      %v573 = vrot.slane %v417, 2
      %v574 = vrot.slane %v418, 2
      %v575 = vsel %vm542, %v573, %v574
      %v576 = vrot.slane %v419, 2
      %v577 = vsel %vm542, %v574, %v576
      %v578 = vrot.slane %v420, 2
      %v579 = vrot.slane %v421, 2
      %v580 = vsel %vm542, %v578, %v579
      %v581 = vrot.slane %v422, 2
      %v582 = vsel %vm542, %v579, %v581
      %583 = vrot.lane.b32.xlu0 %v545, 8
      %v584 = vpop.permute.xlu0 %583
      %585 = vrot.lane.b32.xlu0 %v547, 8
      %v586 = vpop.permute.xlu0 %585
      %587 = vrot.lane.b32.xlu0 %v550, 8
      %v588 = vpop.permute.xlu0 %587
      %589 = vrot.lane.b32.xlu0 %v552, 8
      %v590 = vpop.permute.xlu0 %589
      %591 = vrot.lane.b32.xlu0 %v555, 8
      %v592 = vpop.permute.xlu0 %591
      %593 = vrot.lane.b32.xlu0 %v557, 8
      %v594 = vpop.permute.xlu0 %593
      %595 = vrot.lane.b32.xlu0 %v560, 8
      %v596 = vpop.permute.xlu0 %595
      %597 = vrot.lane.b32.xlu0 %v562, 8
      %v598 = vpop.permute.xlu0 %597
      %599 = vrot.lane.b32.xlu0 %v565, 8
      %v600 = vpop.permute.xlu0 %599
      %601 = vrot.lane.b32.xlu0 %v567, 8
      %v602 = vpop.permute.xlu0 %601
      %603 = vrot.lane.b32.xlu0 %v570, 8
      %v604 = vpop.permute.xlu0 %603
      %605 = vrot.lane.b32.xlu0 %v572, 8
      %v606 = vpop.permute.xlu0 %605
      %607 = vrot.lane.b32.xlu0 %v575, 8
      %v608 = vpop.permute.xlu0 %607
      %609 = vrot.lane.b32.xlu0 %v577, 8
      %v610 = vpop.permute.xlu0 %609
      %611 = vrot.lane.b32.xlu0 %v580, 8
      %v612 = vpop.permute.xlu0 %611
      %613 = vrot.lane.b32.xlu0 %v582, 8
      %v614 = vpop.permute.xlu0 %613
      %633 = vrot.lane.b32.xlu0 %v402, 12
      %v634 = vpop.permute.xlu0 %633
      %635 = vrot.lane.b32.xlu0 %v403, 12
      %v636 = vpop.permute.xlu0 %635
      %637 = vrot.lane.b32.xlu0 %v405, 12
      %v638 = vpop.permute.xlu0 %637
      %639 = vrot.lane.b32.xlu0 %v406, 12
      %v640 = vpop.permute.xlu0 %639
      %641 = vrot.lane.b32.xlu0 %v408, 12
      %v642 = vpop.permute.xlu0 %641
      %643 = vrot.lane.b32.xlu0 %v409, 12
      %v644 = vpop.permute.xlu0 %643
      %645 = vrot.lane.b32.xlu0 %v411, 12
      %v646 = vpop.permute.xlu0 %645
      %647 = vrot.lane.b32.xlu0 %v412, 12
      %v648 = vpop.permute.xlu0 %647
      %649 = vrot.lane.b32.xlu0 %v414, 12
      %v650 = vpop.permute.xlu0 %649
      %651 = vrot.lane.b32.xlu0 %v415, 12
      %v652 = vpop.permute.xlu0 %651
      %653 = vrot.lane.b32.xlu0 %v417, 12
      %v654 = vpop.permute.xlu0 %653
      %655 = vrot.lane.b32.xlu0 %v418, 12
      %v656 = vpop.permute.xlu0 %655
      %657 = vrot.lane.b32.xlu0 %v420, 12
      %v658 = vpop.permute.xlu0 %657
      %659 = vrot.lane.b32.xlu0 %v421, 12
      %v660 = vpop.permute.xlu0 %659
      %661 = vrot.lane.b32.xlu0 %v423, 12
      %v662 = vpop.permute.xlu0 %661
      %663 = vrot.lane.b32.xlu0 %v424, 12
      %v664 = vpop.permute.xlu0 %663
      %v682 = vrot.slane %v423, 1
      %v683 = vrot.slane %v424, 1
      %v684 = vsel %vm453, %v682, %v683
      %v685 = vrot.slane %v425, 1
      %v686 = vsel %vm453, %v683, %v685
      %687 = vrot.lane.b32.xlu0 %v461, 16
      %v688 = vpop.permute.xlu0 %687
      %689 = vrot.lane.b32.xlu0 %v463, 16
      %v690 = vpop.permute.xlu0 %689
      %691 = vrot.lane.b32.xlu0 %v466, 16
      %v692 = vpop.permute.xlu0 %691
      %693 = vrot.lane.b32.xlu0 %v468, 16
      %v694 = vpop.permute.xlu0 %693
      %695 = vrot.lane.b32.xlu0 %v471, 16
      %v696 = vpop.permute.xlu0 %695
      %697 = vrot.lane.b32.xlu0 %v473, 16
      %v698 = vpop.permute.xlu0 %697
      %699 = vrot.lane.b32.xlu0 %v476, 16
      %v700 = vpop.permute.xlu0 %699
      %701 = vrot.lane.b32.xlu0 %v478, 16
      %v702 = vpop.permute.xlu0 %701
      %703 = vrot.lane.b32.xlu0 %v481, 16
      %v704 = vpop.permute.xlu0 %703
      %705 = vrot.lane.b32.xlu0 %v483, 16
      %v706 = vpop.permute.xlu0 %705
      %707 = vrot.lane.b32.xlu0 %v486, 16
      %v708 = vpop.permute.xlu0 %707
      %709 = vrot.lane.b32.xlu0 %v488, 16
      %v710 = vpop.permute.xlu0 %709
      %711 = vrot.lane.b32.xlu0 %v491, 16
      %v712 = vpop.permute.xlu0 %711
      %713 = vrot.lane.b32.xlu0 %v493, 16
      %v714 = vpop.permute.xlu0 %713
      %715 = vrot.lane.b32.xlu0 %v684, 16
      %v716 = vpop.permute.xlu0 %715
      %717 = vrot.lane.b32.xlu0 %v686, 16
      %v718 = vpop.permute.xlu0 %717
      %v735 = vrot.slane %v423, 2
      %v736 = vrot.slane %v424, 2
      %v737 = vsel %vm542, %v735, %v736
      %v738 = vrot.slane %v425, 2
      %v739 = vsel %vm542, %v736, %v738
      %740 = vrot.lane.b32.xlu0 %v550, 20
      %v741 = vpop.permute.xlu0 %740
      %742 = vrot.lane.b32.xlu0 %v552, 20
      %v743 = vpop.permute.xlu0 %742
      %744 = vrot.lane.b32.xlu0 %v555, 20
      %v745 = vpop.permute.xlu0 %744
      %746 = vrot.lane.b32.xlu0 %v557, 20
      %v747 = vpop.permute.xlu0 %746
      %748 = vrot.lane.b32.xlu0 %v560, 20
      %v749 = vpop.permute.xlu0 %748
      %750 = vrot.lane.b32.xlu0 %v562, 20
      %v751 = vpop.permute.xlu0 %750
      %752 = vrot.lane.b32.xlu0 %v565, 20
      %v753 = vpop.permute.xlu0 %752
      %754 = vrot.lane.b32.xlu0 %v567, 20
      %v755 = vpop.permute.xlu0 %754
      %756 = vrot.lane.b32.xlu0 %v570, 20
      %v757 = vpop.permute.xlu0 %756
      %758 = vrot.lane.b32.xlu0 %v572, 20
      %v759 = vpop.permute.xlu0 %758
      %760 = vrot.lane.b32.xlu0 %v575, 20
      %v761 = vpop.permute.xlu0 %760
      %762 = vrot.lane.b32.xlu0 %v577, 20
      %v763 = vpop.permute.xlu0 %762
      %764 = vrot.lane.b32.xlu0 %v580, 20
      %v765 = vpop.permute.xlu0 %764
      %766 = vrot.lane.b32.xlu0 %v582, 20
      %v767 = vpop.permute.xlu0 %766
      %768 = vrot.lane.b32.xlu0 %v737, 20
      %v769 = vpop.permute.xlu0 %768
      %770 = vrot.lane.b32.xlu0 %v739, 20
      %v771 = vpop.permute.xlu0 %770
      %790 = vrot.lane.b32.xlu0 %v405, 24
      %v791 = vpop.permute.xlu0 %790
      %792 = vrot.lane.b32.xlu0 %v406, 24
      %v793 = vpop.permute.xlu0 %792
      %794 = vrot.lane.b32.xlu0 %v408, 24
      %v795 = vpop.permute.xlu0 %794
      %796 = vrot.lane.b32.xlu0 %v409, 24
      %v797 = vpop.permute.xlu0 %796
      %798 = vrot.lane.b32.xlu0 %v411, 24
      %v799 = vpop.permute.xlu0 %798
      %800 = vrot.lane.b32.xlu0 %v412, 24
      %v801 = vpop.permute.xlu0 %800
      %802 = vrot.lane.b32.xlu0 %v414, 24
      %v803 = vpop.permute.xlu0 %802
      %804 = vrot.lane.b32.xlu0 %v415, 24
      %v805 = vpop.permute.xlu0 %804
      %806 = vrot.lane.b32.xlu0 %v417, 24
      %v807 = vpop.permute.xlu0 %806
      %808 = vrot.lane.b32.xlu0 %v418, 24
      %v809 = vpop.permute.xlu0 %808
      %810 = vrot.lane.b32.xlu0 %v420, 24
      %v811 = vpop.permute.xlu0 %810
      %812 = vrot.lane.b32.xlu0 %v421, 24
      %v813 = vpop.permute.xlu0 %812
      %814 = vrot.lane.b32.xlu0 %v423, 24
      %v815 = vpop.permute.xlu0 %814
      %816 = vrot.lane.b32.xlu0 %v424, 24
      %v817 = vpop.permute.xlu0 %816
      %818 = vrot.lane.b32.xlu0 %v426, 24
      %v819 = vpop.permute.xlu0 %818
      %820 = vrot.lane.b32.xlu0 %v427, 24
      %v821 = vpop.permute.xlu0 %820
      %v839 = vrot.slane %v426, 1
      %v840 = vrot.slane %v427, 1
      %v841 = vsel %vm453, %v839, %v840
      %v842 = vrot.slane %v428, 1
      %v843 = vsel %vm453, %v840, %v842
      %844 = vrot.lane.b32.xlu0 %v466, 28
      %v845 = vpop.permute.xlu0 %844
      %846 = vrot.lane.b32.xlu0 %v468, 28
      %v847 = vpop.permute.xlu0 %846
      %848 = vrot.lane.b32.xlu0 %v471, 28
      %v849 = vpop.permute.xlu0 %848
      %850 = vrot.lane.b32.xlu0 %v473, 28
      %v851 = vpop.permute.xlu0 %850
      %852 = vrot.lane.b32.xlu0 %v476, 28
      %v853 = vpop.permute.xlu0 %852
      %854 = vrot.lane.b32.xlu0 %v478, 28
      %v855 = vpop.permute.xlu0 %854
      %856 = vrot.lane.b32.xlu0 %v481, 28
      %v857 = vpop.permute.xlu0 %856
      %858 = vrot.lane.b32.xlu0 %v483, 28
      %v859 = vpop.permute.xlu0 %858
      %860 = vrot.lane.b32.xlu0 %v486, 28
      %v861 = vpop.permute.xlu0 %860
      %862 = vrot.lane.b32.xlu0 %v488, 28
      %v863 = vpop.permute.xlu0 %862
      %864 = vrot.lane.b32.xlu0 %v491, 28
      %v865 = vpop.permute.xlu0 %864
      %866 = vrot.lane.b32.xlu0 %v493, 28
      %v867 = vpop.permute.xlu0 %866
      %868 = vrot.lane.b32.xlu0 %v684, 28
      %v869 = vpop.permute.xlu0 %868
      %870 = vrot.lane.b32.xlu0 %v686, 28
      %v871 = vpop.permute.xlu0 %870
      %872 = vrot.lane.b32.xlu0 %v841, 28
      %v873 = vpop.permute.xlu0 %872
      %874 = vrot.lane.b32.xlu0 %v843, 28
      %v875 = vpop.permute.xlu0 %874
      %v892 = vrot.slane %v426, 2
      %v893 = vrot.slane %v427, 2
      %v894 = vsel %vm542, %v892, %v893
      %v895 = vrot.slane %v428, 2
      %v896 = vsel %vm542, %v893, %v895
      %897 = vrot.lane.b32.xlu0 %v555, 32
      %v898 = vpop.permute.xlu0 %897
      %899 = vrot.lane.b32.xlu0 %v557, 32
      %v900 = vpop.permute.xlu0 %899
      %901 = vrot.lane.b32.xlu0 %v560, 32
      %v902 = vpop.permute.xlu0 %901
      %903 = vrot.lane.b32.xlu0 %v562, 32
      %v904 = vpop.permute.xlu0 %903
      %905 = vrot.lane.b32.xlu0 %v565, 32
      %v906 = vpop.permute.xlu0 %905
      %907 = vrot.lane.b32.xlu0 %v567, 32
      %v908 = vpop.permute.xlu0 %907
      %909 = vrot.lane.b32.xlu0 %v570, 32
      %v910 = vpop.permute.xlu0 %909
      %911 = vrot.lane.b32.xlu0 %v572, 32
      %v912 = vpop.permute.xlu0 %911
      %913 = vrot.lane.b32.xlu0 %v575, 32
      %v914 = vpop.permute.xlu0 %913
      %915 = vrot.lane.b32.xlu0 %v577, 32
      %v916 = vpop.permute.xlu0 %915
      %917 = vrot.lane.b32.xlu0 %v580, 32
      %v918 = vpop.permute.xlu0 %917
      %919 = vrot.lane.b32.xlu0 %v582, 32
      %v920 = vpop.permute.xlu0 %919
      %921 = vrot.lane.b32.xlu0 %v737, 32
      %v922 = vpop.permute.xlu0 %921
      %923 = vrot.lane.b32.xlu0 %v739, 32
      %v924 = vpop.permute.xlu0 %923
      %925 = vrot.lane.b32.xlu0 %v894, 32
      %v926 = vpop.permute.xlu0 %925
      %927 = vrot.lane.b32.xlu0 %v896, 32
      %v928 = vpop.permute.xlu0 %927
      %vm945 = vcmask 31744
      %v946 = vsel %vm945, %v399, %v495
      %v947 = vsel %vm945, %v400, %v497
      %v948 = vsel %vm945, %v402, %v499
      %v949 = vsel %vm945, %v403, %v501
      %v950 = vsel %vm945, %v405, %v503
      %v951 = vsel %vm945, %v406, %v505
      %v952 = vsel %vm945, %v408, %v507
      %v953 = vsel %vm945, %v409, %v509
      %v954 = vsel %vm945, %v411, %v511
      %v955 = vsel %vm945, %v412, %v513
      %v956 = vsel %vm945, %v414, %v515
      %v957 = vsel %vm945, %v415, %v517
      %v958 = vsel %vm945, %v417, %v519
      %v959 = vsel %vm945, %v418, %v521
      %v960 = vsel %vm945, %v420, %v523
      %v961 = vsel %vm945, %v421, %v525
      %vm962 = vcmask 64512
      %v963 = vsel %vm962, %v946, %v584
      %v964 = vsel %vm962, %v947, %v586
      %v965 = vsel %vm962, %v948, %v588
      %v966 = vsel %vm962, %v949, %v590
      %v967 = vsel %vm962, %v950, %v592
      %v968 = vsel %vm962, %v951, %v594
      %v969 = vsel %vm962, %v952, %v596
      %v970 = vsel %vm962, %v953, %v598
      %v971 = vsel %vm962, %v954, %v600
      %v972 = vsel %vm962, %v955, %v602
      %v973 = vsel %vm962, %v956, %v604
      %v974 = vsel %vm962, %v957, %v606
      %v975 = vsel %vm962, %v958, %v608
      %v976 = vsel %vm962, %v959, %v610
      %v977 = vsel %vm962, %v960, %v612
      %v978 = vsel %vm962, %v961, %v614
      %vm979 = vcmask 97280
      %v980 = vsel %vm979, %v963, %v634
      %v981 = vsel %vm979, %v964, %v636
      %v982 = vsel %vm979, %v965, %v638
      %v983 = vsel %vm979, %v966, %v640
      %v984 = vsel %vm979, %v967, %v642
      %v985 = vsel %vm979, %v968, %v644
      %v986 = vsel %vm979, %v969, %v646
      %v987 = vsel %vm979, %v970, %v648
      %v988 = vsel %vm979, %v971, %v650
      %v989 = vsel %vm979, %v972, %v652
      %v990 = vsel %vm979, %v973, %v654
      %v991 = vsel %vm979, %v974, %v656
      %v992 = vsel %vm979, %v975, %v658
      %v993 = vsel %vm979, %v976, %v660
      %v994 = vsel %vm979, %v977, %v662
      %v995 = vsel %vm979, %v978, %v664
      %vm996 = vcmask 130048
      %v997 = vsel %vm996, %v980, %v688
      %v998 = vsel %vm996, %v981, %v690
      %v999 = vsel %vm996, %v982, %v692
      %v1000 = vsel %vm996, %v983, %v694
      %v1001 = vsel %vm996, %v984, %v696
      %v1002 = vsel %vm996, %v985, %v698
      %v1003 = vsel %vm996, %v986, %v700
      %v1004 = vsel %vm996, %v987, %v702
      %v1005 = vsel %vm996, %v988, %v704
      %v1006 = vsel %vm996, %v989, %v706
      %v1007 = vsel %vm996, %v990, %v708
      %v1008 = vsel %vm996, %v991, %v710
      %v1009 = vsel %vm996, %v992, %v712
      %v1010 = vsel %vm996, %v993, %v714
      %v1011 = vsel %vm996, %v994, %v716
      %v1012 = vsel %vm996, %v995, %v718
      %vm1013 = vcmask 162816
      %v1014 = vsel %vm1013, %v997, %v741
      %v1015 = vsel %vm1013, %v998, %v743
      %v1016 = vsel %vm1013, %v999, %v745
      %v1017 = vsel %vm1013, %v1000, %v747
      %v1018 = vsel %vm1013, %v1001, %v749
      %v1019 = vsel %vm1013, %v1002, %v751
      %v1020 = vsel %vm1013, %v1003, %v753
      %v1021 = vsel %vm1013, %v1004, %v755
      %v1022 = vsel %vm1013, %v1005, %v757
      %v1023 = vsel %vm1013, %v1006, %v759
      %v1024 = vsel %vm1013, %v1007, %v761
      %v1025 = vsel %vm1013, %v1008, %v763
      %v1026 = vsel %vm1013, %v1009, %v765
      %v1027 = vsel %vm1013, %v1010, %v767
      %v1028 = vsel %vm1013, %v1011, %v769
      %v1029 = vsel %vm1013, %v1012, %v771
      %vm1030 = vcmask 195584
      %v1031 = vsel %vm1030, %v1014, %v791
      %v1032 = vsel %vm1030, %v1015, %v793
      %v1033 = vsel %vm1030, %v1016, %v795
      %v1034 = vsel %vm1030, %v1017, %v797
      %v1035 = vsel %vm1030, %v1018, %v799
      %v1036 = vsel %vm1030, %v1019, %v801
      %v1037 = vsel %vm1030, %v1020, %v803
      %v1038 = vsel %vm1030, %v1021, %v805
      %v1039 = vsel %vm1030, %v1022, %v807
      %v1040 = vsel %vm1030, %v1023, %v809
      %v1041 = vsel %vm1030, %v1024, %v811
      %v1042 = vsel %vm1030, %v1025, %v813
      %v1043 = vsel %vm1030, %v1026, %v815
      %v1044 = vsel %vm1030, %v1027, %v817
      %v1045 = vsel %vm1030, %v1028, %v819
      %v1046 = vsel %vm1030, %v1029, %v821
      %vm1047 = vcmask 228352
      %v1048 = vsel %vm1047, %v1031, %v845
      %v1049 = vsel %vm1047, %v1032, %v847
      %v1050 = vsel %vm1047, %v1033, %v849
      %v1051 = vsel %vm1047, %v1034, %v851
      %v1052 = vsel %vm1047, %v1035, %v853
      %v1053 = vsel %vm1047, %v1036, %v855
      %v1054 = vsel %vm1047, %v1037, %v857
      %v1055 = vsel %vm1047, %v1038, %v859
      %v1056 = vsel %vm1047, %v1039, %v861
      %v1057 = vsel %vm1047, %v1040, %v863
      %v1058 = vsel %vm1047, %v1041, %v865
      %v1059 = vsel %vm1047, %v1042, %v867
      %v1060 = vsel %vm1047, %v1043, %v869
      %v1061 = vsel %vm1047, %v1044, %v871
      %v1062 = vsel %vm1047, %v1045, %v873
      %v1063 = vsel %vm1047, %v1046, %v875
      %vm1064 = vcmask 261120
      %v1065 = vsel %vm1064, %v1048, %v898
      %v1066 = vsel %vm1064, %v1049, %v900
      %v1067 = vsel %vm1064, %v1050, %v902
      %v1068 = vsel %vm1064, %v1051, %v904
      %v1069 = vsel %vm1064, %v1052, %v906
      %v1070 = vsel %vm1064, %v1053, %v908
      %v1071 = vsel %vm1064, %v1054, %v910
      %v1072 = vsel %vm1064, %v1055, %v912
      %v1073 = vsel %vm1064, %v1056, %v914
      %v1074 = vsel %vm1064, %v1057, %v916
      %v1075 = vsel %vm1064, %v1058, %v918
      %v1076 = vsel %vm1064, %v1059, %v920
      %v1077 = vsel %vm1064, %v1060, %v922
      %v1078 = vsel %vm1064, %v1061, %v924
      %v1079 = vsel %vm1064, %v1062, %v926
      %v1080 = vsel %vm1064, %v1063, %v928
      %v1081 = vld [vmem:[%s2] sm:$0xff]
      %v1082 = vld [vmem:[%s2 + $0x8] sm:$0xff]
      %v1083 = vld [vmem:[%s2 + $0x10] sm:$0xff]
      %v1084 = vld [vmem:[%s2 + $0x18] sm:$0xff]
      %v1085 = vld [vmem:[%s2 + $0x20] sm:$0xf]
      %v1086 = vld [vmem:[%s3] sm:$0x1]
      %v1088 = vlaneseq
      %v1089 = vshrl.u32 %v1088, 7
      %v1090 = vsub.s32 0, %v1089
      %v1091 = vrot.slane %v1086, %v1090
      %vm1093 = vcmask 293888
      %v1095 = vsel %vm1093, %v1065, 0
      %v1098 = vsel %vm1093, %v1066, 0
      %v1101 = vsel %vm1093, %v1067, 0
      %v1104 = vsel %vm1093, %v1068, 0
      %v1107 = vsel %vm1093, %v1069, 0
      %v1110 = vsel %vm1093, %v1070, 0
      %v1113 = vsel %vm1093, %v1071, 0
      %v1116 = vsel %vm1093, %v1072, 0
      %v1119 = vsel %vm1093, %v1073, 0
      %v1122 = vsel %vm1093, %v1074, 0
      %v1125 = vsel %vm1093, %v1075, 0
      %v1128 = vsel %vm1093, %v1076, 0
      %v1131 = vsel %vm1093, %v1077, 0
      %v1134 = vsel %vm1093, %v1078, 0
      %v1137 = vsel %vm1093, %v1079, 0
      %v1140 = vsel %vm1093, %v1080, 0
      %vm1142 = vcmask 1043456
      %v1144 = vsel %vm1142, %v1085, 0
      %1146 = vmatprep.subr.mxu0 0.0
      %1147 = vmatpush1.msra.mxu0 %v1081
      %1148 = vmatprep.subr.mxu0 0.0
      %1149 = vmatpush1.msra.mxu0 %v1082
      %1150 = vmatprep.subr.mxu0 0.0
      %1151 = vmatpush1.msra.mxu0 %v1083
      %1152 = vmatprep.subr.mxu0 0.0
      %1153 = vmatpush1.msra.mxu0 %v1084
      %1154 = vmatprep.subr.mxu0 0.0
      %1155 = vmatpush1.msra.mxu0 %v1144
      %1156 = vmatprep.subr.mxu0 0.0
      %1157 = vmatpush1.msra.mxu0 0.0
      %1158 = vmatprep.subr.mxu0 0.0
      %1159 = vmatpush1.msra.mxu0 0.0
      %1160 = vmatprep.subr.mxu0 0.0
      %1161 = vmatpush1.msra.mxu0 0.0
      %1162 = vmatprep.subr.mxu0 0.0
      %1163 = vmatpush1.msra.mxu0 0.0
      %1164 = vmatprep.subr.mxu0 0.0
      %1165 = vmatpush1.msra.mxu0 0.0
      %1166 = vmatprep.subr.mxu0 0.0
      %1167 = vmatpush1.msra.mxu0 0.0
      %1168 = vmatprep.subr.mxu0 0.0
      %1169 = vmatpush1.msra.mxu0 0.0
      %1170 = vmatprep.subr.mxu0 0.0
      %1171 = vmatpush1.msra.mxu0 0.0
      %1172 = vmatprep.subr.mxu0 0.0
      %1173 = vmatpush1.msra.mxu0 0.0
      %1174 = vmatprep.subr.mxu0 0.0
      %1175 = vmatpush1.msra.mxu0 0.0
      %1176 = vmatprep.subr.mxu0 0.0
      %1177 = vmatpush1.msra.mxu0 0.0
      %1178 = vmatprep.subr.mxu0 0.0
      %1179 = vmatpush1.msra.mxu0 0.0
      %1180 = vmatprep.subr.mxu0 0.0
      %1181 = vmatpush1.msra.mxu0 0.0
      %1182 = vmatprep.subr.mxu0 0.0
      %1183 = vmatpush1.msra.mxu0 0.0
      %1184 = vmatprep.subr.mxu0 0.0
      %1185 = vmatpush1.msra.mxu0 0.0
      %1186 = vmatprep.subr.mxu0 0.0
      %1187 = vmatpush1.msra.mxu0 0.0
      %1188 = vmatprep.subr.mxu0 0.0
      %1189 = vmatpush1.msra.mxu0 0.0
      %1190 = vmatprep.subr.mxu0 0.0
      %1191 = vmatpush1.msra.mxu0 0.0
      %1192 = vmatprep.subr.mxu0 0.0
      %1193 = vmatpush1.msra.mxu0 0.0
      %1194 = vmatprep.subr.mxu0 0.0
      %1195 = vmatpush1.msra.mxu0 0.0
      %1196 = vmatprep.subr.mxu0 0.0
      %1197 = vmatpush1.msra.mxu0 0.0
      %1198 = vmatprep.subr.mxu0 0.0
      %1199 = vmatpush1.msra.mxu0 0.0
      %1200 = vmatprep.subr.mxu0 0.0
      %1201 = vmatpush1.msra.mxu0 0.0
      %1202 = vmatprep.subr.mxu0 0.0
      %1203 = vmatpush1.msra.mxu0 0.0
      %1204 = vmatprep.subr.mxu0 0.0
      %1205 = vmatpush1.msra.mxu0 0.0
      %1206 = vmatprep.subr.mxu0 0.0
      %1207 = vmatpush1.msra.mxu0 0.0
      %1208 = vmatprep.subr.mxu0 0.0
      %1209 = vmatpush1.msra.mxu0 0.0
      %1210 = vmatprep.mubr.f32.mxu0 0.0
      %1211 = vmatmul.mubr.f32.gmra.mrb[0].mxu0 %v1095
      %v1212 = vpop.f32.mrb[0].mxu0
      %v1213 = vadd.f32 %v1091, %v1212
      %v1214 = vpop.f32.mrb[0].mxu0
      %1215 = vmatprep.mubr.f32.mxu0 0.0
      %1216 = vmatmul.mubr.f32.gmra.mrb[0].mxu0 %v1098
      %v1217 = vpop.f32.mrb[0].mxu0
      %v1218 = vadd.f32 %v1091, %v1217
      %v1219 = vpop.f32.mrb[0].mxu0
      %1220 = vmatprep.mubr.f32.mxu0 0.0
      %1221 = vmatmul.mubr.f32.gmra.mrb[0].mxu0 %v1101
      %v1222 = vpop.f32.mrb[0].mxu0
      %v1223 = vadd.f32 %v1091, %v1222
      %v1224 = vpop.f32.mrb[0].mxu0
      %1225 = vmatprep.mubr.f32.mxu0 0.0
      %1226 = vmatmul.mubr.f32.gmra.mrb[0].mxu0 %v1104
      %v1227 = vpop.f32.mrb[0].mxu0
      %v1228 = vadd.f32 %v1091, %v1227
      %v1229 = vpop.f32.mrb[0].mxu0
      %1230 = vmatprep.mubr.f32.mxu0 0.0
      %1231 = vmatmul.mubr.f32.gmra.mrb[0].mxu0 %v1107
      %v1232 = vpop.f32.mrb[0].mxu0
      %v1233 = vadd.f32 %v1091, %v1232
      %v1234 = vpop.f32.mrb[0].mxu0
      %1235 = vmatprep.mubr.f32.mxu0 0.0
      %1236 = vmatmul.mubr.f32.gmra.mrb[0].mxu0 %v1110
      %v1237 = vpop.f32.mrb[0].mxu0
      %v1238 = vadd.f32 %v1091, %v1237
      %v1239 = vpop.f32.mrb[0].mxu0
      %1240 = vmatprep.mubr.f32.mxu0 0.0
      %1241 = vmatmul.mubr.f32.gmra.mrb[0].mxu0 %v1113
      %v1242 = vpop.f32.mrb[0].mxu0
      %v1243 = vadd.f32 %v1091, %v1242
      %v1244 = vpop.f32.mrb[0].mxu0
      %1245 = vmatprep.mubr.f32.mxu0 0.0
      %1246 = vmatmul.mubr.f32.gmra.mrb[0].mxu0 %v1116
      %v1247 = vpop.f32.mrb[0].mxu0
      %v1248 = vadd.f32 %v1091, %v1247
      %v1249 = vpop.f32.mrb[0].mxu0
      %1250 = vmatprep.mubr.f32.mxu0 0.0
      %1251 = vmatmul.mubr.f32.gmra.mrb[0].mxu0 %v1119
      %v1252 = vpop.f32.mrb[0].mxu0
      %v1253 = vadd.f32 %v1091, %v1252
      %v1254 = vpop.f32.mrb[0].mxu0
      %1255 = vmatprep.mubr.f32.mxu0 0.0
      %1256 = vmatmul.mubr.f32.gmra.mrb[0].mxu0 %v1122
      %v1257 = vpop.f32.mrb[0].mxu0
      %v1258 = vadd.f32 %v1091, %v1257
      %v1259 = vpop.f32.mrb[0].mxu0
      %1260 = vmatprep.mubr.f32.mxu0 0.0
      %1261 = vmatmul.mubr.f32.gmra.mrb[0].mxu0 %v1125
      %v1262 = vpop.f32.mrb[0].mxu0
      %v1263 = vadd.f32 %v1091, %v1262
      %v1264 = vpop.f32.mrb[0].mxu0
      %1265 = vmatprep.mubr.f32.mxu0 0.0
      %1266 = vmatmul.mubr.f32.gmra.mrb[0].mxu0 %v1128
      %v1267 = vpop.f32.mrb[0].mxu0
      %v1268 = vadd.f32 %v1091, %v1267
      %v1269 = vpop.f32.mrb[0].mxu0
      %1270 = vmatprep.mubr.f32.mxu0 0.0
      %1271 = vmatmul.mubr.f32.gmra.mrb[0].mxu0 %v1131
      %v1272 = vpop.f32.mrb[0].mxu0
      %v1273 = vadd.f32 %v1091, %v1272
      %v1274 = vpop.f32.mrb[0].mxu0
      %1275 = vmatprep.mubr.f32.mxu0 0.0
      %1276 = vmatmul.mubr.f32.gmra.mrb[0].mxu0 %v1134
      %v1277 = vpop.f32.mrb[0].mxu0
      %v1278 = vadd.f32 %v1091, %v1277
      %v1279 = vpop.f32.mrb[0].mxu0
      %1280 = vmatprep.mubr.f32.mxu0 0.0
      %1281 = vmatmul.mubr.f32.gmra.mrb[0].mxu0 %v1137
      %v1282 = vpop.f32.mrb[0].mxu0
      %v1283 = vadd.f32 %v1091, %v1282
      %v1284 = vpop.f32.mrb[0].mxu0
      %1285 = vmatprep.mubr.f32.mxu0 0.0
      %1286 = vmatmul.mubr.f32.gmra.mrb[0].mxu0 %v1140
      %v1287 = vpop.f32.mrb[0].mxu0
      %v1288 = vadd.f32 %v1091, %v1287
      %v1289 = vpop.f32.mrb[0].mxu0
      %1290 = vdwg.mxu0
      %v1291 = vsel %vm945, %v1213, 0.0
      %v1292 = vsel %vm945, %v1218, 0.0
      %v1293 = vadd.f32 %v1291, %v1292
      %v1294 = vsel %vm945, %v1223, 0.0
      %v1295 = vadd.f32 %v1293, %v1294
      %v1296 = vsel %vm945, %v1228, 0.0
      %v1297 = vadd.f32 %v1295, %v1296
      %v1298 = vsel %vm945, %v1233, 0.0
      %v1299 = vadd.f32 %v1297, %v1298
      %v1300 = vsel %vm945, %v1238, 0.0
      %v1301 = vadd.f32 %v1299, %v1300
      %v1302 = vsel %vm945, %v1243, 0.0
      %v1303 = vadd.f32 %v1301, %v1302
      %v1304 = vsel %vm945, %v1248, 0.0
      %v1305 = vadd.f32 %v1303, %v1304
      %v1306 = vsel %vm945, %v1253, 0.0
      %v1307 = vadd.f32 %v1305, %v1306
      %v1308 = vsel %vm945, %v1258, 0.0
      %v1309 = vadd.f32 %v1307, %v1308
      %v1310 = vsel %vm945, %v1263, 0.0
      %v1311 = vadd.f32 %v1309, %v1310
      %v1312 = vsel %vm945, %v1268, 0.0
      %v1313 = vadd.f32 %v1311, %v1312
      %v1314 = vsel %vm945, %v1273, 0.0
      %v1315 = vadd.f32 %v1313, %v1314
      %v1316 = vsel %vm945, %v1278, 0.0
      %v1317 = vadd.f32 %v1315, %v1316
      %v1318 = vsel %vm945, %v1283, 0.0
      %v1319 = vadd.f32 %v1317, %v1318
      %v1320 = vsel %vm945, %v1288, 0.0
      %v1321 = vadd.f32 %v1319, %v1320
      %v1322 = vrot.slane %v1321, 4
      %v1323 = vadd.f32 %v1321, %v1322
      %v1324 = vrot.slane %v1323, 2
      %v1325 = vadd.f32 %v1323, %v1324
      %v1326 = vrot.slane %v1325, 1
      %v1327 = vadd.f32 %v1325, %v1326
      %v1328 = vmul.f32 %v1213, %v1213
      %v1329 = vmul.f32 %v1218, %v1218
      %v1330 = vmul.f32 %v1223, %v1223
      %v1331 = vmul.f32 %v1228, %v1228
      %v1332 = vmul.f32 %v1233, %v1233
      %v1333 = vmul.f32 %v1238, %v1238
      %v1334 = vmul.f32 %v1243, %v1243
      %v1335 = vmul.f32 %v1248, %v1248
      %v1336 = vmul.f32 %v1253, %v1253
      %v1337 = vmul.f32 %v1258, %v1258
      %v1338 = vmul.f32 %v1263, %v1263
      %v1339 = vmul.f32 %v1268, %v1268
      %v1340 = vmul.f32 %v1273, %v1273
      %v1341 = vmul.f32 %v1278, %v1278
      %v1342 = vmul.f32 %v1283, %v1283
      %v1343 = vmul.f32 %v1288, %v1288
      %v1344 = vsel %vm945, %v1328, 0.0
      %v1345 = vsel %vm945, %v1329, 0.0
      %v1346 = vadd.f32 %v1344, %v1345
      %v1347 = vsel %vm945, %v1330, 0.0
      %v1348 = vadd.f32 %v1346, %v1347
      %v1349 = vsel %vm945, %v1331, 0.0
      %v1350 = vadd.f32 %v1348, %v1349
      %v1351 = vsel %vm945, %v1332, 0.0
      %v1352 = vadd.f32 %v1350, %v1351
      %v1353 = vsel %vm945, %v1333, 0.0
      %v1354 = vadd.f32 %v1352, %v1353
      %v1355 = vsel %vm945, %v1334, 0.0
      %v1356 = vadd.f32 %v1354, %v1355
      %v1357 = vsel %vm945, %v1335, 0.0
      %v1358 = vadd.f32 %v1356, %v1357
      %v1359 = vsel %vm945, %v1336, 0.0
      %v1360 = vadd.f32 %v1358, %v1359
      %v1361 = vsel %vm945, %v1337, 0.0
      %v1362 = vadd.f32 %v1360, %v1361
      %v1363 = vsel %vm945, %v1338, 0.0
      %v1364 = vadd.f32 %v1362, %v1363
      %v1365 = vsel %vm945, %v1339, 0.0
      %v1366 = vadd.f32 %v1364, %v1365
      %v1367 = vsel %vm945, %v1340, 0.0
      %v1368 = vadd.f32 %v1366, %v1367
      %v1369 = vsel %vm945, %v1341, 0.0
      %v1370 = vadd.f32 %v1368, %v1369
      %v1371 = vsel %vm945, %v1342, 0.0
      %v1372 = vadd.f32 %v1370, %v1371
      %v1373 = vsel %vm945, %v1343, 0.0
      %v1374 = vadd.f32 %v1372, %v1373
      %v1375 = vrot.slane %v1374, 4
      %v1376 = vadd.f32 %v1374, %v1375
      %v1377 = vrot.slane %v1376, 2
      %v1378 = vadd.f32 %v1376, %v1377
      %v1379 = vrot.slane %v1378, 1
      %v1380 = vadd.f32 %v1378, %v1379
      %vm1381 = vcmask 1040384
      %v1382 = vsel %vm1381, %v1327, %v1380
      %p1383 = scmp.eq.s32.totalorder %s22, 0
      // Predicated region
      $region37: #{resnet_block.4} parent=35 // pred_check
        %p1384 = pneg %p1383
      $region38: #{resnet_block.4} parent=35 // pred_check_branch
        %1386 = sbr.rel (%p1384) target = $region40
      $region39: #{resnet_block.4} parent=35 // pred_region
        %vm1387 = vcmask 25600
        %1388 = vst.msk [vmem:[%s291] sm:$0x3] %vm1387, 0.0
      $region40: #{resnet_block.4} parent=35 // pred_fallthru
        _
      %v1389 = vld [vmem:[%s291] sm:$0x3]
      %v1390 = vadd.f32 %v1389, %v1382
      %vm1391 = vcmask 25600
      %1392 = vst.msk [vmem:[%s291] sm:$0x3] %vm1391, %v1390
      %1393 = vst.msk [vmem:[%s286] sm:$0xff] %vm945, %v1213
      %1394 = vst.msk [vmem:[%s286 + $0x8] sm:$0xff] %vm945, %v1218
      %1395 = vst.msk [vmem:[%s286 + $0x10] sm:$0xff] %vm945, %v1223
      %1396 = vst.msk [vmem:[%s286 + $0x18] sm:$0xff] %vm945, %v1228
      %1397 = vst.msk [vmem:[%s286 + $0x20] sm:$0xff] %vm945, %v1233
      %1398 = vst.msk [vmem:[%s286 + $0x28] sm:$0xff] %vm945, %v1238
      %1399 = vst.msk [vmem:[%s286 + $0x30] sm:$0xff] %vm945, %v1243
      %1400 = vst.msk [vmem:[%s286 + $0x38] sm:$0xff] %vm945, %v1248
      %1401 = vst.msk [vmem:[%s286 + $0x40] sm:$0xff] %vm945, %v1253
      %1402 = vst.msk [vmem:[%s286 + $0x48] sm:$0xff] %vm945, %v1258
      %1403 = vst.msk [vmem:[%s286 + $0x50] sm:$0xff] %vm945, %v1263
      %1404 = vst.msk [vmem:[%s286 + $0x58] sm:$0xff] %vm945, %v1268
      %1405 = vst.msk [vmem:[%s286 + $0x60] sm:$0xff] %vm945, %v1273
      %1406 = vst.msk [vmem:[%s286 + $0x68] sm:$0xff] %vm945, %v1278
      %1407 = vst.msk [vmem:[%s286 + $0x70] sm:$0xff] %vm945, %v1283
      %1408 = vst.msk [vmem:[%s286 + $0x78] sm:$0xff] %vm945, %v1288
      %s1409 = smul.u32 8, %s22
      %p1410 = scmp.lt.s32.totalorder %s21, 1
      %s1411 = scalar_select %p1410, %s21, 1
      %p1412 = scmp.lt.s32.totalorder %s1409, 15
      %s1413 = scalar_select %p1412, %s1409, 15
      %s1414 = smul.addr %s1413, 2
      %s1415 = smul.addr %s1411, 32
      %s1416 = sadd.s32 %s1414, %s1415
      %s1417 = smul.addr %s1416, 8
      %s1418 = scalar_lea.vmem %s4, %s1417
      %p1419 = scmp.lt.s32.totalorder %s21, 1
      %s1420 = scalar_select %p1419, %s21, 1
      %s1421 = smul.addr %s1420, 2
      %s1422 = scalar_lea.vmem %s5, %s1421
      // Predicated region
      $region41: #{resnet_block.4} parent=35 // pred_check
        %p1423 = pneg %p145
      $region42: #{resnet_block.4} parent=35 // pred_check_branch
        %1425 = sbr.rel (%p1423) target = $region44
      $region43: #{resnet_block.4} parent=35 // pred_region
        %s1426 = smul.u32 8, %s22
      $region44: #{resnet_block.4} parent=35 // pred_fallthru
        _
      // Predicated region
      $region45: #{resnet_block.4} parent=35 // pred_check
        %p1427 = pneg %p171
      $region46: #{resnet_block.4} parent=35 // pred_check_branch
        %1429 = sbr.rel (%p1427) target = $region48
      $region47: #{resnet_block.4} parent=35 // pred_region
        _
      $region48: #{resnet_block.4} parent=35 // pred_fallthru
        _
    $region36: #{resnet_block.4} parent=5 // pred_fallthru
      _
    %p1430 = scmp.le.s32.totalorder 2, %s12
    // Predicated region
    $region49: #{resnet_block.4} parent=5 // pred_check
      %p1431 = pneg %p1430
    $region50: #{resnet_block.4} parent=5 // pred_check_branch
      %1433 = sbr.rel (%p1431) target = $region52
    $region51: #{resnet_block.4} parent=5 // pred_region
      %s1434 = ssub.s32 %s12, 2
      // Predicated region
      $region53: #{resnet_block.4} parent=51 // pred_check
        %p1435 = pneg %p151
      $region54: #{resnet_block.4} parent=51 // pred_check_branch
        %1437 = sbr.rel (%p1435) target = $region56
      $region55: #{resnet_block.4} parent=51 // pred_region
        %s1438 = smul.u32 8, %s24
        %p1439 = scmp.lt.s32.totalorder %s23, 1
        %s1440 = scalar_select %p1439, %s23, 1
        %p1441 = scmp.lt.s32.totalorder %s1438, 15
        %s1442 = scalar_select %p1441, %s1438, 15
        %s1443 = smul.addr %s1442, 2
        %s1444 = smul.addr %s1440, 32
        %s1445 = sadd.s32 %s1443, %s1444
        %s1446 = smul.addr %s1445, 8
        %s1447 = scalar_lea.vmem %s4, %s1446
      $region56: #{resnet_block.4} parent=51 // pred_fallthru
        _
      // Predicated region
      $region57: #{resnet_block.4} parent=51 // pred_check
        %p1448 = pneg %p177
      $region58: #{resnet_block.4} parent=51 // pred_check_branch
        %1450 = sbr.rel (%p1448) target = $region60
      $region59: #{resnet_block.4} parent=51 // pred_region
        %p1451 = scmp.lt.s32.totalorder %s23, 1
        %s1452 = scalar_select %p1451, %s23, 1
        %s1453 = smul.addr %s1452, 2
        %s1454 = scalar_lea.vmem %s5, %s1453
      $region60: #{resnet_block.4} parent=51 // pred_fallthru
        _
    $region52: #{resnet_block.4} parent=5 // pred_fallthru
      _
  $region6: #{resnet_block.4} parent=0 // loop_footer
    %s16 = sadd.s32 1, %s12
  $region7: #{resnet_block.4} parent=0 // loop_footer_branch
    %11 = sbr.rel target = $region3
  $region8: #{resnet_block.4} parent=0 // loop_exit
    _

</llo_original>
